<compile_context>
chip_gen: v6e
topology: v6e:2x2x1
jax: 0.10.0
libtpu: 0.0.40
codegen_flags: <defaults>
</compile_context>

<pallas_src>
import functools
import math

import jax
import jax.numpy as jnp
from jax.experimental import pallas as pl
from jax.experimental.pallas import tpu as pltpu


def _leaky(x, ns):
    # LeakyReLU with 0 < ns < 1: max(x, ns*x) == where(x > 0, x, ns*x).
    return jnp.maximum(x, ns * x)


def _round_up(v, m):
    return (v + m - 1) // m * m


def _vmem_bytes(shape, itemsize=4):
    s = list(shape)
    s[-1] = _round_up(s[-1], 128)
    if len(s) >= 2:
        s[-2] = _round_up(s[-2], 8)
    total = itemsize
    for d in s:
        total *= d
    return total


def _vmem_capacity_bytes():
    try:
        return int(pltpu.get_tpu_info().vmem_capacity_bytes)
    except Exception:
        return 64 << 20  # v7x has the smallest per-core VMEM; be conservative.


def _pick_tb(batch, npad, k, max_tb=64):
    """Batch-tile size (multiple of 8, capped so the VMEM unstack stays short).

    Small problems collapse to a single grid step (the grid is a serial loop on
    single-TC v5e/v6e, so >1 step is pure per-step overhead); large problems
    keep >= 2 steps so dimension_semantics=("parallel",) can spread them over
    both v7x TensorCores, and the double-buffered x/out tiles stay inside a
    conservative fraction of per-core VMEM."""
    vmem_cap = _vmem_capacity_bytes()
    bp8 = _round_up(max(batch, 1), 8)
    # Double-buffered f32 bytes per batch row of the pipelined tiles
    # (x row: K x Np with K sublane-padded, plus one output row).
    row_bytes = 2 * 4 * (_round_up(k, 8) + 1) * npad
    budget = max(vmem_cap // 4, 4 << 20)
    tb = min(bp8, max_tb, max(8, (budget // row_bytes) // 8 * 8))
    if bp8 >= 64 and tb >= bp8:
        tb = max(8, (bp8 // 2) // 8 * 8)  # keep >= 2 grid steps for v7x megacore
    return tb


def _pack_direct_params(w1, b1, w2, b2, w3, b3, w4, b4, k):
    """Pack the DirectInputLayer params into one (29, C) f32 slab:
    weights (PyTorch (out,in) layout) from column 0, biases in the last column."""
    c = max(k, 16) + 1
    slab = jnp.zeros((29, c), jnp.float32)
    slab = slab.at[0:16, 0:k].set(w1.astype(jnp.float32))
    slab = slab.at[0:16, c - 1].set(b1.astype(jnp.float32))
    slab = slab.at[16:24, 0:16].set(w2.astype(jnp.float32))
    slab = slab.at[16:24, c - 1].set(b2.astype(jnp.float32))
    slab = slab.at[24:28, 0:8].set(w3.astype(jnp.float32))
    slab = slab.at[24:28, c - 1].set(b3.astype(jnp.float32))
    slab = slab.at[28, 0:4].set(w4[0].astype(jnp.float32))
    slab = slab.at[28, c - 1].set(b4[0].astype(jnp.float32))
    return slab


def _network_kernel(x_ref, p_ref, wd_ref, bd_ref, o_ref, ys_ref, *, ns, k, tb, npad):
    """x_ref : (K, tb*Np)  lane-dense flattened batch tile (Np = padded N, %128==0)
    p_ref : (29, C)      packed DirectInputLayer weights/biases (resident)
    wd_ref: (Np, Np)     dense weight, input-major & zero-padded (resident)
    bd_ref: (1, Np)      dense bias (resident)
    o_ref : (tb, Np)     output block (lane-dense)
    ys_ref: (tb, Np)     VMEM scratch used to unstack the flat MLP output."""
    c = p_ref.shape[1]
    # Static slices of the packed parameter slab.
    w1t = p_ref[pl.ds(0, 16), pl.ds(0, k)]       # (16, K)
    b1 = p_ref[pl.ds(0, 16), pl.ds(c - 1, 1)]    # (16, 1)
    w2t = p_ref[pl.ds(16, 8), pl.ds(0, 16)]      # (8, 16)
    b2 = p_ref[pl.ds(16, 8), pl.ds(c - 1, 1)]    # (8, 1)
    w3t = p_ref[pl.ds(24, 4), pl.ds(0, 8)]       # (4, 8)
    b3 = p_ref[pl.ds(24, 4), pl.ds(c - 1, 1)]    # (4, 1)
    w4t = p_ref[pl.ds(28, 1), pl.ds(0, 4)]       # (1, 4)
    b4 = p_ref[pl.ds(28, 1), pl.ds(c - 1, 1)]    # (1, 1)

    xt = x_ref[...]                               # (K, tb*Np), neuron axis on lanes
    # DirectInputLayer: one matmul per layer over the whole batch tile.
    h = _leaky(jnp.dot(w1t, xt, preferred_element_type=jnp.float32) + b1, ns)  # (16, tb*Np)
    h = _leaky(jnp.dot(w2t, h, preferred_element_type=jnp.float32) + b2, ns)   # (8,  tb*Np)
    h = _leaky(jnp.dot(w3t, h, preferred_element_type=jnp.float32) + b3, ns)   # (4,  tb*Np)
    h = _leaky(jnp.dot(w4t, h, preferred_element_type=jnp.float32) + b4, ns)   # (1,  tb*Np)
    y = _leaky(h, ns)  # relu1 of SingleLayerNetwork; dropouts are identity (eval)

    # Unstack the flat row into (tb, Np).  Np % 128 == 0, so every slice/store
    # below is a full-lane, unmasked VMEM copy (tiny; avoids a general reshape
    # relayout).  tb is small (<= 64) and static.
    for b in range(tb):
        ys_ref[pl.ds(b, 1), :] = y[:, b * npad:(b + 1) * npad]

    # dense_layer1: one (tb, Np) @ (Np, Np) matmul; single lane-dense store.
    out = jnp.dot(ys_ref[...], wd_ref[...], preferred_element_type=jnp.float32) + bd_ref[...]
    o_ref[...] = out.astype(o_ref.dtype)


def single_layer_network(x, params, *, ns=0.1, tb=None):
    """x: (batch, network_size, inputs_per_neuron) -> (batch, network_size).

    params are PyTorch-convention: all weights (out_features, in_features),
    biases (out_features,).  The dense weight is transposed here (input-major)
    so the kernel computes out = y @ Wd.T + bd."""
    batch, n, k = x.shape
    w1, b1, w2, b2, w3, b3, w4, b4, wd, bd = params

    npad = _round_up(n, 128)                 # lane-dense neuron axis
    if tb is None:
        tb = _pick_tb(batch, npad, k)
    tb = min(_round_up(max(int(tb), 1), 8), _round_up(batch, 8))
    bp = _round_up(batch, tb)                # padded batch (ceil-div grid)
    grid = (bp // tb,)

    # Lane-dense x: (B, N, K) -> (K, B, N) -> zero-pad batch/N -> (K, Bp*Np).
    xt = jnp.transpose(x.astype(jnp.float32), (2, 0, 1))
    xt = jnp.pad(xt, ((0, 0), (0, bp - batch), (0, npad - n)))
    x2 = xt.reshape(k, bp * npad)

    slab = _pack_direct_params(w1, b1, w2, b2, w3, b3, w4, b4, k)
    c = slab.shape[1]

    # Dense weight input-major + zero-padded: padded rows are zero so the
    # (nonzero) MLP outputs of padded neuron columns contribute nothing.
    wd_io = jnp.zeros((npad, npad), jnp.float32).at[:n, :n].set(
        jnp.transpose(wd.astype(jnp.float32)))
    bd_p = jnp.zeros((1, npad), jnp.float32).at[0, :n].set(bd.astype(jnp.float32))

    # VMEM budget: double-buffered pipelined tiles + (up to 2x) residents +
    # in-kernel intermediates; no blind 32 MiB clamp (cap near physical VMEM).
    vmem_cap = _vmem_capacity_bytes()
    x_tile = _vmem_bytes((k, tb * npad))
    o_tile = _vmem_bytes((tb, npad))
    residents = (_vmem_bytes(slab.shape) + _vmem_bytes((npad, npad))
                 + _vmem_bytes((1, npad)))
    temps = 2 * 30 * tb * npad * 4 + 2 * o_tile
    need = 2 * (x_tile + o_tile) + 2 * residents + temps
    vmem_limit = int(min(max(need, 8 << 20), vmem_cap - vmem_cap // 8))

    def _build(single_buffer_residents):
        res_kw = ({"pipeline_mode": pl.Buffered(1)}
                  if single_buffer_residents else {})
        return pl.pallas_call(
            functools.partial(_network_kernel, ns=ns, k=k, tb=tb, npad=npad),
            out_shape=jax.ShapeDtypeStruct((bp, npad), jnp.float32),
            grid_spec=pltpu.PrefetchScalarGridSpec(
                num_scalar_prefetch=0,
                grid=grid,
                in_specs=[
                    pl.BlockSpec((k, tb * npad), lambda i: (0, i)),        # x tile
                    pl.BlockSpec((slab.shape[0], c), lambda i: (0, 0), **res_kw),
                    pl.BlockSpec((npad, npad), lambda i: (0, 0), **res_kw),  # dense W
                    pl.BlockSpec((1, npad), lambda i: (0, 0), **res_kw),     # dense b
                ],
                out_specs=pl.BlockSpec((tb, npad), lambda i: (i, 0)),
                scratch_shapes=[pltpu.VMEM((tb, npad), jnp.float32)],
            ),
            compiler_params=pltpu.CompilerParams(
                dimension_semantics=("parallel",),
                vmem_limit_bytes=vmem_limit),
        )

    try:
        out = jax.block_until_ready(_build(True)(x2, slab, wd_io, bd_p))
    except Exception:
        # Fallback if this jax version rejects pipeline_mode=pl.Buffered(1).
        out = _build(False)(x2, slab, wd_io, bd_p)
    return out[:batch, :n]


def init_params(key, network_size, inputs_per_neuron):
    """nn.Linear-style init, PyTorch conventions: weights (out, in), biases (out,)."""
    dims = [(inputs_per_neuron, 16), (16, 8), (8, 4), (4, 1)]
    params = []
    for fan_in, fan_out in dims:
        key, kw, kb = jax.random.split(key, 3)
        bound = 1.0 / math.sqrt(fan_in)
        w = jax.random.uniform(kw, (fan_out, fan_in), jnp.float32, -bound, bound)
        b = jax.random.uniform(kb, (fan_out,), jnp.float32, -bound, bound)
        params += [w, b]
    key, kw, kb = jax.random.split(key, 3)
    bound = 1.0 / math.sqrt(network_size)
    wd = jax.random.uniform(kw, (network_size, network_size), jnp.float32, -bound, bound)
    bd = jax.random.uniform(kb, (network_size,), jnp.float32, -bound, bound)
    return tuple(params) + (wd, bd)


def _reference(x, params, ns=0.1):
    """Pure-JAX reference of SingleLayerNetwork.forward (eval mode)."""
    w1, b1, w2, b2, w3, b3, w4, b4, wd, bd = params
    h = x.astype(jnp.float32)
    for w, b in ((w1, b1), (w2, b2), (w3, b3), (w4, b4)):
        h = h @ w.T + b
        h = jnp.where(h > 0, h, ns * h)      # LeakyReLU inside DirectInputLayer
    y = jnp.squeeze(h, -1)                    # (batch, network_size)
    y = jnp.where(y > 0, y, ns * y)           # relu1
    return y @ wd.T + bd                      # dense_layer1


if __name__ == "__main__":
    key = jax.random.PRNGKey(0)
    kx, kp = jax.random.split(key)

    # Small shapes consistent with the module (defaults 339 / 100, scaled down).
    batch, network_size, inputs_per_neuron = 20, 96, 20
    x = jax.random.normal(kx, (batch, network_size, inputs_per_neuron),
                          dtype=jnp.float32)
    params = init_params(kp, network_size, inputs_per_neuron)

    # tb=8 forces a multi-step grid (3 steps) and exercises the batch padding
    # (20 -> 24 rows) and the lane padding (96 -> 128 neurons).
    out = single_layer_network(x, params, ns=0.1, tb=8)
    out = jax.block_until_ready(out)

    ref = _reference(x, params, ns=0.1)
    assert out.shape == (batch, network_size), out.shape
    max_err = float(jnp.max(jnp.abs(out - ref)))
    assert jnp.allclose(out, ref, atol=2e-4, rtol=2e-4), max_err

    print("KERNEL_OK")
</pallas_src>

<mosaic_0001>
module attributes {stable_mosaic.version = 11 : i64} {
  func.func @_network_kernel(%arg0: i32, %arg1: memref<20x1024xf32, #tpu.memory_space<vmem>>, %arg2: memref<29x21xf32, #tpu.memory_space<vmem>>, %arg3: memref<128x128xf32, #tpu.memory_space<vmem>>, %arg4: memref<1x128xf32, #tpu.memory_space<vmem>>, %arg5: memref<8x128xf32, #tpu.memory_space<vmem>>, %arg6: memref<8x128xf32, #tpu.memory_space<vmem>>) attributes {dimension_semantics = [#tpu.dimension_semantics<parallel>], iteration_bounds = array<i64: 3>, scalar_prefetch = 0 : i64, scratch_operands = 1 : i64, tpu.core_type = #tpu.core_type<tc>, window_params = [{transform_indices = @transform_0, window_bounds = array<i64: 20, 1024>}, {pipeline_mode = #tpu.pipeline_mode<synchronous>, transform_indices = @transform_1, window_bounds = array<i64: 29, 21>}, {pipeline_mode = #tpu.pipeline_mode<synchronous>, transform_indices = @transform_2, window_bounds = array<i64: 128, 128>}, {pipeline_mode = #tpu.pipeline_mode<synchronous>, transform_indices = @transform_3, window_bounds = array<i64: 1, 128>}, {transform_indices = @transform_4, window_bounds = array<i64: 8, 128>}]} {
    %c0 = arith.constant 0 : index
    %c0_0 = arith.constant 0 : index
    %0 = vector.load %arg2[%c0, %c0_0] : memref<29x21xf32, #tpu.memory_space<vmem>>, vector<16x20xf32>
    %c0_1 = arith.constant 0 : index
    %c20 = arith.constant 20 : index
    %1 = vector.load %arg2[%c0_1, %c20] : memref<29x21xf32, #tpu.memory_space<vmem>>, vector<16x1xf32>
    %c16 = arith.constant 16 : index
    %c0_2 = arith.constant 0 : index
    %2 = vector.load %arg2[%c16, %c0_2] : memref<29x21xf32, #tpu.memory_space<vmem>>, vector<8x16xf32>
    %c16_3 = arith.constant 16 : index
    %c20_4 = arith.constant 20 : index
    %3 = vector.load %arg2[%c16_3, %c20_4] : memref<29x21xf32, #tpu.memory_space<vmem>>, vector<8x1xf32>
    %c24 = arith.constant 24 : index
    %c0_5 = arith.constant 0 : index
    %4 = vector.load %arg2[%c24, %c0_5] : memref<29x21xf32, #tpu.memory_space<vmem>>, vector<4x8xf32>
    %c24_6 = arith.constant 24 : index
    %c20_7 = arith.constant 20 : index
    %5 = vector.load %arg2[%c24_6, %c20_7] : memref<29x21xf32, #tpu.memory_space<vmem>>, vector<4x1xf32>
    %c28 = arith.constant 28 : index
    %c0_8 = arith.constant 0 : index
    %6 = vector.load %arg2[%c28, %c0_8] : memref<29x21xf32, #tpu.memory_space<vmem>>, vector<1x4xf32>
    %c28_9 = arith.constant 28 : index
    %c20_10 = arith.constant 20 : index
    %7 = vector.load %arg2[%c28_9, %c20_10] : memref<29x21xf32, #tpu.memory_space<vmem>>, vector<1x1xf32>
    %c0_11 = arith.constant 0 : index
    %c0_12 = arith.constant 0 : index
    %8 = vector.load %arg1[%c0_11, %c0_12] : memref<20x1024xf32, #tpu.memory_space<vmem>>, vector<20x1024xf32>
    %cst = arith.constant dense<0.000000e+00> : vector<16x1024xf32>
    %9 = tpu.matmul %0, %8, %cst {dimension_numbers = #tpu.dot_dimension_numbers<[1], [0], [0], [1], [0, 0, 1, 1], [], []>} : vector<16x20xf32>, vector<20x1024xf32>, vector<16x1024xf32> -> vector<16x1024xf32>
    %10 = vector.broadcast %1 : vector<16x1xf32> to vector<16x1024xf32>
    %11 = arith.addf %9, %10 : vector<16x1024xf32>
    %cst_13 = arith.constant 1.000000e-01 : f32
    %12 = vector.broadcast %cst_13 : f32 to vector<16x1024xf32>
    %13 = arith.mulf %12, %11 : vector<16x1024xf32>
    %14 = arith.maximumf %11, %13 : vector<16x1024xf32>
    %cst_14 = arith.constant dense<0.000000e+00> : vector<8x1024xf32>
    %15 = tpu.matmul %2, %14, %cst_14 {dimension_numbers = #tpu.dot_dimension_numbers<[1], [0], [0], [1], [0, 0, 1, 1], [], []>} : vector<8x16xf32>, vector<16x1024xf32>, vector<8x1024xf32> -> vector<8x1024xf32>
    %16 = vector.broadcast %3 : vector<8x1xf32> to vector<8x1024xf32>
    %17 = arith.addf %15, %16 : vector<8x1024xf32>
    %cst_15 = arith.constant 1.000000e-01 : f32
    %18 = vector.broadcast %cst_15 : f32 to vector<8x1024xf32>
    %19 = arith.mulf %18, %17 : vector<8x1024xf32>
    %20 = arith.maximumf %17, %19 : vector<8x1024xf32>
    %cst_16 = arith.constant dense<0.000000e+00> : vector<4x1024xf32>
    %21 = tpu.matmul %4, %20, %cst_16 {dimension_numbers = #tpu.dot_dimension_numbers<[1], [0], [0], [1], [0, 0, 1, 1], [], []>} : vector<4x8xf32>, vector<8x1024xf32>, vector<4x1024xf32> -> vector<4x1024xf32>
    %22 = vector.broadcast %5 : vector<4x1xf32> to vector<4x1024xf32>
    %23 = arith.addf %21, %22 : vector<4x1024xf32>
    %cst_17 = arith.constant 1.000000e-01 : f32
    %24 = vector.broadcast %cst_17 : f32 to vector<4x1024xf32>
    %25 = arith.mulf %24, %23 : vector<4x1024xf32>
    %26 = arith.maximumf %23, %25 : vector<4x1024xf32>
    %cst_18 = arith.constant dense<0.000000e+00> : vector<1x1024xf32>
    %27 = tpu.matmul %6, %26, %cst_18 {dimension_numbers = #tpu.dot_dimension_numbers<[1], [0], [0], [1], [0, 0, 1, 1], [], []>} : vector<1x4xf32>, vector<4x1024xf32>, vector<1x1024xf32> -> vector<1x1024xf32>
    %28 = vector.broadcast %7 : vector<1x1xf32> to vector<1x1024xf32>
    %29 = arith.addf %27, %28 : vector<1x1024xf32>
    %cst_19 = arith.constant 1.000000e-01 : f32
    %30 = vector.broadcast %cst_19 : f32 to vector<1x1024xf32>
    %31 = arith.mulf %30, %29 : vector<1x1024xf32>
    %32 = arith.maximumf %29, %31 : vector<1x1024xf32>
    %cst_20 = arith.constant 1.000000e-01 : f32
    %33 = vector.broadcast %cst_20 : f32 to vector<1x1024xf32>
    %34 = arith.mulf %33, %32 : vector<1x1024xf32>
    %35 = arith.maximumf %32, %34 : vector<1x1024xf32>
    %36 = vector.extract_strided_slice %35 {offsets = [0, 0], sizes = [1, 128], strides = [1, 1]} : vector<1x1024xf32> to vector<1x128xf32>
    %c0_21 = arith.constant 0 : index
    %c0_22 = arith.constant 0 : index
    %37 = vector.load %arg6[%c0_21, %c0_22] : memref<8x128xf32, #tpu.memory_space<vmem>>, vector<1x128xf32>
    tpu.vector_store %arg6[%c0_21, %c0_22], %36 {strides = array<i32>} : memref<8x128xf32, #tpu.memory_space<vmem>>, vector<1x128xf32>,
    %38 = vector.extract_strided_slice %35 {offsets = [0, 128], sizes = [1, 128], strides = [1, 1]} : vector<1x1024xf32> to vector<1x128xf32>
    %c1 = arith.constant 1 : index
    %c0_23 = arith.constant 0 : index
    %39 = vector.load %arg6[%c1, %c0_23] : memref<8x128xf32, #tpu.memory_space<vmem>>, vector<1x128xf32>
    tpu.vector_store %arg6[%c1, %c0_23], %38 {strides = array<i32>} : memref<8x128xf32, #tpu.memory_space<vmem>>, vector<1x128xf32>,
    %40 = vector.extract_strided_slice %35 {offsets = [0, 256], sizes = [1, 128], strides = [1, 1]} : vector<1x1024xf32> to vector<1x128xf32>
    %c2 = arith.constant 2 : index
    %c0_24 = arith.constant 0 : index
    %41 = vector.load %arg6[%c2, %c0_24] : memref<8x128xf32, #tpu.memory_space<vmem>>, vector<1x128xf32>
    tpu.vector_store %arg6[%c2, %c0_24], %40 {strides = array<i32>} : memref<8x128xf32, #tpu.memory_space<vmem>>, vector<1x128xf32>,
    %42 = vector.extract_strided_slice %35 {offsets = [0, 384], sizes = [1, 128], strides = [1, 1]} : vector<1x1024xf32> to vector<1x128xf32>
    %c3 = arith.constant 3 : index
    %c0_25 = arith.constant 0 : index
    %43 = vector.load %arg6[%c3, %c0_25] : memref<8x128xf32, #tpu.memory_space<vmem>>, vector<1x128xf32>
    tpu.vector_store %arg6[%c3, %c0_25], %42 {strides = array<i32>} : memref<8x128xf32, #tpu.memory_space<vmem>>, vector<1x128xf32>,
    %44 = vector.extract_strided_slice %35 {offsets = [0, 512], sizes = [1, 128], strides = [1, 1]} : vector<1x1024xf32> to vector<1x128xf32>
    %c4 = arith.constant 4 : index
    %c0_26 = arith.constant 0 : index
    %45 = vector.load %arg6[%c4, %c0_26] : memref<8x128xf32, #tpu.memory_space<vmem>>, vector<1x128xf32>
    tpu.vector_store %arg6[%c4, %c0_26], %44 {strides = array<i32>} : memref<8x128xf32, #tpu.memory_space<vmem>>, vector<1x128xf32>,
    %46 = vector.extract_strided_slice %35 {offsets = [0, 640], sizes = [1, 128], strides = [1, 1]} : vector<1x1024xf32> to vector<1x128xf32>
    %c5 = arith.constant 5 : index
    %c0_27 = arith.constant 0 : index
    %47 = vector.load %arg6[%c5, %c0_27] : memref<8x128xf32, #tpu.memory_space<vmem>>, vector<1x128xf32>
    tpu.vector_store %arg6[%c5, %c0_27], %46 {strides = array<i32>} : memref<8x128xf32, #tpu.memory_space<vmem>>, vector<1x128xf32>,
    %48 = vector.extract_strided_slice %35 {offsets = [0, 768], sizes = [1, 128], strides = [1, 1]} : vector<1x1024xf32> to vector<1x128xf32>
    %c6 = arith.constant 6 : index
    %c0_28 = arith.constant 0 : index
    %49 = vector.load %arg6[%c6, %c0_28] : memref<8x128xf32, #tpu.memory_space<vmem>>, vector<1x128xf32>
    tpu.vector_store %arg6[%c6, %c0_28], %48 {strides = array<i32>} : memref<8x128xf32, #tpu.memory_space<vmem>>, vector<1x128xf32>,
    %50 = vector.extract_strided_slice %35 {offsets = [0, 896], sizes = [1, 128], strides = [1, 1]} : vector<1x1024xf32> to vector<1x128xf32>
    %c7 = arith.constant 7 : index
    %c0_29 = arith.constant 0 : index
    %51 = vector.load %arg6[%c7, %c0_29] : memref<8x128xf32, #tpu.memory_space<vmem>>, vector<1x128xf32>
    tpu.vector_store %arg6[%c7, %c0_29], %50 {strides = array<i32>} : memref<8x128xf32, #tpu.memory_space<vmem>>, vector<1x128xf32>,
    %c0_30 = arith.constant 0 : index
    %c0_31 = arith.constant 0 : index
    %52 = vector.load %arg6[%c0_30, %c0_31] : memref<8x128xf32, #tpu.memory_space<vmem>>, vector<8x128xf32>
    %c0_32 = arith.constant 0 : index
    %c0_33 = arith.constant 0 : index
    %53 = vector.load %arg3[%c0_32, %c0_33] : memref<128x128xf32, #tpu.memory_space<vmem>>, vector<128x128xf32>
    %cst_34 = arith.constant dense<0.000000e+00> : vector<8x128xf32>
    %54 = tpu.matmul %52, %53, %cst_34 {dimension_numbers = #tpu.dot_dimension_numbers<[1], [0], [0], [1], [0, 0, 1, 1], [], []>} : vector<8x128xf32>, vector<128x128xf32>, vector<8x128xf32> -> vector<8x128xf32>
    %c0_35 = arith.constant 0 : index
    %c0_36 = arith.constant 0 : index
    %55 = vector.load %arg4[%c0_35, %c0_36] : memref<1x128xf32, #tpu.memory_space<vmem>>, vector<1x128xf32>
    %56 = vector.broadcast %55 : vector<1x128xf32> to vector<8x128xf32>
    %57 = arith.addf %54, %56 : vector<8x128xf32>
    %c0_37 = arith.constant 0 : index
    %c0_38 = arith.constant 0 : index
    %58 = vector.load %arg5[%c0_37, %c0_38] : memref<8x128xf32, #tpu.memory_space<vmem>>, vector<8x128xf32>
    tpu.vector_store %arg5[%c0_37, %c0_38], %57 {strides = array<i32>} : memref<8x128xf32, #tpu.memory_space<vmem>>, vector<8x128xf32>,
    return
  }
  func.func @transform_0(%arg0: i32) -> (i32, i32) {
    %c0_i32 = arith.constant 0 : i32
    %c0_i32_0 = arith.constant 0 : i32
    return %c0_i32, %arg0 : i32, i32
  }
  func.func @transform_1(%arg0: i32) -> (i32, i32) {
    %c0_i32 = arith.constant 0 : i32
    %c0_i32_0 = arith.constant 0 : i32
    %c0_i32_1 = arith.constant 0 : i32
    return %c0_i32, %c0_i32_0 : i32, i32
  }
  func.func @transform_2(%arg0: i32) -> (i32, i32) {
    %c0_i32 = arith.constant 0 : i32
    %c0_i32_0 = arith.constant 0 : i32
    %c0_i32_1 = arith.constant 0 : i32
    return %c0_i32, %c0_i32_0 : i32, i32
  }
  func.func @transform_3(%arg0: i32) -> (i32, i32) {
    %c0_i32 = arith.constant 0 : i32
    %c0_i32_0 = arith.constant 0 : i32
    %c0_i32_1 = arith.constant 0 : i32
    return %c0_i32, %c0_i32_0 : i32, i32
  }
  func.func @transform_4(%arg0: i32) -> (i32, i32) {
    %c0_i32 = arith.constant 0 : i32
    %c0_i32_0 = arith.constant 0 : i32
    return %arg0, %c0_i32 : i32, i32
  }
}

module attributes {stable_mosaic.version = 11 : i64} {
  func.func @_network_kernel(%arg0: i32, %arg1: memref<20x1024xf32, #tpu.memory_space<vmem>>, %arg2: memref<29x21xf32, #tpu.memory_space<vmem>>, %arg3: memref<128x128xf32, #tpu.memory_space<vmem>>, %arg4: memref<1x128xf32, #tpu.memory_space<vmem>>, %arg5: memref<8x128xf32, #tpu.memory_space<vmem>>, %arg6: memref<8x128xf32, #tpu.memory_space<vmem>>) attributes {dimension_semantics = [#tpu.dimension_semantics<parallel>], iteration_bounds = array<i64: 3>, scalar_prefetch = 0 : i64, scratch_operands = 1 : i64, tpu.core_type = #tpu.core_type<tc>, window_params = [{transform_indices = @transform_0, window_bounds = array<i64: 20, 1024>}, {pipeline_mode = #tpu.pipeline_mode<synchronous>, transform_indices = @transform_1, window_bounds = array<i64: 29, 21>}, {pipeline_mode = #tpu.pipeline_mode<synchronous>, transform_indices = @transform_2, window_bounds = array<i64: 128, 128>}, {pipeline_mode = #tpu.pipeline_mode<synchronous>, transform_indices = @transform_3, window_bounds = array<i64: 1, 128>}, {transform_indices = @transform_4, window_bounds = array<i64: 8, 128>}]} {
    %c0 = arith.constant 0 : index
    %c0_0 = arith.constant 0 : index
    %0 = vector.load %arg2[%c0, %c0_0] : memref<29x21xf32, #tpu.memory_space<vmem>>, vector<16x20xf32>
    %c0_1 = arith.constant 0 : index
    %c20 = arith.constant 20 : index
    %1 = vector.load %arg2[%c0_1, %c20] : memref<29x21xf32, #tpu.memory_space<vmem>>, vector<16x1xf32>
    %c16 = arith.constant 16 : index
    %c0_2 = arith.constant 0 : index
    %2 = vector.load %arg2[%c16, %c0_2] : memref<29x21xf32, #tpu.memory_space<vmem>>, vector<8x16xf32>
    %c16_3 = arith.constant 16 : index
    %c20_4 = arith.constant 20 : index
    %3 = vector.load %arg2[%c16_3, %c20_4] : memref<29x21xf32, #tpu.memory_space<vmem>>, vector<8x1xf32>
    %c24 = arith.constant 24 : index
    %c0_5 = arith.constant 0 : index
    %4 = vector.load %arg2[%c24, %c0_5] : memref<29x21xf32, #tpu.memory_space<vmem>>, vector<4x8xf32>
    %c24_6 = arith.constant 24 : index
    %c20_7 = arith.constant 20 : index
    %5 = vector.load %arg2[%c24_6, %c20_7] : memref<29x21xf32, #tpu.memory_space<vmem>>, vector<4x1xf32>
    %c28 = arith.constant 28 : index
    %c0_8 = arith.constant 0 : index
    %6 = vector.load %arg2[%c28, %c0_8] : memref<29x21xf32, #tpu.memory_space<vmem>>, vector<1x4xf32>
    %c28_9 = arith.constant 28 : index
    %c20_10 = arith.constant 20 : index
    %7 = vector.load %arg2[%c28_9, %c20_10] : memref<29x21xf32, #tpu.memory_space<vmem>>, vector<1x1xf32>
    %c0_11 = arith.constant 0 : index
    %c0_12 = arith.constant 0 : index
    %8 = vector.load %arg1[%c0_11, %c0_12] : memref<20x1024xf32, #tpu.memory_space<vmem>>, vector<20x1024xf32>
    %cst = arith.constant dense<0.000000e+00> : vector<16x1024xf32>
    %9 = tpu.matmul %0, %8, %cst {dimension_numbers = #tpu.dot_dimension_numbers<[1], [0], [0], [1], [0, 0, 1, 1], [], []>} : vector<16x20xf32>, vector<20x1024xf32>, vector<16x1024xf32> -> vector<16x1024xf32>
    %10 = vector.broadcast %1 : vector<16x1xf32> to vector<16x1024xf32>
    %11 = arith.addf %9, %10 : vector<16x1024xf32>
    %cst_13 = arith.constant 1.000000e-01 : f32
    %12 = vector.broadcast %cst_13 : f32 to vector<16x1024xf32>
    %13 = arith.mulf %12, %11 : vector<16x1024xf32>
    %14 = arith.maximumf %11, %13 : vector<16x1024xf32>
    %cst_14 = arith.constant dense<0.000000e+00> : vector<8x1024xf32>
    %15 = tpu.matmul %2, %14, %cst_14 {dimension_numbers = #tpu.dot_dimension_numbers<[1], [0], [0], [1], [0, 0, 1, 1], [], []>} : vector<8x16xf32>, vector<16x1024xf32>, vector<8x1024xf32> -> vector<8x1024xf32>
    %16 = vector.broadcast %3 : vector<8x1xf32> to vector<8x1024xf32>
    %17 = arith.addf %15, %16 : vector<8x1024xf32>
    %cst_15 = arith.constant 1.000000e-01 : f32
    %18 = vector.broadcast %cst_15 : f32 to vector<8x1024xf32>
    %19 = arith.mulf %18, %17 : vector<8x1024xf32>
    %20 = arith.maximumf %17, %19 : vector<8x1024xf32>
    %cst_16 = arith.constant dense<0.000000e+00> : vector<4x1024xf32>
    %21 = tpu.matmul %4, %20, %cst_16 {dimension_numbers = #tpu.dot_dimension_numbers<[1], [0], [0], [1], [0, 0, 1, 1], [], []>} : vector<4x8xf32>, vector<8x1024xf32>, vector<4x1024xf32> -> vector<4x1024xf32>
    %22 = vector.broadcast %5 : vector<4x1xf32> to vector<4x1024xf32>
    %23 = arith.addf %21, %22 : vector<4x1024xf32>
    %cst_17 = arith.constant 1.000000e-01 : f32
    %24 = vector.broadcast %cst_17 : f32 to vector<4x1024xf32>
    %25 = arith.mulf %24, %23 : vector<4x1024xf32>
    %26 = arith.maximumf %23, %25 : vector<4x1024xf32>
    %cst_18 = arith.constant dense<0.000000e+00> : vector<1x1024xf32>
    %27 = tpu.matmul %6, %26, %cst_18 {dimension_numbers = #tpu.dot_dimension_numbers<[1], [0], [0], [1], [0, 0, 1, 1], [], []>} : vector<1x4xf32>, vector<4x1024xf32>, vector<1x1024xf32> -> vector<1x1024xf32>
    %28 = vector.broadcast %7 : vector<1x1xf32> to vector<1x1024xf32>
    %29 = arith.addf %27, %28 : vector<1x1024xf32>
    %cst_19 = arith.constant 1.000000e-01 : f32
    %30 = vector.broadcast %cst_19 : f32 to vector<1x1024xf32>
    %31 = arith.mulf %30, %29 : vector<1x1024xf32>
    %32 = arith.maximumf %29, %31 : vector<1x1024xf32>
    %cst_20 = arith.constant 1.000000e-01 : f32
    %33 = vector.broadcast %cst_20 : f32 to vector<1x1024xf32>
    %34 = arith.mulf %33, %32 : vector<1x1024xf32>
    %35 = arith.maximumf %32, %34 : vector<1x1024xf32>
    %36 = vector.extract_strided_slice %35 {offsets = [0, 0], sizes = [1, 128], strides = [1, 1]} : vector<1x1024xf32> to vector<1x128xf32>
    %c0_21 = arith.constant 0 : index
    %c0_22 = arith.constant 0 : index
    %37 = vector.load %arg6[%c0_21, %c0_22] : memref<8x128xf32, #tpu.memory_space<vmem>>, vector<1x128xf32>
    tpu.vector_store %arg6[%c0_21, %c0_22], %36 {strides = array<i32>} : memref<8x128xf32, #tpu.memory_space<vmem>>, vector<1x128xf32>,
    %38 = vector.extract_strided_slice %35 {offsets = [0, 128], sizes = [1, 128], strides = [1, 1]} : vector<1x1024xf32> to vector<1x128xf32>
    %c1 = arith.constant 1 : index
    %c0_23 = arith.constant 0 : index
    %39 = vector.load %arg6[%c1, %c0_23] : memref<8x128xf32, #tpu.memory_space<vmem>>, vector<1x128xf32>
    tpu.vector_store %arg6[%c1, %c0_23], %38 {strides = array<i32>} : memref<8x128xf32, #tpu.memory_space<vmem>>, vector<1x128xf32>,
    %40 = vector.extract_strided_slice %35 {offsets = [0, 256], sizes = [1, 128], strides = [1, 1]} : vector<1x1024xf32> to vector<1x128xf32>
    %c2 = arith.constant 2 : index
    %c0_24 = arith.constant 0 : index
    %41 = vector.load %arg6[%c2, %c0_24] : memref<8x128xf32, #tpu.memory_space<vmem>>, vector<1x128xf32>
    tpu.vector_store %arg6[%c2, %c0_24], %40 {strides = array<i32>} : memref<8x128xf32, #tpu.memory_space<vmem>>, vector<1x128xf32>,
    %42 = vector.extract_strided_slice %35 {offsets = [0, 384], sizes = [1, 128], strides = [1, 1]} : vector<1x1024xf32> to vector<1x128xf32>
    %c3 = arith.constant 3 : index
    %c0_25 = arith.constant 0 : index
    %43 = vector.load %arg6[%c3, %c0_25] : memref<8x128xf32, #tpu.memory_space<vmem>>, vector<1x128xf32>
    tpu.vector_store %arg6[%c3, %c0_25], %42 {strides = array<i32>} : memref<8x128xf32, #tpu.memory_space<vmem>>, vector<1x128xf32>,
    %44 = vector.extract_strided_slice %35 {offsets = [0, 512], sizes = [1, 128], strides = [1, 1]} : vector<1x1024xf32> to vector<1x128xf32>
    %c4 = arith.constant 4 : index
    %c0_26 = arith.constant 0 : index
    %45 = vector.load %arg6[%c4, %c0_26] : memref<8x128xf32, #tpu.memory_space<vmem>>, vector<1x128xf32>
    tpu.vector_store %arg6[%c4, %c0_26], %44 {strides = array<i32>} : memref<8x128xf32, #tpu.memory_space<vmem>>, vector<1x128xf32>,
    %46 = vector.extract_strided_slice %35 {offsets = [0, 640], sizes = [1, 128], strides = [1, 1]} : vector<1x1024xf32> to vector<1x128xf32>
    %c5 = arith.constant 5 : index
    %c0_27 = arith.constant 0 : index
    %47 = vector.load %arg6[%c5, %c0_27] : memref<8x128xf32, #tpu.memory_space<vmem>>, vector<1x128xf32>
    tpu.vector_store %arg6[%c5, %c0_27], %46 {strides = array<i32>} : memref<8x128xf32, #tpu.memory_space<vmem>>, vector<1x128xf32>,
    %48 = vector.extract_strided_slice %35 {offsets = [0, 768], sizes = [1, 128], strides = [1, 1]} : vector<1x1024xf32> to vector<1x128xf32>
    %c6 = arith.constant 6 : index
    %c0_28 = arith.constant 0 : index
    %49 = vector.load %arg6[%c6, %c0_28] : memref<8x128xf32, #tpu.memory_space<vmem>>, vector<1x128xf32>
    tpu.vector_store %arg6[%c6, %c0_28], %48 {strides = array<i32>} : memref<8x128xf32, #tpu.memory_space<vmem>>, vector<1x128xf32>,
    %50 = vector.extract_strided_slice %35 {offsets = [0, 896], sizes = [1, 128], strides = [1, 1]} : vector<1x1024xf32> to vector<1x128xf32>
    %c7 = arith.constant 7 : index
    %c0_29 = arith.constant 0 : index
    %51 = vector.load %arg6[%c7, %c0_29] : memref<8x128xf32, #tpu.memory_space<vmem>>, vector<1x128xf32>
    tpu.vector_store %arg6[%c7, %c0_29], %50 {strides = array<i32>} : memref<8x128xf32, #tpu.memory_space<vmem>>, vector<1x128xf32>,
    %c0_30 = arith.constant 0 : index
    %c0_31 = arith.constant 0 : index
    %52 = vector.load %arg6[%c0_30, %c0_31] : memref<8x128xf32, #tpu.memory_space<vmem>>, vector<8x128xf32>
    %c0_32 = arith.constant 0 : index
    %c0_33 = arith.constant 0 : index
    %53 = vector.load %arg3[%c0_32, %c0_33] : memref<128x128xf32, #tpu.memory_space<vmem>>, vector<128x128xf32>
    %cst_34 = arith.constant dense<0.000000e+00> : vector<8x128xf32>
    %54 = tpu.matmul %52, %53, %cst_34 {dimension_numbers = #tpu.dot_dimension_numbers<[1], [0], [0], [1], [0, 0, 1, 1], [], []>} : vector<8x128xf32>, vector<128x128xf32>, vector<8x128xf32> -> vector<8x128xf32>
    %c0_35 = arith.constant 0 : index
    %c0_36 = arith.constant 0 : index
    %55 = vector.load %arg4[%c0_35, %c0_36] : memref<1x128xf32, #tpu.memory_space<vmem>>, vector<1x128xf32>
    %56 = vector.broadcast %55 : vector<1x128xf32> to vector<8x128xf32>
    %57 = arith.addf %54, %56 : vector<8x128xf32>
    %c0_37 = arith.constant 0 : index
    %c0_38 = arith.constant 0 : index
    %58 = vector.load %arg5[%c0_37, %c0_38] : memref<8x128xf32, #tpu.memory_space<vmem>>, vector<8x128xf32>
    tpu.vector_store %arg5[%c0_37, %c0_38], %57 {strides = array<i32>} : memref<8x128xf32, #tpu.memory_space<vmem>>, vector<8x128xf32>,
    return
  }
  func.func @transform_0(%arg0: i32) -> (i32, i32) {
    %c0_i32 = arith.constant 0 : i32
    %c0_i32_0 = arith.constant 0 : i32
    return %c0_i32, %arg0 : i32, i32
  }
  func.func @transform_1(%arg0: i32) -> (i32, i32) {
    %c0_i32 = arith.constant 0 : i32
    %c0_i32_0 = arith.constant 0 : i32
    %c0_i32_1 = arith.constant 0 : i32
    return %c0_i32, %c0_i32_0 : i32, i32
  }
  func.func @transform_2(%arg0: i32) -> (i32, i32) {
    %c0_i32 = arith.constant 0 : i32
    %c0_i32_0 = arith.constant 0 : i32
    %c0_i32_1 = arith.constant 0 : i32
    return %c0_i32, %c0_i32_0 : i32, i32
  }
  func.func @transform_3(%arg0: i32) -> (i32, i32) {
    %c0_i32 = arith.constant 0 : i32
    %c0_i32_0 = arith.constant 0 : i32
    %c0_i32_1 = arith.constant 0 : i32
    return %c0_i32, %c0_i32_0 : i32, i32
  }
  func.func @transform_4(%arg0: i32) -> (i32, i32) {
    %c0_i32 = arith.constant 0 : i32
    %c0_i32_0 = arith.constant 0 : i32
    return %arg0, %c0_i32 : i32, i32
  }
}

</mosaic_0001>

<llo_original>
// kernel: tpu_custom_call.1
$region0: #{tpu_custom_call.1}
  #allocation0 [shape = 'u32[]', space=smem, size = 0x4, offset = 0x4, fixed_abs, tag = 'smem constant byte address 0x4 - core index']
  #allocation1 [shape = 'u32[144,128]{1,0:T(1,128)}', space=vmem, size = 0x12000, scoped, tag = 'internal scratch']
  #allocation2 [shape = 'f32[8,128]{1,0:T(8,128)}', space=vmem, size = 0x1000, scoped, tag = 'scratch operand']
  %s0 = inlined_call_operand.hbm [shape: f32[20,3072], index: 0, kind: input, shape index: {}]
  %s1 = inlined_call_operand.vmem [shape: f32[29,21], index: 1, kind: input, shape index: {}]
  %s2 = inlined_call_operand.hbm [shape: f32[128,128], index: 2, kind: input, shape index: {}]
  %s3 = inlined_call_operand.vmem [shape: f32[1,128], index: 3, kind: input, shape index: {}]
  %s4 = inlined_call_operand.hbm [shape: f32[24,128], index: 4, kind: output, shape index: {}]
  %s5 = sld [smem:[#allocation0]]
  $region57: #{tpu_custom_call.1} parent=0
    _
  %s7 = ssub.s32 1, %s5
  %s8 = scalar_select 0, %s7, %s5
  $region1: #{tpu_custom_call.1} parent=0
    #allocation3 [shape = 'u8[196608]{0}', space=vmem, size = 0x30000, scoped, tag = 'input window, operand 0']
    #allocation4 [shape = 's32[2]{0}', space=sflag, size = 0x8, scoped, tag = 'scoped memory for tpu_custom_call.1']
    #allocation5 [shape = 's32[2]{0}', space=sflag, size = 0x8, scoped, tag = 'scoped memory for tpu_custom_call.1']
    #allocation6 [shape = 'u8[65536]{0}', space=vmem, size = 0x10000, scoped, tag = 'input window, operand 2, single buffered']
    #allocation7 [shape = 's32[1]{0}', space=sflag, size = 0x4, scoped, tag = 'scoped memory for tpu_custom_call.1']
    #allocation8 [shape = 'u8[8192]{0}', space=vmem, size = 0x2000, scoped, tag = 'output window, operand 0']
    %9 = vsyncpa [#allocation4], 0
    %s10 = scalar_lea.sflag [#allocation4], 1
    %11 = vsyncpa %s10, 0
    %12 = vsyncpa [#allocation7], 0
    %13 = vsyncpa [#allocation5], 0
    %s14 = scalar_lea.sflag [#allocation5], 1
    %15 = vsyncpa %s14, 0
    loop: start=0, step=1, limit=5
    $region2: #{tpu_custom_call.1} parent=1 // loop_pre_header
      _
    $region3: #{tpu_custom_call.1} parent=1 // loop_header
      %s17 = sphi 0, %s21
      %p18 = scmp.ge.s32.totalorder %s17, 5
      %s27 = sphi 0, %s29
      %s30 = sphi 0, %s27
      %s31 = sphi 0, %s30
      %s47 = sphi 0, %s31
      %s51 = sphi 0, %s51
      %s53 = sphi 0, %s51
      %s54 = sphi 0, %s53
      %s68 = sphi 0, %s54
      %s72 = sphi 0, %s72
      %s74 = sphi 0, %s72
      %s75 = sphi 0, %s74
      %s89 = sphi 0, %s75
      %s93 = sphi 0, %s93
      %s95 = sphi 0, %s93
      %s96 = sphi 0, %s95
      %s110 = sphi 0, %s96
      %s116 = sphi 0, %s118
      %s119 = sphi 0, %s116
      %s120 = sphi 0, %s119
      %s136 = sphi 0, %s120
    $region4: #{tpu_custom_call.1} parent=1 // loop_header_branch
      %20 = sbr.rel (%p18) target = $region8
    $region5: #{tpu_custom_call.1} parent=1 // loop_body
      %s22 = ssub.s32 %s17, 1
      %s23 = ssub.s32 %s17, 2
      %s24 = sadd.s32 %s17, 1
      %s25 = ssub.s32 %s17, %s24
      %p26 = scmp.eq.s32.totalorder %s25, 0
      %s28 = sadd.s32 %s27, 1
      %s29 = scalar_select %p26, %s27, %s28
      %p32 = pneg %p26
      %p33 = scmp.eq.s32.totalorder %s17, 2
      %p34 = por %p32, %p33
      %p35 = scmp.ne.s32.totalorder %s27, %s30
      %p36 = scmp.eq.s32.totalorder %s17, 0
      %p37 = por %p35, %p36
      %p38 = scmp.ne.s32.totalorder %s27, %s30
      %p39 = scmp.eq.s32.totalorder %s22, 2
      %p40 = por %p38, %p39
      %p41 = scmp.ne.s32.totalorder %s30, %s31
      %p42 = scmp.eq.s32.totalorder %s22, 0
      %p43 = por %p41, %p42
      %p44 = scmp.ne.s32.totalorder %s30, %s31
      %p45 = scmp.eq.s32.totalorder %s23, 2
      %p46 = por %p44, %p45
      %p48 = scmp.ne.s32.totalorder %s31, %s47
      %p49 = scmp.eq.s32.totalorder %s23, 0
      %p50 = por %p48, %p49
      %s52 = sadd.s32 %s51, 1
      %p55 = scmp.eq.s32.totalorder %s17, 2
      %p56 = scmp.ne.s32.totalorder %s51, %s53
      %p57 = scmp.eq.s32.totalorder %s17, 0
      %p58 = por %p56, %p57
      %p59 = scmp.ne.s32.totalorder %s51, %s53
      %p60 = scmp.eq.s32.totalorder %s22, 2
      %p61 = por %p59, %p60
      %p62 = scmp.ne.s32.totalorder %s53, %s54
      %p63 = scmp.eq.s32.totalorder %s22, 0
      %p64 = por %p62, %p63
      %p65 = scmp.ne.s32.totalorder %s53, %s54
      %p66 = scmp.eq.s32.totalorder %s23, 2
      %p67 = por %p65, %p66
      %p69 = scmp.ne.s32.totalorder %s54, %s68
      %p70 = scmp.eq.s32.totalorder %s23, 0
      %p71 = por %p69, %p70
      %s73 = sadd.s32 %s72, 1
      %p76 = scmp.eq.s32.totalorder %s17, 2
      %p77 = scmp.ne.s32.totalorder %s72, %s74
      %p78 = scmp.eq.s32.totalorder %s17, 0
      %p79 = por %p77, %p78
      %p80 = scmp.ne.s32.totalorder %s72, %s74
      %p81 = scmp.eq.s32.totalorder %s22, 2
      %p82 = por %p80, %p81
      %p83 = scmp.ne.s32.totalorder %s74, %s75
      %p84 = scmp.eq.s32.totalorder %s22, 0
      %p85 = por %p83, %p84
      %p86 = scmp.ne.s32.totalorder %s74, %s75
      %p87 = scmp.eq.s32.totalorder %s23, 2
      %p88 = por %p86, %p87
      %p90 = scmp.ne.s32.totalorder %s75, %s89
      %p91 = scmp.eq.s32.totalorder %s23, 0
      %p92 = por %p90, %p91
      %s94 = sadd.s32 %s93, 1
      %p97 = scmp.eq.s32.totalorder %s17, 2
      %p98 = scmp.ne.s32.totalorder %s93, %s95
      %p99 = scmp.eq.s32.totalorder %s17, 0
      %p100 = por %p98, %p99
      %p101 = scmp.ne.s32.totalorder %s93, %s95
      %p102 = scmp.eq.s32.totalorder %s22, 2
      %p103 = por %p101, %p102
      %p104 = scmp.ne.s32.totalorder %s95, %s96
      %p105 = scmp.eq.s32.totalorder %s22, 0
      %p106 = por %p104, %p105
      %p107 = scmp.ne.s32.totalorder %s95, %s96
      %p108 = scmp.eq.s32.totalorder %s23, 2
      %p109 = por %p107, %p108
      %p111 = scmp.ne.s32.totalorder %s96, %s110
      %p112 = scmp.eq.s32.totalorder %s23, 0
      %p113 = por %p111, %p112
      %s114 = ssub.s32 %s17, %s24
      %p115 = scmp.eq.s32.totalorder %s114, 0
      %s117 = sadd.s32 %s116, 1
      %s118 = scalar_select %p115, %s116, %s117
      %p121 = pneg %p115
      %p122 = scmp.eq.s32.totalorder %s17, 2
      %p123 = por %p121, %p122
      %p124 = scmp.ne.s32.totalorder %s116, %s119
      %p125 = scmp.eq.s32.totalorder %s17, 0
      %p126 = por %p124, %p125
      %p127 = scmp.ne.s32.totalorder %s116, %s119
      %p128 = scmp.eq.s32.totalorder %s22, 2
      %p129 = por %p127, %p128
      %p130 = scmp.ne.s32.totalorder %s119, %s120
      %p131 = scmp.eq.s32.totalorder %s22, 0
      %p132 = por %p130, %p131
      %p133 = scmp.ne.s32.totalorder %s119, %s120
      %p134 = scmp.eq.s32.totalorder %s23, 2
      %p135 = por %p133, %p134
      %p137 = scmp.ne.s32.totalorder %s120, %s136
      %p138 = scmp.eq.s32.totalorder %s23, 0
      %p139 = por %p137, %p138
      %p140 = scmp.le.s32.totalorder 1, %s17
      %p141 = scmp.lt.s32.totalorder %s17, 4
      %p142 = pnand %p140, %p141
      %p143 = pneg %p142
      // Predicated region
      $region9: #{tpu_custom_call.1} parent=5 // pred_check
        _
      $region10: #{tpu_custom_call.1} parent=5 // pred_check_branch
        %145 = sbr.rel (%p142) target = $region12
      $region11: #{tpu_custom_call.1} parent=5 // pred_region
        %s146 = ssub.s32 %s17, 1
        // Predicated region
        $region13: #{tpu_custom_call.1} parent=11 // pred_check
          %p147 = pneg %p64
        $region14: #{tpu_custom_call.1} parent=11 // pred_check_branch
          %149 = sbr.rel (%p147) target = $region16
        $region15: #{tpu_custom_call.1} parent=11 // pred_region
          _
        $region16: #{tpu_custom_call.1} parent=11 // pred_fallthru
          _
        // Predicated region
        $region17: #{tpu_custom_call.1} parent=11 // pred_check
          %p150 = pneg %p85
        $region18: #{tpu_custom_call.1} parent=11 // pred_check_branch
          %152 = sbr.rel (%p150) target = $region20
        $region19: #{tpu_custom_call.1} parent=11 // pred_region
          %s154 = ssub.s32 2048, 2048
          %155 = vsyncadd [#allocation7], %s154
          %s156 = sshll.u32 [#allocation6], 4
          %s157 = int_to_ptr.vmem [resolvable:$true] %s156
          %162 = dma.hbm_to_vmem [thread:$0]  %s2, 2048, %s157, [#allocation7], 128, 128, 8
        $region20: #{tpu_custom_call.1} parent=11 // pred_fallthru
          _
        // Predicated region
        $region21: #{tpu_custom_call.1} parent=11 // pred_check
          %p163 = pneg %p106
        $region22: #{tpu_custom_call.1} parent=11 // pred_check_branch
          %165 = sbr.rel (%p163) target = $region24
        $region23: #{tpu_custom_call.1} parent=11 // pred_region
          _
        $region24: #{tpu_custom_call.1} parent=11 // pred_fallthru
          _
      $region12: #{tpu_custom_call.1} parent=5 // pred_fallthru
        _
      %p166 = scmp.lt.s32.totalorder %s17, 3
      // Predicated region
      $region25: #{tpu_custom_call.1} parent=5 // pred_check
        %p167 = pneg %p166
      $region26: #{tpu_custom_call.1} parent=5 // pred_check_branch
        %169 = sbr.rel (%p167) target = $region28
      $region27: #{tpu_custom_call.1} parent=5 // pred_region
        // Predicated region
        $region29: #{tpu_custom_call.1} parent=27 // pred_check
          %p170 = pneg %p37
        $region30: #{tpu_custom_call.1} parent=27 // pred_check_branch
          %172 = sbr.rel (%p170) target = $region32
        $region31: #{tpu_custom_call.1} parent=27 // pred_region
          %s173 = sand.u32 %s27, 1
          %s174 = scalar_lea.sflag [#allocation4], %s173
          %s175 = sand.u32 %s27, 1
          %s176 = smul.addr %s175, 192
          %s177 = scalar_lea.vmem [#allocation3], %s176
          %s178 = smul.u32 8, %s17
          %s180 = ssub.s32 3072, 3072
          %181 = vsyncadd %s174, %s180
          %s182 = smul.addr %s178, 128
          %s183 = scalar_lea.hbm %s0, %s182
          %s184 = sshll.u32 %s177, 4
          %s185 = int_to_ptr.vmem [resolvable:$true] %s184
          %190 = dma.hbm_to_vmem [thread:$0]  %s183, 3072, %s185, %s174, 3072, 1024, 64
        $region32: #{tpu_custom_call.1} parent=27 // pred_fallthru
          _
      $region28: #{tpu_custom_call.1} parent=5 // pred_fallthru
        _
      %p191 = scmp.le.s32.totalorder 1, %s17
      %p192 = scmp.lt.s32.totalorder %s17, 4
      %p193 = pnand %p191, %p192
      %p194 = pneg %p193
      // Predicated region
      $region33: #{tpu_custom_call.1} parent=5 // pred_check
        _
      $region34: #{tpu_custom_call.1} parent=5 // pred_check_branch
        %196 = sbr.rel (%p193) target = $region36
      $region35: #{tpu_custom_call.1} parent=5 // pred_region
        %s197 = ssub.s32 %s17, 1
        %s198 = sand.u32 %s30, 1
        %s199 = scalar_lea.sflag [#allocation4], %s198
        %s200 = sand.u32 %s30, 1
        %s201 = smul.addr %s200, 192
        %s202 = scalar_lea.vmem [#allocation3], %s201
        // Predicated region
        $region37: #{tpu_custom_call.1} parent=35 // pred_check
          %p203 = pneg %p43
        $region38: #{tpu_custom_call.1} parent=35 // pred_check_branch
          %205 = sbr.rel (%p203) target = $region40
        $region39: #{tpu_custom_call.1} parent=35 // pred_region
          %206 = dma.done %s199, 3072
        $region40: #{tpu_custom_call.1} parent=35 // pred_fallthru
          _
        // Predicated region
        $region41: #{tpu_custom_call.1} parent=35 // pred_check
          %p207 = pneg %p85
        $region42: #{tpu_custom_call.1} parent=35 // pred_check_branch
          %209 = sbr.rel (%p207) target = $region44
        $region43: #{tpu_custom_call.1} parent=35 // pred_region
          %210 = dma.done [#allocation7], 2048
        $region44: #{tpu_custom_call.1} parent=35 // pred_fallthru
          _
        %s211 = sand.u32 %s30, 1
        %s212 = scalar_lea.sflag [#allocation4], %s211
        %s213 = sand.u32 %s30, 1
        %s214 = smul.addr %s213, 192
        %s215 = scalar_lea.vmem [#allocation3], %s214
        %p216 = pneg %p43
        %p217 = pneg %p40
        %p218 = pneg %p64
        %p219 = pneg %p61
        %p220 = pneg %p85
        %p221 = pneg %p82
        %p222 = pneg %p106
        %p223 = pneg %p103
        %p224 = pneg %p132
        %p225 = pneg %p129
        %s226 = sand.u32 %s119, 1
        %s227 = scalar_lea.sflag [#allocation5], %s226
        %s228 = sand.u32 %s119, 1
        %s229 = smul.addr %s228, 8
        %s230 = scalar_lea.vmem [#allocation8], %s229
        %s231 = smul.u32 8, %s22
        %v232 = vld [vmem:[%s1] sm:$0xff]
        %v233 = vld [vmem:[%s1 + $0x8] sm:$0xff]
        %v234 = vld [vmem:[%s1 + $0x10] sm:$0xff]
        %v235 = vld [vmem:[%s1 + $0x18] sm:$0xf]
        %v236 = vld [vmem:[%s1 + $0x1c] sm:$0x1]
        %v237 = vld [vmem:[%s202] sm:$0xff]
        %v238 = vld [vmem:[%s202 + $0x8] sm:$0xff]
        %v239 = vld [vmem:[%s202 + $0x10] sm:$0xff]
        %v240 = vld [vmem:[%s202 + $0x18] sm:$0xff]
        %v241 = vld [vmem:[%s202 + $0x20] sm:$0xff]
        %v242 = vld [vmem:[%s202 + $0x28] sm:$0xff]
        %v243 = vld [vmem:[%s202 + $0x30] sm:$0xff]
        %v244 = vld [vmem:[%s202 + $0x38] sm:$0xff]
        %v245 = vld [vmem:[%s202 + $0x40] sm:$0xff]
        %v246 = vld [vmem:[%s202 + $0x48] sm:$0xff]
        %v247 = vld [vmem:[%s202 + $0x50] sm:$0xff]
        %v248 = vld [vmem:[%s202 + $0x58] sm:$0xff]
        %v249 = vld [vmem:[%s202 + $0x60] sm:$0xff]
        %v250 = vld [vmem:[%s202 + $0x68] sm:$0xff]
        %v251 = vld [vmem:[%s202 + $0x70] sm:$0xff]
        %v252 = vld [vmem:[%s202 + $0x78] sm:$0xff]
        %v253 = vld [vmem:[%s202 + $0x80] sm:$0xf]
        %v254 = vld [vmem:[%s202 + $0x88] sm:$0xf]
        %v255 = vld [vmem:[%s202 + $0x90] sm:$0xf]
        %v256 = vld [vmem:[%s202 + $0x98] sm:$0xf]
        %v257 = vld [vmem:[%s202 + $0xa0] sm:$0xf]
        %v258 = vld [vmem:[%s202 + $0xa8] sm:$0xf]
        %v259 = vld [vmem:[%s202 + $0xb0] sm:$0xf]
        %v260 = vld [vmem:[%s202 + $0xb8] sm:$0xf]
        %262 = vset.pattern.permute.xlu0 20
        %263 = vperm.xlu0 %262, %v232
        %v264 = vpop.permute.xlu0 %263
        %267 = vset.pattern.permute.xlu0 20
        %268 = vperm.xlu0 %267, %v233
        %v269 = vpop.permute.xlu0 %268
        %vm271 = vcmask 162816
        %v272 = vsel %vm271, %v232, 0
        %v274 = vsel %vm271, %v233, 0
        %vm276 = vcmask 1043456
        %v278 = vsel %vm276, %v253, 0
        %v281 = vsel %vm276, %v254, 0
        %v284 = vsel %vm276, %v255, 0
        %v287 = vsel %vm276, %v256, 0
        %v290 = vsel %vm276, %v257, 0
        %v293 = vsel %vm276, %v258, 0
        %v296 = vsel %vm276, %v259, 0
        %v299 = vsel %vm276, %v260, 0
        %301 = vmatprep.subr.mxu0 0.0
        %302 = vmatpush1.msra.mxu0 0.0
        %303 = vmatprep.subr.mxu0 0.0
        %304 = vmatpush1.msra.mxu0 0.0
        %305 = vmatprep.subr.mxu0 0.0
        %306 = vmatpush1.msra.mxu0 0.0
        %307 = vmatprep.subr.mxu0 0.0
        %308 = vmatpush1.msra.mxu0 0.0
        %309 = vmatprep.subr.mxu0 0.0
        %310 = vmatpush1.msra.mxu0 0.0
        %311 = vmatprep.subr.mxu0 0.0
        %312 = vmatpush1.msra.mxu0 0.0
        %313 = vmatprep.subr.mxu0 0.0
        %314 = vmatpush1.msra.mxu0 0.0
        %315 = vmatprep.subr.mxu0 0.0
        %316 = vmatpush1.msra.mxu0 0.0
        %317 = vmatprep.subr.mxu0 0.0
        %318 = vmatpush1.msra.mxu0 0.0
        %319 = vmatprep.subr.mxu0 0.0
        %320 = vmatpush1.msra.mxu0 0.0
        %321 = vmatprep.subr.mxu0 0.0
        %322 = vmatpush1.msra.mxu0 0.0
        %323 = vmatprep.subr.mxu0 0.0
        %324 = vmatpush1.msra.mxu0 0.0
        %325 = vmatprep.subr.mxu0 0.0
        %326 = vmatpush1.msra.mxu0 0.0
        %327 = vmatprep.subr.mxu0 %v281
        %328 = vmatpush1.msra.mxu0 %v278
        %329 = vmatprep.subr.mxu0 %v246
        %330 = vmatpush1.msra.mxu0 %v245
        %331 = vmatprep.subr.mxu0 %v238
        %332 = vmatpush1.msra.mxu0 %v237
        %333 = vmatprep.subr.mxu0 0.0
        %334 = vmatpush2.msra.mxu0 0.0
        %335 = vmatprep.subr.mxu0 0.0
        %336 = vmatpush2.msra.mxu0 0.0
        %337 = vmatprep.subr.mxu0 0.0
        %338 = vmatpush2.msra.mxu0 0.0
        %339 = vmatprep.subr.mxu0 0.0
        %340 = vmatpush2.msra.mxu0 0.0
        %341 = vmatprep.subr.mxu0 0.0
        %342 = vmatpush2.msra.mxu0 0.0
        %343 = vmatprep.subr.mxu0 0.0
        %344 = vmatpush2.msra.mxu0 0.0
        %345 = vmatprep.subr.mxu0 0.0
        %346 = vmatpush2.msra.mxu0 0.0
        %347 = vmatprep.subr.mxu0 0.0
        %348 = vmatpush2.msra.mxu0 0.0
        %349 = vmatprep.subr.mxu0 0.0
        %350 = vmatpush2.msra.mxu0 0.0
        %351 = vmatprep.subr.mxu0 0.0
        %352 = vmatpush2.msra.mxu0 0.0
        %353 = vmatprep.subr.mxu0 0.0
        %354 = vmatpush2.msra.mxu0 0.0
        %355 = vmatprep.subr.mxu0 0.0
        %356 = vmatpush2.msra.mxu0 0.0
        %357 = vmatprep.subr.mxu0 0.0
        %358 = vmatpush2.msra.mxu0 0.0
        %359 = vmatprep.subr.mxu0 0.0
        %360 = vmatpush2.msra.mxu0 0.0
        %361 = vmatprep.subr.mxu0 0.0
        %362 = vmatpush2.msra.mxu0 0.0
        %363 = vmatprep.subr.mxu0 0.0
        %364 = vmatpush2.msra.mxu0 0.0
        %365 = vmatprep.mubr.f32.mxu0 0.0
        %366 = vmatmul.mubr.f32.gmra.mxu0 %v272
        %v367 = vpop.f32.mrf.mxu0
        %v368 = vadd.f32 %v264, %v367
        %v369 = vpop.f32.mrf.mxu0
        %v370 = vadd.f32 %v264, %v369
        %371 = vmatprep.mubr.f32.mxu0 0.0
        %372 = vmatmul.mubr.f32.gmra.mxu0 %v274
        %v373 = vpop.f32.mrf.mxu0
        %v374 = vadd.f32 %v269, %v373
        %v375 = vpop.f32.mrf.mxu0
        %v376 = vadd.f32 %v269, %v375
        %377 = vdwg.mxu0
        %378 = vmatprep.subr.mxu0 0.0
        %379 = vmatpush1.msra.mxu0 0.0
        %380 = vmatprep.subr.mxu0 0.0
        %381 = vmatpush1.msra.mxu0 0.0
        %382 = vmatprep.subr.mxu0 0.0
        %383 = vmatpush1.msra.mxu0 0.0
        %384 = vmatprep.subr.mxu0 0.0
        %385 = vmatpush1.msra.mxu0 0.0
        %386 = vmatprep.subr.mxu0 0.0
        %387 = vmatpush1.msra.mxu0 0.0
        %388 = vmatprep.subr.mxu0 0.0
        %389 = vmatpush1.msra.mxu0 0.0
        %390 = vmatprep.subr.mxu0 0.0
        %391 = vmatpush1.msra.mxu0 0.0
        %392 = vmatprep.subr.mxu0 0.0
        %393 = vmatpush1.msra.mxu0 0.0
        %394 = vmatprep.subr.mxu0 0.0
        %395 = vmatpush1.msra.mxu0 0.0
        %396 = vmatprep.subr.mxu0 0.0
        %397 = vmatpush1.msra.mxu0 0.0
        %398 = vmatprep.subr.mxu0 0.0
        %399 = vmatpush1.msra.mxu0 0.0
        %400 = vmatprep.subr.mxu0 0.0
        %401 = vmatpush1.msra.mxu0 0.0
        %402 = vmatprep.subr.mxu0 0.0
        %403 = vmatpush1.msra.mxu0 0.0
        %404 = vmatprep.subr.mxu0 %v287
        %405 = vmatpush1.msra.mxu0 %v284
        %406 = vmatprep.subr.mxu0 %v248
        %407 = vmatpush1.msra.mxu0 %v247
        %408 = vmatprep.subr.mxu0 %v240
        %409 = vmatpush1.msra.mxu0 %v239
        %410 = vmatprep.subr.mxu0 0.0
        %411 = vmatpush2.msra.mxu0 0.0
        %412 = vmatprep.subr.mxu0 0.0
        %413 = vmatpush2.msra.mxu0 0.0
        %414 = vmatprep.subr.mxu0 0.0
        %415 = vmatpush2.msra.mxu0 0.0
        %416 = vmatprep.subr.mxu0 0.0
        %417 = vmatpush2.msra.mxu0 0.0
        %418 = vmatprep.subr.mxu0 0.0
        %419 = vmatpush2.msra.mxu0 0.0
        %420 = vmatprep.subr.mxu0 0.0
        %421 = vmatpush2.msra.mxu0 0.0
        %422 = vmatprep.subr.mxu0 0.0
        %423 = vmatpush2.msra.mxu0 0.0
        %424 = vmatprep.subr.mxu0 0.0
        %425 = vmatpush2.msra.mxu0 0.0
        %426 = vmatprep.subr.mxu0 0.0
        %427 = vmatpush2.msra.mxu0 0.0
        %428 = vmatprep.subr.mxu0 0.0
        %429 = vmatpush2.msra.mxu0 0.0
        %430 = vmatprep.subr.mxu0 0.0
        %431 = vmatpush2.msra.mxu0 0.0
        %432 = vmatprep.subr.mxu0 0.0
        %433 = vmatpush2.msra.mxu0 0.0
        %434 = vmatprep.subr.mxu0 0.0
        %435 = vmatpush2.msra.mxu0 0.0
        %436 = vmatprep.subr.mxu0 0.0
        %437 = vmatpush2.msra.mxu0 0.0
        %438 = vmatprep.subr.mxu0 0.0
        %439 = vmatpush2.msra.mxu0 0.0
        %440 = vmatprep.subr.mxu0 0.0
        %441 = vmatpush2.msra.mxu0 0.0
        %442 = vmatprep.mubr.f32.mxu0 0.0
        %443 = vmatmul.mubr.f32.gmra.mxu0 %v272
        %v444 = vpop.f32.mrf.mxu0
        %v445 = vadd.f32 %v264, %v444
        %v446 = vpop.f32.mrf.mxu0
        %v447 = vadd.f32 %v264, %v446
        %448 = vmatprep.mubr.f32.mxu0 0.0
        %449 = vmatmul.mubr.f32.gmra.mxu0 %v274
        %v450 = vpop.f32.mrf.mxu0
        %v451 = vadd.f32 %v269, %v450
        %v452 = vpop.f32.mrf.mxu0
        %v453 = vadd.f32 %v269, %v452
        %454 = vdwg.mxu0
        %455 = vmatprep.subr.mxu0 0.0
        %456 = vmatpush1.msra.mxu0 0.0
        %457 = vmatprep.subr.mxu0 0.0
        %458 = vmatpush1.msra.mxu0 0.0
        %459 = vmatprep.subr.mxu0 0.0
        %460 = vmatpush1.msra.mxu0 0.0
        %461 = vmatprep.subr.mxu0 0.0
        %462 = vmatpush1.msra.mxu0 0.0
        %463 = vmatprep.subr.mxu0 0.0
        %464 = vmatpush1.msra.mxu0 0.0
        %465 = vmatprep.subr.mxu0 0.0
        %466 = vmatpush1.msra.mxu0 0.0
        %467 = vmatprep.subr.mxu0 0.0
        %468 = vmatpush1.msra.mxu0 0.0
        %469 = vmatprep.subr.mxu0 0.0
        %470 = vmatpush1.msra.mxu0 0.0
        %471 = vmatprep.subr.mxu0 0.0
        %472 = vmatpush1.msra.mxu0 0.0
        %473 = vmatprep.subr.mxu0 0.0
        %474 = vmatpush1.msra.mxu0 0.0
        %475 = vmatprep.subr.mxu0 0.0
        %476 = vmatpush1.msra.mxu0 0.0
        %477 = vmatprep.subr.mxu0 0.0
        %478 = vmatpush1.msra.mxu0 0.0
        %479 = vmatprep.subr.mxu0 0.0
        %480 = vmatpush1.msra.mxu0 0.0
        %481 = vmatprep.subr.mxu0 %v293
        %482 = vmatpush1.msra.mxu0 %v290
        %483 = vmatprep.subr.mxu0 %v250
        %484 = vmatpush1.msra.mxu0 %v249
        %485 = vmatprep.subr.mxu0 %v242
        %486 = vmatpush1.msra.mxu0 %v241
        %487 = vmatprep.subr.mxu0 0.0
        %488 = vmatpush2.msra.mxu0 0.0
        %489 = vmatprep.subr.mxu0 0.0
        %490 = vmatpush2.msra.mxu0 0.0
        %491 = vmatprep.subr.mxu0 0.0
        %492 = vmatpush2.msra.mxu0 0.0
        %493 = vmatprep.subr.mxu0 0.0
        %494 = vmatpush2.msra.mxu0 0.0
        %495 = vmatprep.subr.mxu0 0.0
        %496 = vmatpush2.msra.mxu0 0.0
        %497 = vmatprep.subr.mxu0 0.0
        %498 = vmatpush2.msra.mxu0 0.0
        %499 = vmatprep.subr.mxu0 0.0
        %500 = vmatpush2.msra.mxu0 0.0
        %501 = vmatprep.subr.mxu0 0.0
        %502 = vmatpush2.msra.mxu0 0.0
        %503 = vmatprep.subr.mxu0 0.0
        %504 = vmatpush2.msra.mxu0 0.0
        %505 = vmatprep.subr.mxu0 0.0
        %506 = vmatpush2.msra.mxu0 0.0
        %507 = vmatprep.subr.mxu0 0.0
        %508 = vmatpush2.msra.mxu0 0.0
        %509 = vmatprep.subr.mxu0 0.0
        %510 = vmatpush2.msra.mxu0 0.0
        %511 = vmatprep.subr.mxu0 0.0
        %512 = vmatpush2.msra.mxu0 0.0
        %513 = vmatprep.subr.mxu0 0.0
        %514 = vmatpush2.msra.mxu0 0.0
        %515 = vmatprep.subr.mxu0 0.0
        %516 = vmatpush2.msra.mxu0 0.0
        %517 = vmatprep.subr.mxu0 0.0
        %518 = vmatpush2.msra.mxu0 0.0
        %519 = vmatprep.mubr.f32.mxu0 0.0
        %520 = vmatmul.mubr.f32.gmra.mxu0 %v272
        %v521 = vpop.f32.mrf.mxu0
        %v522 = vadd.f32 %v264, %v521
        %v523 = vpop.f32.mrf.mxu0
        %v524 = vadd.f32 %v264, %v523
        %525 = vmatprep.mubr.f32.mxu0 0.0
        %526 = vmatmul.mubr.f32.gmra.mxu0 %v274
        %v527 = vpop.f32.mrf.mxu0
        %v528 = vadd.f32 %v269, %v527
        %v529 = vpop.f32.mrf.mxu0
        %v530 = vadd.f32 %v269, %v529
        %531 = vdwg.mxu0
        %532 = vmatprep.subr.mxu0 0.0
        %533 = vmatpush1.msra.mxu0 0.0
        %534 = vmatprep.subr.mxu0 0.0
        %535 = vmatpush1.msra.mxu0 0.0
        %536 = vmatprep.subr.mxu0 0.0
        %537 = vmatpush1.msra.mxu0 0.0
        %538 = vmatprep.subr.mxu0 0.0
        %539 = vmatpush1.msra.mxu0 0.0
        %540 = vmatprep.subr.mxu0 0.0
        %541 = vmatpush1.msra.mxu0 0.0
        %542 = vmatprep.subr.mxu0 0.0
        %543 = vmatpush1.msra.mxu0 0.0
        %544 = vmatprep.subr.mxu0 0.0
        %545 = vmatpush1.msra.mxu0 0.0
        %546 = vmatprep.subr.mxu0 0.0
        %547 = vmatpush1.msra.mxu0 0.0
        %548 = vmatprep.subr.mxu0 0.0
        %549 = vmatpush1.msra.mxu0 0.0
        %550 = vmatprep.subr.mxu0 0.0
        %551 = vmatpush1.msra.mxu0 0.0
        %552 = vmatprep.subr.mxu0 0.0
        %553 = vmatpush1.msra.mxu0 0.0
        %554 = vmatprep.subr.mxu0 0.0
        %555 = vmatpush1.msra.mxu0 0.0
        %556 = vmatprep.subr.mxu0 0.0
        %557 = vmatpush1.msra.mxu0 0.0
        %558 = vmatprep.subr.mxu0 %v299
        %559 = vmatpush1.msra.mxu0 %v296
        %560 = vmatprep.subr.mxu0 %v252
        %561 = vmatpush1.msra.mxu0 %v251
        %562 = vmatprep.subr.mxu0 %v244
        %563 = vmatpush1.msra.mxu0 %v243
        %564 = vmatprep.subr.mxu0 0.0
        %565 = vmatpush2.msra.mxu0 0.0
        %566 = vmatprep.subr.mxu0 0.0
        %567 = vmatpush2.msra.mxu0 0.0
        %568 = vmatprep.subr.mxu0 0.0
        %569 = vmatpush2.msra.mxu0 0.0
        %570 = vmatprep.subr.mxu0 0.0
        %571 = vmatpush2.msra.mxu0 0.0
        %572 = vmatprep.subr.mxu0 0.0
        %573 = vmatpush2.msra.mxu0 0.0
        %574 = vmatprep.subr.mxu0 0.0
        %575 = vmatpush2.msra.mxu0 0.0
        %576 = vmatprep.subr.mxu0 0.0
        %577 = vmatpush2.msra.mxu0 0.0
        %578 = vmatprep.subr.mxu0 0.0
        %579 = vmatpush2.msra.mxu0 0.0
        %580 = vmatprep.subr.mxu0 0.0
        %581 = vmatpush2.msra.mxu0 0.0
        %582 = vmatprep.subr.mxu0 0.0
        %583 = vmatpush2.msra.mxu0 0.0
        %584 = vmatprep.subr.mxu0 0.0
        %585 = vmatpush2.msra.mxu0 0.0
        %586 = vmatprep.subr.mxu0 0.0
        %587 = vmatpush2.msra.mxu0 0.0
        %588 = vmatprep.subr.mxu0 0.0
        %589 = vmatpush2.msra.mxu0 0.0
        %590 = vmatprep.subr.mxu0 0.0
        %591 = vmatpush2.msra.mxu0 0.0
        %592 = vmatprep.subr.mxu0 0.0
        %593 = vmatpush2.msra.mxu0 0.0
        %594 = vmatprep.subr.mxu0 0.0
        %595 = vmatpush2.msra.mxu0 0.0
        %596 = vmatprep.mubr.f32.mxu0 0.0
        %597 = vmatmul.mubr.f32.gmra.mxu0 %v272
        %v598 = vpop.f32.mrf.mxu0
        %v599 = vadd.f32 %v264, %v598
        %v600 = vpop.f32.mrf.mxu0
        %v601 = vadd.f32 %v264, %v600
        %602 = vmatprep.mubr.f32.mxu0 0.0
        %603 = vmatmul.mubr.f32.gmra.mxu0 %v274
        %v604 = vpop.f32.mrf.mxu0
        %v605 = vadd.f32 %v269, %v604
        %v606 = vpop.f32.mrf.mxu0
        %v607 = vadd.f32 %v269, %v606
        %608 = vdwg.mxu0
        %v609 = vmul.f32 %v368, 0.1
        %v610 = vmul.f32 %v370, 0.1
        %v611 = vmul.f32 %v445, 0.1
        %v612 = vmul.f32 %v447, 0.1
        %v613 = vmul.f32 %v522, 0.1
        %v614 = vmul.f32 %v524, 0.1
        %v615 = vmul.f32 %v599, 0.1
        %v616 = vmul.f32 %v601, 0.1
        %v617 = vmul.f32 %v374, 0.1
        %v618 = vmul.f32 %v376, 0.1
        %v619 = vmul.f32 %v451, 0.1
        %v620 = vmul.f32 %v453, 0.1
        %v621 = vmul.f32 %v528, 0.1
        %v622 = vmul.f32 %v530, 0.1
        %v623 = vmul.f32 %v605, 0.1
        %v624 = vmul.f32 %v607, 0.1
        %v625 = vmax.f32 %v368, %v609
        %v626 = vmax.f32 %v370, %v610
        %v627 = vmax.f32 %v445, %v611
        %v628 = vmax.f32 %v447, %v612
        %v629 = vmax.f32 %v522, %v613
        %v630 = vmax.f32 %v524, %v614
        %v631 = vmax.f32 %v599, %v615
        %v632 = vmax.f32 %v601, %v616
        %v633 = vmax.f32 %v374, %v617
        %v634 = vmax.f32 %v376, %v618
        %v635 = vmax.f32 %v451, %v619
        %v636 = vmax.f32 %v453, %v620
        %v637 = vmax.f32 %v528, %v621
        %v638 = vmax.f32 %v530, %v622
        %v639 = vmax.f32 %v605, %v623
        %v640 = vmax.f32 %v607, %v624
        %642 = vset.pattern.permute.xlu0 20
        %643 = vperm.xlu0 %642, %v234
        %v644 = vpop.permute.xlu0 %643
        %vm646 = vcmask 130048
        %v647 = vsel %vm646, %v234, 0
        %649 = vmatprep.subr.mxu0 0.0
        %650 = vmatpush1.msra.mxu0 0.0
        %651 = vmatprep.subr.mxu0 0.0
        %652 = vmatpush1.msra.mxu0 0.0
        %653 = vmatprep.subr.mxu0 0.0
        %654 = vmatpush1.msra.mxu0 0.0
        %655 = vmatprep.subr.mxu0 0.0
        %656 = vmatpush1.msra.mxu0 0.0
        %657 = vmatprep.subr.mxu0 0.0
        %658 = vmatpush1.msra.mxu0 0.0
        %659 = vmatprep.subr.mxu0 0.0
        %660 = vmatpush1.msra.mxu0 0.0
        %661 = vmatprep.subr.mxu0 0.0
        %662 = vmatpush1.msra.mxu0 0.0
        %663 = vmatprep.subr.mxu0 0.0
        %664 = vmatpush1.msra.mxu0 0.0
        %665 = vmatprep.subr.mxu0 0.0
        %666 = vmatpush1.msra.mxu0 0.0
        %667 = vmatprep.subr.mxu0 0.0
        %668 = vmatpush1.msra.mxu0 0.0
        %669 = vmatprep.subr.mxu0 0.0
        %670 = vmatpush1.msra.mxu0 0.0
        %671 = vmatprep.subr.mxu0 0.0
        %672 = vmatpush1.msra.mxu0 0.0
        %673 = vmatprep.subr.mxu0 0.0
        %674 = vmatpush1.msra.mxu0 0.0
        %675 = vmatprep.subr.mxu0 0.0
        %676 = vmatpush1.msra.mxu0 0.0
        %677 = vmatprep.subr.mxu0 %v634
        %678 = vmatpush1.msra.mxu0 %v633
        %679 = vmatprep.subr.mxu0 %v626
        %680 = vmatpush1.msra.mxu0 %v625
        %681 = vmatprep.subr.mxu0 0.0
        %682 = vmatpush2.msra.mxu0 0.0
        %683 = vmatprep.subr.mxu0 0.0
        %684 = vmatpush2.msra.mxu0 0.0
        %685 = vmatprep.subr.mxu0 0.0
        %686 = vmatpush2.msra.mxu0 0.0
        %687 = vmatprep.subr.mxu0 0.0
        %688 = vmatpush2.msra.mxu0 0.0
        %689 = vmatprep.subr.mxu0 0.0
        %690 = vmatpush2.msra.mxu0 0.0
        %691 = vmatprep.subr.mxu0 0.0
        %692 = vmatpush2.msra.mxu0 0.0
        %693 = vmatprep.subr.mxu0 0.0
        %694 = vmatpush2.msra.mxu0 0.0
        %695 = vmatprep.subr.mxu0 0.0
        %696 = vmatpush2.msra.mxu0 0.0
        %697 = vmatprep.subr.mxu0 0.0
        %698 = vmatpush2.msra.mxu0 0.0
        %699 = vmatprep.subr.mxu0 0.0
        %700 = vmatpush2.msra.mxu0 0.0
        %701 = vmatprep.subr.mxu0 0.0
        %702 = vmatpush2.msra.mxu0 0.0
        %703 = vmatprep.subr.mxu0 0.0
        %704 = vmatpush2.msra.mxu0 0.0
        %705 = vmatprep.subr.mxu0 0.0
        %706 = vmatpush2.msra.mxu0 0.0
        %707 = vmatprep.subr.mxu0 0.0
        %708 = vmatpush2.msra.mxu0 0.0
        %709 = vmatprep.subr.mxu0 0.0
        %710 = vmatpush2.msra.mxu0 0.0
        %711 = vmatprep.subr.mxu0 0.0
        %712 = vmatpush2.msra.mxu0 0.0
        %713 = vmatprep.mubr.f32.mxu0 0.0
        %714 = vmatmul.mubr.f32.gmra.mxu0 %v647
        %v715 = vpop.f32.mrf.mxu0
        %v716 = vadd.f32 %v644, %v715
        %v717 = vpop.f32.mrf.mxu0
        %v718 = vadd.f32 %v644, %v717
        %719 = vdwg.mxu0
        %720 = vmatprep.subr.mxu0 0.0
        %721 = vmatpush1.msra.mxu0 0.0
        %722 = vmatprep.subr.mxu0 0.0
        %723 = vmatpush1.msra.mxu0 0.0
        %724 = vmatprep.subr.mxu0 0.0
        %725 = vmatpush1.msra.mxu0 0.0
        %726 = vmatprep.subr.mxu0 0.0
        %727 = vmatpush1.msra.mxu0 0.0
        %728 = vmatprep.subr.mxu0 0.0
        %729 = vmatpush1.msra.mxu0 0.0
        %730 = vmatprep.subr.mxu0 0.0
        %731 = vmatpush1.msra.mxu0 0.0
        %732 = vmatprep.subr.mxu0 0.0
        %733 = vmatpush1.msra.mxu0 0.0
        %734 = vmatprep.subr.mxu0 0.0
        %735 = vmatpush1.msra.mxu0 0.0
        %736 = vmatprep.subr.mxu0 0.0
        %737 = vmatpush1.msra.mxu0 0.0
        %738 = vmatprep.subr.mxu0 0.0
        %739 = vmatpush1.msra.mxu0 0.0
        %740 = vmatprep.subr.mxu0 0.0
        %741 = vmatpush1.msra.mxu0 0.0
        %742 = vmatprep.subr.mxu0 0.0
        %743 = vmatpush1.msra.mxu0 0.0
        %744 = vmatprep.subr.mxu0 0.0
        %745 = vmatpush1.msra.mxu0 0.0
        %746 = vmatprep.subr.mxu0 0.0
        %747 = vmatpush1.msra.mxu0 0.0
        %748 = vmatprep.subr.mxu0 %v636
        %749 = vmatpush1.msra.mxu0 %v635
        %750 = vmatprep.subr.mxu0 %v628
        %751 = vmatpush1.msra.mxu0 %v627
        %752 = vmatprep.subr.mxu0 0.0
        %753 = vmatpush2.msra.mxu0 0.0
        %754 = vmatprep.subr.mxu0 0.0
        %755 = vmatpush2.msra.mxu0 0.0
        %756 = vmatprep.subr.mxu0 0.0
        %757 = vmatpush2.msra.mxu0 0.0
        %758 = vmatprep.subr.mxu0 0.0
        %759 = vmatpush2.msra.mxu0 0.0
        %760 = vmatprep.subr.mxu0 0.0
        %761 = vmatpush2.msra.mxu0 0.0
        %762 = vmatprep.subr.mxu0 0.0
        %763 = vmatpush2.msra.mxu0 0.0
        %764 = vmatprep.subr.mxu0 0.0
        %765 = vmatpush2.msra.mxu0 0.0
        %766 = vmatprep.subr.mxu0 0.0
        %767 = vmatpush2.msra.mxu0 0.0
        %768 = vmatprep.subr.mxu0 0.0
        %769 = vmatpush2.msra.mxu0 0.0
        %770 = vmatprep.subr.mxu0 0.0
        %771 = vmatpush2.msra.mxu0 0.0
        %772 = vmatprep.subr.mxu0 0.0
        %773 = vmatpush2.msra.mxu0 0.0
        %774 = vmatprep.subr.mxu0 0.0
        %775 = vmatpush2.msra.mxu0 0.0
        %776 = vmatprep.subr.mxu0 0.0
        %777 = vmatpush2.msra.mxu0 0.0
        %778 = vmatprep.subr.mxu0 0.0
        %779 = vmatpush2.msra.mxu0 0.0
        %780 = vmatprep.subr.mxu0 0.0
        %781 = vmatpush2.msra.mxu0 0.0
        %782 = vmatprep.subr.mxu0 0.0
        %783 = vmatpush2.msra.mxu0 0.0
        %784 = vmatprep.mubr.f32.mxu0 0.0
        %785 = vmatmul.mubr.f32.gmra.mxu0 %v647
        %v786 = vpop.f32.mrf.mxu0
        %v787 = vadd.f32 %v644, %v786
        %v788 = vpop.f32.mrf.mxu0
        %v789 = vadd.f32 %v644, %v788
        %790 = vdwg.mxu0
        %791 = vmatprep.subr.mxu0 0.0
        %792 = vmatpush1.msra.mxu0 0.0
        %793 = vmatprep.subr.mxu0 0.0
        %794 = vmatpush1.msra.mxu0 0.0
        %795 = vmatprep.subr.mxu0 0.0
        %796 = vmatpush1.msra.mxu0 0.0
        %797 = vmatprep.subr.mxu0 0.0
        %798 = vmatpush1.msra.mxu0 0.0
        %799 = vmatprep.subr.mxu0 0.0
        %800 = vmatpush1.msra.mxu0 0.0
        %801 = vmatprep.subr.mxu0 0.0
        %802 = vmatpush1.msra.mxu0 0.0
        %803 = vmatprep.subr.mxu0 0.0
        %804 = vmatpush1.msra.mxu0 0.0
        %805 = vmatprep.subr.mxu0 0.0
        %806 = vmatpush1.msra.mxu0 0.0
        %807 = vmatprep.subr.mxu0 0.0
        %808 = vmatpush1.msra.mxu0 0.0
        %809 = vmatprep.subr.mxu0 0.0
        %810 = vmatpush1.msra.mxu0 0.0
        %811 = vmatprep.subr.mxu0 0.0
        %812 = vmatpush1.msra.mxu0 0.0
        %813 = vmatprep.subr.mxu0 0.0
        %814 = vmatpush1.msra.mxu0 0.0
        %815 = vmatprep.subr.mxu0 0.0
        %816 = vmatpush1.msra.mxu0 0.0
        %817 = vmatprep.subr.mxu0 0.0
        %818 = vmatpush1.msra.mxu0 0.0
        %819 = vmatprep.subr.mxu0 %v638
        %820 = vmatpush1.msra.mxu0 %v637
        %821 = vmatprep.subr.mxu0 %v630
        %822 = vmatpush1.msra.mxu0 %v629
        %823 = vmatprep.subr.mxu0 0.0
        %824 = vmatpush2.msra.mxu0 0.0
        %825 = vmatprep.subr.mxu0 0.0
        %826 = vmatpush2.msra.mxu0 0.0
        %827 = vmatprep.subr.mxu0 0.0
        %828 = vmatpush2.msra.mxu0 0.0
        %829 = vmatprep.subr.mxu0 0.0
        %830 = vmatpush2.msra.mxu0 0.0
        %831 = vmatprep.subr.mxu0 0.0
        %832 = vmatpush2.msra.mxu0 0.0
        %833 = vmatprep.subr.mxu0 0.0
        %834 = vmatpush2.msra.mxu0 0.0
        %835 = vmatprep.subr.mxu0 0.0
        %836 = vmatpush2.msra.mxu0 0.0
        %837 = vmatprep.subr.mxu0 0.0
        %838 = vmatpush2.msra.mxu0 0.0
        %839 = vmatprep.subr.mxu0 0.0
        %840 = vmatpush2.msra.mxu0 0.0
        %841 = vmatprep.subr.mxu0 0.0
        %842 = vmatpush2.msra.mxu0 0.0
        %843 = vmatprep.subr.mxu0 0.0
        %844 = vmatpush2.msra.mxu0 0.0
        %845 = vmatprep.subr.mxu0 0.0
        %846 = vmatpush2.msra.mxu0 0.0
        %847 = vmatprep.subr.mxu0 0.0
        %848 = vmatpush2.msra.mxu0 0.0
        %849 = vmatprep.subr.mxu0 0.0
        %850 = vmatpush2.msra.mxu0 0.0
        %851 = vmatprep.subr.mxu0 0.0
        %852 = vmatpush2.msra.mxu0 0.0
        %853 = vmatprep.subr.mxu0 0.0
        %854 = vmatpush2.msra.mxu0 0.0
        %855 = vmatprep.mubr.f32.mxu0 0.0
        %856 = vmatmul.mubr.f32.gmra.mxu0 %v647
        %v857 = vpop.f32.mrf.mxu0
        %v858 = vadd.f32 %v644, %v857
        %v859 = vpop.f32.mrf.mxu0
        %v860 = vadd.f32 %v644, %v859
        %861 = vdwg.mxu0
        %862 = vmatprep.subr.mxu0 0.0
        %863 = vmatpush1.msra.mxu0 0.0
        %864 = vmatprep.subr.mxu0 0.0
        %865 = vmatpush1.msra.mxu0 0.0
        %866 = vmatprep.subr.mxu0 0.0
        %867 = vmatpush1.msra.mxu0 0.0
        %868 = vmatprep.subr.mxu0 0.0
        %869 = vmatpush1.msra.mxu0 0.0
        %870 = vmatprep.subr.mxu0 0.0
        %871 = vmatpush1.msra.mxu0 0.0
        %872 = vmatprep.subr.mxu0 0.0
        %873 = vmatpush1.msra.mxu0 0.0
        %874 = vmatprep.subr.mxu0 0.0
        %875 = vmatpush1.msra.mxu0 0.0
        %876 = vmatprep.subr.mxu0 0.0
        %877 = vmatpush1.msra.mxu0 0.0
        %878 = vmatprep.subr.mxu0 0.0
        %879 = vmatpush1.msra.mxu0 0.0
        %880 = vmatprep.subr.mxu0 0.0
        %881 = vmatpush1.msra.mxu0 0.0
        %882 = vmatprep.subr.mxu0 0.0
        %883 = vmatpush1.msra.mxu0 0.0
        %884 = vmatprep.subr.mxu0 0.0
        %885 = vmatpush1.msra.mxu0 0.0
        %886 = vmatprep.subr.mxu0 0.0
        %887 = vmatpush1.msra.mxu0 0.0
        %888 = vmatprep.subr.mxu0 0.0
        %889 = vmatpush1.msra.mxu0 0.0
        %890 = vmatprep.subr.mxu0 %v640
        %891 = vmatpush1.msra.mxu0 %v639
        %892 = vmatprep.subr.mxu0 %v632
        %893 = vmatpush1.msra.mxu0 %v631
        %894 = vmatprep.subr.mxu0 0.0
        %895 = vmatpush2.msra.mxu0 0.0
        %896 = vmatprep.subr.mxu0 0.0
        %897 = vmatpush2.msra.mxu0 0.0
        %898 = vmatprep.subr.mxu0 0.0
        %899 = vmatpush2.msra.mxu0 0.0
        %900 = vmatprep.subr.mxu0 0.0
        %901 = vmatpush2.msra.mxu0 0.0
        %902 = vmatprep.subr.mxu0 0.0
        %903 = vmatpush2.msra.mxu0 0.0
        %904 = vmatprep.subr.mxu0 0.0
        %905 = vmatpush2.msra.mxu0 0.0
        %906 = vmatprep.subr.mxu0 0.0
        %907 = vmatpush2.msra.mxu0 0.0
        %908 = vmatprep.subr.mxu0 0.0
        %909 = vmatpush2.msra.mxu0 0.0
        %910 = vmatprep.subr.mxu0 0.0
        %911 = vmatpush2.msra.mxu0 0.0
        %912 = vmatprep.subr.mxu0 0.0
        %913 = vmatpush2.msra.mxu0 0.0
        %914 = vmatprep.subr.mxu0 0.0
        %915 = vmatpush2.msra.mxu0 0.0
        %916 = vmatprep.subr.mxu0 0.0
        %917 = vmatpush2.msra.mxu0 0.0
        %918 = vmatprep.subr.mxu0 0.0
        %919 = vmatpush2.msra.mxu0 0.0
        %920 = vmatprep.subr.mxu0 0.0
        %921 = vmatpush2.msra.mxu0 0.0
        %922 = vmatprep.subr.mxu0 0.0
        %923 = vmatpush2.msra.mxu0 0.0
        %924 = vmatprep.subr.mxu0 0.0
        %925 = vmatpush2.msra.mxu0 0.0
        %926 = vmatprep.mubr.f32.mxu0 0.0
        %927 = vmatmul.mubr.f32.gmra.mxu0 %v647
        %v928 = vpop.f32.mrf.mxu0
        %v929 = vadd.f32 %v644, %v928
        %v930 = vpop.f32.mrf.mxu0
        %v931 = vadd.f32 %v644, %v930
        %932 = vdwg.mxu0
        %v933 = vmul.f32 %v716, 0.1
        %v934 = vmul.f32 %v718, 0.1
        %v935 = vmul.f32 %v787, 0.1
        %v936 = vmul.f32 %v789, 0.1
        %v937 = vmul.f32 %v858, 0.1
        %v938 = vmul.f32 %v860, 0.1
        %v939 = vmul.f32 %v929, 0.1
        %v940 = vmul.f32 %v931, 0.1
        %v941 = vmax.f32 %v716, %v933
        %v942 = vmax.f32 %v718, %v934
        %v943 = vmax.f32 %v787, %v935
        %v944 = vmax.f32 %v789, %v936
        %v945 = vmax.f32 %v858, %v937
        %v946 = vmax.f32 %v860, %v938
        %v947 = vmax.f32 %v929, %v939
        %v948 = vmax.f32 %v931, %v940
        %950 = vset.pattern.permute.xlu0 20
        %951 = vperm.xlu0 %950, %v235
        %v952 = vpop.permute.xlu0 %951
        %vm954 = vcmask 64512
        %v955 = vsel %vm954, %v235, 0
        %957 = vmatprep.subr.mxu0 0.0
        %958 = vmatpush1.msra.mxu0 0.0
        %959 = vmatprep.subr.mxu0 0.0
        %960 = vmatpush1.msra.mxu0 0.0
        %961 = vmatprep.subr.mxu0 0.0
        %962 = vmatpush1.msra.mxu0 0.0
        %963 = vmatprep.subr.mxu0 0.0
        %964 = vmatpush1.msra.mxu0 0.0
        %965 = vmatprep.subr.mxu0 0.0
        %966 = vmatpush1.msra.mxu0 0.0
        %967 = vmatprep.subr.mxu0 0.0
        %968 = vmatpush1.msra.mxu0 0.0
        %969 = vmatprep.subr.mxu0 0.0
        %970 = vmatpush1.msra.mxu0 0.0
        %971 = vmatprep.subr.mxu0 0.0
        %972 = vmatpush1.msra.mxu0 0.0
        %973 = vmatprep.subr.mxu0 0.0
        %974 = vmatpush1.msra.mxu0 0.0
        %975 = vmatprep.subr.mxu0 0.0
        %976 = vmatpush1.msra.mxu0 0.0
        %977 = vmatprep.subr.mxu0 0.0
        %978 = vmatpush1.msra.mxu0 0.0
        %979 = vmatprep.subr.mxu0 0.0
        %980 = vmatpush1.msra.mxu0 0.0
        %981 = vmatprep.subr.mxu0 0.0
        %982 = vmatpush1.msra.mxu0 0.0
        %983 = vmatprep.subr.mxu0 0.0
        %984 = vmatpush1.msra.mxu0 0.0
        %985 = vmatprep.subr.mxu0 0.0
        %986 = vmatpush1.msra.mxu0 0.0
        %987 = vmatprep.subr.mxu0 %v942
        %988 = vmatpush1.msra.mxu0 %v941
        %989 = vmatprep.subr.mxu0 0.0
        %990 = vmatpush2.msra.mxu0 0.0
        %991 = vmatprep.subr.mxu0 0.0
        %992 = vmatpush2.msra.mxu0 0.0
        %993 = vmatprep.subr.mxu0 0.0
        %994 = vmatpush2.msra.mxu0 0.0
        %995 = vmatprep.subr.mxu0 0.0
        %996 = vmatpush2.msra.mxu0 0.0
        %997 = vmatprep.subr.mxu0 0.0
        %998 = vmatpush2.msra.mxu0 0.0
        %999 = vmatprep.subr.mxu0 0.0
        %1000 = vmatpush2.msra.mxu0 0.0
        %1001 = vmatprep.subr.mxu0 0.0
        %1002 = vmatpush2.msra.mxu0 0.0
        %1003 = vmatprep.subr.mxu0 0.0
        %1004 = vmatpush2.msra.mxu0 0.0
        %1005 = vmatprep.subr.mxu0 0.0
        %1006 = vmatpush2.msra.mxu0 0.0
        %1007 = vmatprep.subr.mxu0 0.0
        %1008 = vmatpush2.msra.mxu0 0.0
        %1009 = vmatprep.subr.mxu0 0.0
        %1010 = vmatpush2.msra.mxu0 0.0
        %1011 = vmatprep.subr.mxu0 0.0
        %1012 = vmatpush2.msra.mxu0 0.0
        %1013 = vmatprep.subr.mxu0 0.0
        %1014 = vmatpush2.msra.mxu0 0.0
        %1015 = vmatprep.subr.mxu0 0.0
        %1016 = vmatpush2.msra.mxu0 0.0
        %1017 = vmatprep.subr.mxu0 0.0
        %1018 = vmatpush2.msra.mxu0 0.0
        %1019 = vmatprep.subr.mxu0 0.0
        %1020 = vmatpush2.msra.mxu0 0.0
        %1021 = vmatprep.mubr.f32.mxu0 0.0
        %1022 = vmatmul.mubr.f32.gmra.mxu0 %v955
        %v1023 = vpop.f32.mrf.mxu0
        %v1024 = vadd.f32 %v952, %v1023
        %v1025 = vpop.f32.mrf.mxu0
        %v1026 = vadd.f32 %v952, %v1025
        %1027 = vdwg.mxu0
        %1028 = vmatprep.subr.mxu0 0.0
        %1029 = vmatpush1.msra.mxu0 0.0
        %1030 = vmatprep.subr.mxu0 0.0
        %1031 = vmatpush1.msra.mxu0 0.0
        %1032 = vmatprep.subr.mxu0 0.0
        %1033 = vmatpush1.msra.mxu0 0.0
        %1034 = vmatprep.subr.mxu0 0.0
        %1035 = vmatpush1.msra.mxu0 0.0
        %1036 = vmatprep.subr.mxu0 0.0
        %1037 = vmatpush1.msra.mxu0 0.0
        %1038 = vmatprep.subr.mxu0 0.0
        %1039 = vmatpush1.msra.mxu0 0.0
        %1040 = vmatprep.subr.mxu0 0.0
        %1041 = vmatpush1.msra.mxu0 0.0
        %1042 = vmatprep.subr.mxu0 0.0
        %1043 = vmatpush1.msra.mxu0 0.0
        %1044 = vmatprep.subr.mxu0 0.0
        %1045 = vmatpush1.msra.mxu0 0.0
        %1046 = vmatprep.subr.mxu0 0.0
        %1047 = vmatpush1.msra.mxu0 0.0
        %1048 = vmatprep.subr.mxu0 0.0
        %1049 = vmatpush1.msra.mxu0 0.0
        %1050 = vmatprep.subr.mxu0 0.0
        %1051 = vmatpush1.msra.mxu0 0.0
        %1052 = vmatprep.subr.mxu0 0.0
        %1053 = vmatpush1.msra.mxu0 0.0
        %1054 = vmatprep.subr.mxu0 0.0
        %1055 = vmatpush1.msra.mxu0 0.0
        %1056 = vmatprep.subr.mxu0 0.0
        %1057 = vmatpush1.msra.mxu0 0.0
        %1058 = vmatprep.subr.mxu0 %v944
        %1059 = vmatpush1.msra.mxu0 %v943
        %1060 = vmatprep.subr.mxu0 0.0
        %1061 = vmatpush2.msra.mxu0 0.0
        %1062 = vmatprep.subr.mxu0 0.0
        %1063 = vmatpush2.msra.mxu0 0.0
        %1064 = vmatprep.subr.mxu0 0.0
        %1065 = vmatpush2.msra.mxu0 0.0
        %1066 = vmatprep.subr.mxu0 0.0
        %1067 = vmatpush2.msra.mxu0 0.0
        %1068 = vmatprep.subr.mxu0 0.0
        %1069 = vmatpush2.msra.mxu0 0.0
        %1070 = vmatprep.subr.mxu0 0.0
        %1071 = vmatpush2.msra.mxu0 0.0
        %1072 = vmatprep.subr.mxu0 0.0
        %1073 = vmatpush2.msra.mxu0 0.0
        %1074 = vmatprep.subr.mxu0 0.0
        %1075 = vmatpush2.msra.mxu0 0.0
        %1076 = vmatprep.subr.mxu0 0.0
        %1077 = vmatpush2.msra.mxu0 0.0
        %1078 = vmatprep.subr.mxu0 0.0
        %1079 = vmatpush2.msra.mxu0 0.0
        %1080 = vmatprep.subr.mxu0 0.0
        %1081 = vmatpush2.msra.mxu0 0.0
        %1082 = vmatprep.subr.mxu0 0.0
        %1083 = vmatpush2.msra.mxu0 0.0
        %1084 = vmatprep.subr.mxu0 0.0
        %1085 = vmatpush2.msra.mxu0 0.0
        %1086 = vmatprep.subr.mxu0 0.0
        %1087 = vmatpush2.msra.mxu0 0.0
        %1088 = vmatprep.subr.mxu0 0.0
        %1089 = vmatpush2.msra.mxu0 0.0
        %1090 = vmatprep.subr.mxu0 0.0
        %1091 = vmatpush2.msra.mxu0 0.0
        %1092 = vmatprep.mubr.f32.mxu0 0.0
        %1093 = vmatmul.mubr.f32.gmra.mxu0 %v955
        %v1094 = vpop.f32.mrf.mxu0
        %v1095 = vadd.f32 %v952, %v1094
        %v1096 = vpop.f32.mrf.mxu0
        %v1097 = vadd.f32 %v952, %v1096
        %1098 = vdwg.mxu0
        %1099 = vmatprep.subr.mxu0 0.0
        %1100 = vmatpush1.msra.mxu0 0.0
        %1101 = vmatprep.subr.mxu0 0.0
        %1102 = vmatpush1.msra.mxu0 0.0
        %1103 = vmatprep.subr.mxu0 0.0
        %1104 = vmatpush1.msra.mxu0 0.0
        %1105 = vmatprep.subr.mxu0 0.0
        %1106 = vmatpush1.msra.mxu0 0.0
        %1107 = vmatprep.subr.mxu0 0.0
        %1108 = vmatpush1.msra.mxu0 0.0
        %1109 = vmatprep.subr.mxu0 0.0
        %1110 = vmatpush1.msra.mxu0 0.0
        %1111 = vmatprep.subr.mxu0 0.0
        %1112 = vmatpush1.msra.mxu0 0.0
        %1113 = vmatprep.subr.mxu0 0.0
        %1114 = vmatpush1.msra.mxu0 0.0
        %1115 = vmatprep.subr.mxu0 0.0
        %1116 = vmatpush1.msra.mxu0 0.0
        %1117 = vmatprep.subr.mxu0 0.0
        %1118 = vmatpush1.msra.mxu0 0.0
        %1119 = vmatprep.subr.mxu0 0.0
        %1120 = vmatpush1.msra.mxu0 0.0
        %1121 = vmatprep.subr.mxu0 0.0
        %1122 = vmatpush1.msra.mxu0 0.0
        %1123 = vmatprep.subr.mxu0 0.0
        %1124 = vmatpush1.msra.mxu0 0.0
        %1125 = vmatprep.subr.mxu0 0.0
        %1126 = vmatpush1.msra.mxu0 0.0
        %1127 = vmatprep.subr.mxu0 0.0
        %1128 = vmatpush1.msra.mxu0 0.0
        %1129 = vmatprep.subr.mxu0 %v946
        %1130 = vmatpush1.msra.mxu0 %v945
        %1131 = vmatprep.subr.mxu0 0.0
        %1132 = vmatpush2.msra.mxu0 0.0
        %1133 = vmatprep.subr.mxu0 0.0
        %1134 = vmatpush2.msra.mxu0 0.0
        %1135 = vmatprep.subr.mxu0 0.0
        %1136 = vmatpush2.msra.mxu0 0.0
        %1137 = vmatprep.subr.mxu0 0.0
        %1138 = vmatpush2.msra.mxu0 0.0
        %1139 = vmatprep.subr.mxu0 0.0
        %1140 = vmatpush2.msra.mxu0 0.0
        %1141 = vmatprep.subr.mxu0 0.0
        %1142 = vmatpush2.msra.mxu0 0.0
        %1143 = vmatprep.subr.mxu0 0.0
        %1144 = vmatpush2.msra.mxu0 0.0
        %1145 = vmatprep.subr.mxu0 0.0
        %1146 = vmatpush2.msra.mxu0 0.0
        %1147 = vmatprep.subr.mxu0 0.0
        %1148 = vmatpush2.msra.mxu0 0.0
        %1149 = vmatprep.subr.mxu0 0.0
        %1150 = vmatpush2.msra.mxu0 0.0
        %1151 = vmatprep.subr.mxu0 0.0
        %1152 = vmatpush2.msra.mxu0 0.0
        %1153 = vmatprep.subr.mxu0 0.0
        %1154 = vmatpush2.msra.mxu0 0.0
        %1155 = vmatprep.subr.mxu0 0.0
        %1156 = vmatpush2.msra.mxu0 0.0
        %1157 = vmatprep.subr.mxu0 0.0
        %1158 = vmatpush2.msra.mxu0 0.0
        %1159 = vmatprep.subr.mxu0 0.0
        %1160 = vmatpush2.msra.mxu0 0.0
        %1161 = vmatprep.subr.mxu0 0.0
        %1162 = vmatpush2.msra.mxu0 0.0
        %1163 = vmatprep.mubr.f32.mxu0 0.0
        %1164 = vmatmul.mubr.f32.gmra.mxu0 %v955
        %v1165 = vpop.f32.mrf.mxu0
        %v1166 = vadd.f32 %v952, %v1165
        %v1167 = vpop.f32.mrf.mxu0
        %v1168 = vadd.f32 %v952, %v1167
        %1169 = vdwg.mxu0
        %1170 = vmatprep.subr.mxu0 0.0
        %1171 = vmatpush1.msra.mxu0 0.0
        %1172 = vmatprep.subr.mxu0 0.0
        %1173 = vmatpush1.msra.mxu0 0.0
        %1174 = vmatprep.subr.mxu0 0.0
        %1175 = vmatpush1.msra.mxu0 0.0
        %1176 = vmatprep.subr.mxu0 0.0
        %1177 = vmatpush1.msra.mxu0 0.0
        %1178 = vmatprep.subr.mxu0 0.0
        %1179 = vmatpush1.msra.mxu0 0.0
        %1180 = vmatprep.subr.mxu0 0.0
        %1181 = vmatpush1.msra.mxu0 0.0
        %1182 = vmatprep.subr.mxu0 0.0
        %1183 = vmatpush1.msra.mxu0 0.0
        %1184 = vmatprep.subr.mxu0 0.0
        %1185 = vmatpush1.msra.mxu0 0.0
        %1186 = vmatprep.subr.mxu0 0.0
        %1187 = vmatpush1.msra.mxu0 0.0
        %1188 = vmatprep.subr.mxu0 0.0
        %1189 = vmatpush1.msra.mxu0 0.0
        %1190 = vmatprep.subr.mxu0 0.0
        %1191 = vmatpush1.msra.mxu0 0.0
        %1192 = vmatprep.subr.mxu0 0.0
        %1193 = vmatpush1.msra.mxu0 0.0
        %1194 = vmatprep.subr.mxu0 0.0
        %1195 = vmatpush1.msra.mxu0 0.0
        %1196 = vmatprep.subr.mxu0 0.0
        %1197 = vmatpush1.msra.mxu0 0.0
        %1198 = vmatprep.subr.mxu0 0.0
        %1199 = vmatpush1.msra.mxu0 0.0
        %1200 = vmatprep.subr.mxu0 %v948
        %1201 = vmatpush1.msra.mxu0 %v947
        %1202 = vmatprep.subr.mxu0 0.0
        %1203 = vmatpush2.msra.mxu0 0.0
        %1204 = vmatprep.subr.mxu0 0.0
        %1205 = vmatpush2.msra.mxu0 0.0
        %1206 = vmatprep.subr.mxu0 0.0
        %1207 = vmatpush2.msra.mxu0 0.0
        %1208 = vmatprep.subr.mxu0 0.0
        %1209 = vmatpush2.msra.mxu0 0.0
        %1210 = vmatprep.subr.mxu0 0.0
        %1211 = vmatpush2.msra.mxu0 0.0
        %1212 = vmatprep.subr.mxu0 0.0
        %1213 = vmatpush2.msra.mxu0 0.0
        %1214 = vmatprep.subr.mxu0 0.0
        %1215 = vmatpush2.msra.mxu0 0.0
        %1216 = vmatprep.subr.mxu0 0.0
        %1217 = vmatpush2.msra.mxu0 0.0
        %1218 = vmatprep.subr.mxu0 0.0
        %1219 = vmatpush2.msra.mxu0 0.0
        %1220 = vmatprep.subr.mxu0 0.0
        %1221 = vmatpush2.msra.mxu0 0.0
        %1222 = vmatprep.subr.mxu0 0.0
        %1223 = vmatpush2.msra.mxu0 0.0
        %1224 = vmatprep.subr.mxu0 0.0
        %1225 = vmatpush2.msra.mxu0 0.0
        %1226 = vmatprep.subr.mxu0 0.0
        %1227 = vmatpush2.msra.mxu0 0.0
        %1228 = vmatprep.subr.mxu0 0.0
        %1229 = vmatpush2.msra.mxu0 0.0
        %1230 = vmatprep.subr.mxu0 0.0
        %1231 = vmatpush2.msra.mxu0 0.0
        %1232 = vmatprep.subr.mxu0 0.0
        %1233 = vmatpush2.msra.mxu0 0.0
        %1234 = vmatprep.mubr.f32.mxu0 0.0
        %1235 = vmatmul.mubr.f32.gmra.mxu0 %v955
        %v1236 = vpop.f32.mrf.mxu0
        %v1237 = vadd.f32 %v952, %v1236
        %v1238 = vpop.f32.mrf.mxu0
        %v1239 = vadd.f32 %v952, %v1238
        %1240 = vdwg.mxu0
        %v1241 = vmul.f32 %v1024, 0.1
        %v1242 = vmul.f32 %v1026, 0.1
        %v1243 = vmul.f32 %v1095, 0.1
        %v1244 = vmul.f32 %v1097, 0.1
        %v1245 = vmul.f32 %v1166, 0.1
        %v1246 = vmul.f32 %v1168, 0.1
        %v1247 = vmul.f32 %v1237, 0.1
        %v1248 = vmul.f32 %v1239, 0.1
        %v1249 = vmax.f32 %v1024, %v1241
        %v1250 = vmax.f32 %v1026, %v1242
        %v1251 = vmax.f32 %v1095, %v1243
        %v1252 = vmax.f32 %v1097, %v1244
        %v1253 = vmax.f32 %v1166, %v1245
        %v1254 = vmax.f32 %v1168, %v1246
        %v1255 = vmax.f32 %v1237, %v1247
        %v1256 = vmax.f32 %v1239, %v1248
        %1258 = vset.pattern.permute.xlu0 20
        %1259 = vperm.xlu0 %1258, %v236
        %v1260 = vpop.permute.xlu0 %1259
        %vm1262 = vcmask 31744
        %v1263 = vsel %vm1262, %v236, 0
        %v1266 = vsel %vm276, %v1249, 0
        %v1269 = vsel %vm276, %v1250, 0
        %v1272 = vsel %vm276, %v1251, 0
        %v1275 = vsel %vm276, %v1252, 0
        %v1278 = vsel %vm276, %v1253, 0
        %v1281 = vsel %vm276, %v1254, 0
        %v1284 = vsel %vm276, %v1255, 0
        %v1287 = vsel %vm276, %v1256, 0
        %1289 = vmatprep.subr.mxu0 0.0
        %1290 = vmatpush1.msra.mxu0 0.0
        %1291 = vmatprep.subr.mxu0 0.0
        %1292 = vmatpush1.msra.mxu0 0.0
        %1293 = vmatprep.subr.mxu0 0.0
        %1294 = vmatpush1.msra.mxu0 0.0
        %1295 = vmatprep.subr.mxu0 0.0
        %1296 = vmatpush1.msra.mxu0 0.0
        %1297 = vmatprep.subr.mxu0 0.0
        %1298 = vmatpush1.msra.mxu0 0.0
        %1299 = vmatprep.subr.mxu0 0.0
        %1300 = vmatpush1.msra.mxu0 0.0
        %1301 = vmatprep.subr.mxu0 0.0
        %1302 = vmatpush1.msra.mxu0 0.0
        %1303 = vmatprep.subr.mxu0 0.0
        %1304 = vmatpush1.msra.mxu0 0.0
        %1305 = vmatprep.subr.mxu0 0.0
        %1306 = vmatpush1.msra.mxu0 0.0
        %1307 = vmatprep.subr.mxu0 0.0
        %1308 = vmatpush1.msra.mxu0 0.0
        %1309 = vmatprep.subr.mxu0 0.0
        %1310 = vmatpush1.msra.mxu0 0.0
        %1311 = vmatprep.subr.mxu0 0.0
        %1312 = vmatpush1.msra.mxu0 0.0
        %1313 = vmatprep.subr.mxu0 0.0
        %1314 = vmatpush1.msra.mxu0 0.0
        %1315 = vmatprep.subr.mxu0 0.0
        %1316 = vmatpush1.msra.mxu0 0.0
        %1317 = vmatprep.subr.mxu0 0.0
        %1318 = vmatpush1.msra.mxu0 0.0
        %1319 = vmatprep.subr.mxu0 %v1269
        %1320 = vmatpush1.msra.mxu0 %v1266
        %1321 = vmatprep.subr.mxu0 0.0
        %1322 = vmatpush2.msra.mxu0 0.0
        %1323 = vmatprep.subr.mxu0 0.0
        %1324 = vmatpush2.msra.mxu0 0.0
        %1325 = vmatprep.subr.mxu0 0.0
        %1326 = vmatpush2.msra.mxu0 0.0
        %1327 = vmatprep.subr.mxu0 0.0
        %1328 = vmatpush2.msra.mxu0 0.0
        %1329 = vmatprep.subr.mxu0 0.0
        %1330 = vmatpush2.msra.mxu0 0.0
        %1331 = vmatprep.subr.mxu0 0.0
        %1332 = vmatpush2.msra.mxu0 0.0
        %1333 = vmatprep.subr.mxu0 0.0
        %1334 = vmatpush2.msra.mxu0 0.0
        %1335 = vmatprep.subr.mxu0 0.0
        %1336 = vmatpush2.msra.mxu0 0.0
        %1337 = vmatprep.subr.mxu0 0.0
        %1338 = vmatpush2.msra.mxu0 0.0
        %1339 = vmatprep.subr.mxu0 0.0
        %1340 = vmatpush2.msra.mxu0 0.0
        %1341 = vmatprep.subr.mxu0 0.0
        %1342 = vmatpush2.msra.mxu0 0.0
        %1343 = vmatprep.subr.mxu0 0.0
        %1344 = vmatpush2.msra.mxu0 0.0
        %1345 = vmatprep.subr.mxu0 0.0
        %1346 = vmatpush2.msra.mxu0 0.0
        %1347 = vmatprep.subr.mxu0 0.0
        %1348 = vmatpush2.msra.mxu0 0.0
        %1349 = vmatprep.subr.mxu0 0.0
        %1350 = vmatpush2.msra.mxu0 0.0
        %1351 = vmatprep.subr.mxu0 0.0
        %1352 = vmatpush2.msra.mxu0 0.0
        %1353 = vmatprep.mubr.f32.mxu0 0.0
        %1354 = vmatmul.mubr.f32.gmra.mxu0 %v1263
        %v1355 = vpop.f32.mrf.mxu0
        %v1356 = vadd.f32 %v1260, %v1355
        %v1357 = vpop.f32.mrf.mxu0
        %v1358 = vadd.f32 %v1260, %v1357
        %1359 = vdwg.mxu0
        %1360 = vmatprep.subr.mxu0 0.0
        %1361 = vmatpush1.msra.mxu0 0.0
        %1362 = vmatprep.subr.mxu0 0.0
        %1363 = vmatpush1.msra.mxu0 0.0
        %1364 = vmatprep.subr.mxu0 0.0
        %1365 = vmatpush1.msra.mxu0 0.0
        %1366 = vmatprep.subr.mxu0 0.0
        %1367 = vmatpush1.msra.mxu0 0.0
        %1368 = vmatprep.subr.mxu0 0.0
        %1369 = vmatpush1.msra.mxu0 0.0
        %1370 = vmatprep.subr.mxu0 0.0
        %1371 = vmatpush1.msra.mxu0 0.0
        %1372 = vmatprep.subr.mxu0 0.0
        %1373 = vmatpush1.msra.mxu0 0.0
        %1374 = vmatprep.subr.mxu0 0.0
        %1375 = vmatpush1.msra.mxu0 0.0
        %1376 = vmatprep.subr.mxu0 0.0
        %1377 = vmatpush1.msra.mxu0 0.0
        %1378 = vmatprep.subr.mxu0 0.0
        %1379 = vmatpush1.msra.mxu0 0.0
        %1380 = vmatprep.subr.mxu0 0.0
        %1381 = vmatpush1.msra.mxu0 0.0
        %1382 = vmatprep.subr.mxu0 0.0
        %1383 = vmatpush1.msra.mxu0 0.0
        %1384 = vmatprep.subr.mxu0 0.0
        %1385 = vmatpush1.msra.mxu0 0.0
        %1386 = vmatprep.subr.mxu0 0.0
        %1387 = vmatpush1.msra.mxu0 0.0
        %1388 = vmatprep.subr.mxu0 0.0
        %1389 = vmatpush1.msra.mxu0 0.0
        %1390 = vmatprep.subr.mxu0 %v1275
        %1391 = vmatpush1.msra.mxu0 %v1272
        %1392 = vmatprep.subr.mxu0 0.0
        %1393 = vmatpush2.msra.mxu0 0.0
        %1394 = vmatprep.subr.mxu0 0.0
        %1395 = vmatpush2.msra.mxu0 0.0
        %1396 = vmatprep.subr.mxu0 0.0
        %1397 = vmatpush2.msra.mxu0 0.0
        %1398 = vmatprep.subr.mxu0 0.0
        %1399 = vmatpush2.msra.mxu0 0.0
        %1400 = vmatprep.subr.mxu0 0.0
        %1401 = vmatpush2.msra.mxu0 0.0
        %1402 = vmatprep.subr.mxu0 0.0
        %1403 = vmatpush2.msra.mxu0 0.0
        %1404 = vmatprep.subr.mxu0 0.0
        %1405 = vmatpush2.msra.mxu0 0.0
        %1406 = vmatprep.subr.mxu0 0.0
        %1407 = vmatpush2.msra.mxu0 0.0
        %1408 = vmatprep.subr.mxu0 0.0
        %1409 = vmatpush2.msra.mxu0 0.0
        %1410 = vmatprep.subr.mxu0 0.0
        %1411 = vmatpush2.msra.mxu0 0.0
        %1412 = vmatprep.subr.mxu0 0.0
        %1413 = vmatpush2.msra.mxu0 0.0
        %1414 = vmatprep.subr.mxu0 0.0
        %1415 = vmatpush2.msra.mxu0 0.0
        %1416 = vmatprep.subr.mxu0 0.0
        %1417 = vmatpush2.msra.mxu0 0.0
        %1418 = vmatprep.subr.mxu0 0.0
        %1419 = vmatpush2.msra.mxu0 0.0
        %1420 = vmatprep.subr.mxu0 0.0
        %1421 = vmatpush2.msra.mxu0 0.0
        %1422 = vmatprep.subr.mxu0 0.0
        %1423 = vmatpush2.msra.mxu0 0.0
        %1424 = vmatprep.mubr.f32.mxu0 0.0
        %1425 = vmatmul.mubr.f32.gmra.mxu0 %v1263
        %v1426 = vpop.f32.mrf.mxu0
        %v1427 = vadd.f32 %v1260, %v1426
        %v1428 = vpop.f32.mrf.mxu0
        %v1429 = vadd.f32 %v1260, %v1428
        %1430 = vdwg.mxu0
        %1431 = vmatprep.subr.mxu0 0.0
        %1432 = vmatpush1.msra.mxu0 0.0
        %1433 = vmatprep.subr.mxu0 0.0
        %1434 = vmatpush1.msra.mxu0 0.0
        %1435 = vmatprep.subr.mxu0 0.0
        %1436 = vmatpush1.msra.mxu0 0.0
        %1437 = vmatprep.subr.mxu0 0.0
        %1438 = vmatpush1.msra.mxu0 0.0
        %1439 = vmatprep.subr.mxu0 0.0
        %1440 = vmatpush1.msra.mxu0 0.0
        %1441 = vmatprep.subr.mxu0 0.0
        %1442 = vmatpush1.msra.mxu0 0.0
        %1443 = vmatprep.subr.mxu0 0.0
        %1444 = vmatpush1.msra.mxu0 0.0
        %1445 = vmatprep.subr.mxu0 0.0
        %1446 = vmatpush1.msra.mxu0 0.0
        %1447 = vmatprep.subr.mxu0 0.0
        %1448 = vmatpush1.msra.mxu0 0.0
        %1449 = vmatprep.subr.mxu0 0.0
        %1450 = vmatpush1.msra.mxu0 0.0
        %1451 = vmatprep.subr.mxu0 0.0
        %1452 = vmatpush1.msra.mxu0 0.0
        %1453 = vmatprep.subr.mxu0 0.0
        %1454 = vmatpush1.msra.mxu0 0.0
        %1455 = vmatprep.subr.mxu0 0.0
        %1456 = vmatpush1.msra.mxu0 0.0
        %1457 = vmatprep.subr.mxu0 0.0
        %1458 = vmatpush1.msra.mxu0 0.0
        %1459 = vmatprep.subr.mxu0 0.0
        %1460 = vmatpush1.msra.mxu0 0.0
        %1461 = vmatprep.subr.mxu0 %v1281
        %1462 = vmatpush1.msra.mxu0 %v1278
        %1463 = vmatprep.subr.mxu0 0.0
        %1464 = vmatpush2.msra.mxu0 0.0
        %1465 = vmatprep.subr.mxu0 0.0
        %1466 = vmatpush2.msra.mxu0 0.0
        %1467 = vmatprep.subr.mxu0 0.0
        %1468 = vmatpush2.msra.mxu0 0.0
        %1469 = vmatprep.subr.mxu0 0.0
        %1470 = vmatpush2.msra.mxu0 0.0
        %1471 = vmatprep.subr.mxu0 0.0
        %1472 = vmatpush2.msra.mxu0 0.0
        %1473 = vmatprep.subr.mxu0 0.0
        %1474 = vmatpush2.msra.mxu0 0.0
        %1475 = vmatprep.subr.mxu0 0.0
        %1476 = vmatpush2.msra.mxu0 0.0
        %1477 = vmatprep.subr.mxu0 0.0
        %1478 = vmatpush2.msra.mxu0 0.0
        %1479 = vmatprep.subr.mxu0 0.0
        %1480 = vmatpush2.msra.mxu0 0.0
        %1481 = vmatprep.subr.mxu0 0.0
        %1482 = vmatpush2.msra.mxu0 0.0
        %1483 = vmatprep.subr.mxu0 0.0
        %1484 = vmatpush2.msra.mxu0 0.0
        %1485 = vmatprep.subr.mxu0 0.0
        %1486 = vmatpush2.msra.mxu0 0.0
        %1487 = vmatprep.subr.mxu0 0.0
        %1488 = vmatpush2.msra.mxu0 0.0
        %1489 = vmatprep.subr.mxu0 0.0
        %1490 = vmatpush2.msra.mxu0 0.0
        %1491 = vmatprep.subr.mxu0 0.0
        %1492 = vmatpush2.msra.mxu0 0.0
        %1493 = vmatprep.subr.mxu0 0.0
        %1494 = vmatpush2.msra.mxu0 0.0
        %1495 = vmatprep.mubr.f32.mxu0 0.0
        %1496 = vmatmul.mubr.f32.gmra.mxu0 %v1263
        %v1497 = vpop.f32.mrf.mxu0
        %v1498 = vadd.f32 %v1260, %v1497
        %v1499 = vpop.f32.mrf.mxu0
        %v1500 = vadd.f32 %v1260, %v1499
        %1501 = vdwg.mxu0
        %1502 = vmatprep.subr.mxu0 0.0
        %1503 = vmatpush1.msra.mxu0 0.0
        %1504 = vmatprep.subr.mxu0 0.0
        %1505 = vmatpush1.msra.mxu0 0.0
        %1506 = vmatprep.subr.mxu0 0.0
        %1507 = vmatpush1.msra.mxu0 0.0
        %1508 = vmatprep.subr.mxu0 0.0
        %1509 = vmatpush1.msra.mxu0 0.0
        %1510 = vmatprep.subr.mxu0 0.0
        %1511 = vmatpush1.msra.mxu0 0.0
        %1512 = vmatprep.subr.mxu0 0.0
        %1513 = vmatpush1.msra.mxu0 0.0
        %1514 = vmatprep.subr.mxu0 0.0
        %1515 = vmatpush1.msra.mxu0 0.0
        %1516 = vmatprep.subr.mxu0 0.0
        %1517 = vmatpush1.msra.mxu0 0.0
        %1518 = vmatprep.subr.mxu0 0.0
        %1519 = vmatpush1.msra.mxu0 0.0
        %1520 = vmatprep.subr.mxu0 0.0
        %1521 = vmatpush1.msra.mxu0 0.0
        %1522 = vmatprep.subr.mxu0 0.0
        %1523 = vmatpush1.msra.mxu0 0.0
        %1524 = vmatprep.subr.mxu0 0.0
        %1525 = vmatpush1.msra.mxu0 0.0
        %1526 = vmatprep.subr.mxu0 0.0
        %1527 = vmatpush1.msra.mxu0 0.0
        %1528 = vmatprep.subr.mxu0 0.0
        %1529 = vmatpush1.msra.mxu0 0.0
        %1530 = vmatprep.subr.mxu0 0.0
        %1531 = vmatpush1.msra.mxu0 0.0
        %1532 = vmatprep.subr.mxu0 %v1287
        %1533 = vmatpush1.msra.mxu0 %v1284
        %1534 = vmatprep.subr.mxu0 0.0
        %1535 = vmatpush2.msra.mxu0 0.0
        %1536 = vmatprep.subr.mxu0 0.0
        %1537 = vmatpush2.msra.mxu0 0.0
        %1538 = vmatprep.subr.mxu0 0.0
        %1539 = vmatpush2.msra.mxu0 0.0
        %1540 = vmatprep.subr.mxu0 0.0
        %1541 = vmatpush2.msra.mxu0 0.0
        %1542 = vmatprep.subr.mxu0 0.0
        %1543 = vmatpush2.msra.mxu0 0.0
        %1544 = vmatprep.subr.mxu0 0.0
        %1545 = vmatpush2.msra.mxu0 0.0
        %1546 = vmatprep.subr.mxu0 0.0
        %1547 = vmatpush2.msra.mxu0 0.0
        %1548 = vmatprep.subr.mxu0 0.0
        %1549 = vmatpush2.msra.mxu0 0.0
        %1550 = vmatprep.subr.mxu0 0.0
        %1551 = vmatpush2.msra.mxu0 0.0
        %1552 = vmatprep.subr.mxu0 0.0
        %1553 = vmatpush2.msra.mxu0 0.0
        %1554 = vmatprep.subr.mxu0 0.0
        %1555 = vmatpush2.msra.mxu0 0.0
        %1556 = vmatprep.subr.mxu0 0.0
        %1557 = vmatpush2.msra.mxu0 0.0
        %1558 = vmatprep.subr.mxu0 0.0
        %1559 = vmatpush2.msra.mxu0 0.0
        %1560 = vmatprep.subr.mxu0 0.0
        %1561 = vmatpush2.msra.mxu0 0.0
        %1562 = vmatprep.subr.mxu0 0.0
        %1563 = vmatpush2.msra.mxu0 0.0
        %1564 = vmatprep.subr.mxu0 0.0
        %1565 = vmatpush2.msra.mxu0 0.0
        %1566 = vmatprep.mubr.f32.mxu0 0.0
        %1567 = vmatmul.mubr.f32.gmra.mxu0 %v1263
        %v1568 = vpop.f32.mrf.mxu0
        %v1569 = vadd.f32 %v1260, %v1568
        %v1570 = vpop.f32.mrf.mxu0
        %v1571 = vadd.f32 %v1260, %v1570
        %1572 = vdwg.mxu0
        %v1573 = vmul.f32 %v1356, 0.1
        %v1574 = vmul.f32 %v1358, 0.1
        %v1575 = vmul.f32 %v1427, 0.1
        %v1576 = vmul.f32 %v1429, 0.1
        %v1577 = vmul.f32 %v1498, 0.1
        %v1578 = vmul.f32 %v1500, 0.1
        %v1579 = vmul.f32 %v1569, 0.1
        %v1580 = vmul.f32 %v1571, 0.1
        %v1581 = vmax.f32 %v1356, %v1573
        %v1582 = vmax.f32 %v1358, %v1574
        %v1583 = vmax.f32 %v1427, %v1575
        %v1584 = vmax.f32 %v1429, %v1576
        %v1585 = vmax.f32 %v1498, %v1577
        %v1586 = vmax.f32 %v1500, %v1578
        %v1587 = vmax.f32 %v1569, %v1579
        %v1588 = vmax.f32 %v1571, %v1580
        %v1589 = vmul.f32 %v1581, 0.1
        %v1590 = vmul.f32 %v1582, 0.1
        %v1591 = vmul.f32 %v1583, 0.1
        %v1592 = vmul.f32 %v1584, 0.1
        %v1593 = vmul.f32 %v1585, 0.1
        %v1594 = vmul.f32 %v1586, 0.1
        %v1595 = vmul.f32 %v1587, 0.1
        %v1596 = vmul.f32 %v1588, 0.1
        %v1597 = vmax.f32 %v1581, %v1589
        %v1598 = vmax.f32 %v1582, %v1590
        %v1599 = vmax.f32 %v1583, %v1591
        %v1600 = vmax.f32 %v1584, %v1592
        %v1601 = vmax.f32 %v1585, %v1593
        %v1602 = vmax.f32 %v1586, %v1594
        %v1603 = vmax.f32 %v1587, %v1595
        %v1604 = vmax.f32 %v1588, %v1596
        %1605 = vst [vmem:[#allocation2] sm:$0x1] %v1597
        %1606 = vst [vmem:[#allocation2 + $0x1] sm:$0x1] %v1598
        %1607 = vst [vmem:[#allocation2 + $0x2] sm:$0x1] %v1599
        %1608 = vst [vmem:[#allocation2 + $0x3] sm:$0x1] %v1600
        %1609 = vst [vmem:[#allocation2 + $0x4] sm:$0x1] %v1601
        %1610 = vst [vmem:[#allocation2 + $0x5] sm:$0x1] %v1602
        %1611 = vst [vmem:[#allocation2 + $0x6] sm:$0x1] %v1603
        %1612 = vst [vmem:[#allocation2 + $0x7] sm:$0x1] %v1604
        %v1613 = vld [vmem:[#allocation2] sm:$0xff]
        %v1614 = vld [vmem:[#allocation6] sm:$0xff]
        %v1615 = vld [vmem:[#allocation6 + $0x8] sm:$0xff]
        %v1616 = vld [vmem:[#allocation6 + $0x10] sm:$0xff]
        %v1617 = vld [vmem:[#allocation6 + $0x18] sm:$0xff]
        %v1618 = vld [vmem:[#allocation6 + $0x20] sm:$0xff]
        %v1619 = vld [vmem:[#allocation6 + $0x28] sm:$0xff]
        %v1620 = vld [vmem:[#allocation6 + $0x30] sm:$0xff]
        %v1621 = vld [vmem:[#allocation6 + $0x38] sm:$0xff]
        %v1622 = vld [vmem:[#allocation6 + $0x40] sm:$0xff]
        %v1623 = vld [vmem:[#allocation6 + $0x48] sm:$0xff]
        %v1624 = vld [vmem:[#allocation6 + $0x50] sm:$0xff]
        %v1625 = vld [vmem:[#allocation6 + $0x58] sm:$0xff]
        %v1626 = vld [vmem:[#allocation6 + $0x60] sm:$0xff]
        %v1627 = vld [vmem:[#allocation6 + $0x68] sm:$0xff]
        %v1628 = vld [vmem:[#allocation6 + $0x70] sm:$0xff]
        %v1629 = vld [vmem:[#allocation6 + $0x78] sm:$0xff]
        %v1630 = vld [vmem:[%s3] sm:$0x1]
        %v1632 = vlaneseq
        %v1633 = vshrl.u32 %v1632, 7
        %v1634 = vsub.s32 0, %v1633
        %v1635 = vrot.slane %v1630, %v1634
        %1637 = vmatprep.subr.mxu0 0.0
        %1638 = vmatpush1.msra.mxu0 %v1629
        %1639 = vmatprep.subr.mxu0 0.0
        %1640 = vmatpush1.msra.mxu0 %v1628
        %1641 = vmatprep.subr.mxu0 0.0
        %1642 = vmatpush1.msra.mxu0 %v1627
        %1643 = vmatprep.subr.mxu0 0.0
        %1644 = vmatpush1.msra.mxu0 %v1626
        %1645 = vmatprep.subr.mxu0 0.0
        %1646 = vmatpush1.msra.mxu0 %v1625
        %1647 = vmatprep.subr.mxu0 0.0
        %1648 = vmatpush1.msra.mxu0 %v1624
        %1649 = vmatprep.subr.mxu0 0.0
        %1650 = vmatpush1.msra.mxu0 %v1623
        %1651 = vmatprep.subr.mxu0 0.0
        %1652 = vmatpush1.msra.mxu0 %v1622
        %1653 = vmatprep.subr.mxu0 0.0
        %1654 = vmatpush1.msra.mxu0 %v1621
        %1655 = vmatprep.subr.mxu0 0.0
        %1656 = vmatpush1.msra.mxu0 %v1620
        %1657 = vmatprep.subr.mxu0 0.0
        %1658 = vmatpush1.msra.mxu0 %v1619
        %1659 = vmatprep.subr.mxu0 0.0
        %1660 = vmatpush1.msra.mxu0 %v1618
        %1661 = vmatprep.subr.mxu0 0.0
        %1662 = vmatpush1.msra.mxu0 %v1617
        %1663 = vmatprep.subr.mxu0 0.0
        %1664 = vmatpush1.msra.mxu0 %v1616
        %1665 = vmatprep.subr.mxu0 0.0
        %1666 = vmatpush1.msra.mxu0 %v1615
        %1667 = vmatprep.subr.mxu0 0.0
        %1668 = vmatpush1.msra.mxu0 %v1614
        %1669 = vmatprep.subr.mxu0 0.0
        %1670 = vmatpush2.msra.mxu0 0.0
        %1671 = vmatprep.subr.mxu0 0.0
        %1672 = vmatpush2.msra.mxu0 0.0
        %1673 = vmatprep.subr.mxu0 0.0
        %1674 = vmatpush2.msra.mxu0 0.0
        %1675 = vmatprep.subr.mxu0 0.0
        %1676 = vmatpush2.msra.mxu0 0.0
        %1677 = vmatprep.subr.mxu0 0.0
        %1678 = vmatpush2.msra.mxu0 0.0
        %1679 = vmatprep.subr.mxu0 0.0
        %1680 = vmatpush2.msra.mxu0 0.0
        %1681 = vmatprep.subr.mxu0 0.0
        %1682 = vmatpush2.msra.mxu0 0.0
        %1683 = vmatprep.subr.mxu0 0.0
        %1684 = vmatpush2.msra.mxu0 0.0
        %1685 = vmatprep.subr.mxu0 0.0
        %1686 = vmatpush2.msra.mxu0 0.0
        %1687 = vmatprep.subr.mxu0 0.0
        %1688 = vmatpush2.msra.mxu0 0.0
        %1689 = vmatprep.subr.mxu0 0.0
        %1690 = vmatpush2.msra.mxu0 0.0
        %1691 = vmatprep.subr.mxu0 0.0
        %1692 = vmatpush2.msra.mxu0 0.0
        %1693 = vmatprep.subr.mxu0 0.0
        %1694 = vmatpush2.msra.mxu0 0.0
        %1695 = vmatprep.subr.mxu0 0.0
        %1696 = vmatpush2.msra.mxu0 0.0
        %1697 = vmatprep.subr.mxu0 0.0
        %1698 = vmatpush2.msra.mxu0 0.0
        %1699 = vmatprep.subr.mxu0 0.0
        %1700 = vmatpush2.msra.mxu0 0.0
        %1701 = vmatprep.mubr.f32.mxu0 0.0
        %1702 = vmatmul.mubr.f32.gmra.mxu0 %v1613
        %v1703 = vpop.f32.mrf.mxu0
        %v1704 = vadd.f32 %v1635, %v1703
        %v1705 = vpop.f32.mrf.mxu0
        %1706 = vdwg.mxu0
        %1707 = vst [vmem:[%s230] sm:$0xff] %v1704
        %s1708 = sand.u32 %s119, 1
        %s1709 = scalar_lea.sflag [#allocation5], %s1708
        %s1710 = sand.u32 %s119, 1
        %s1711 = smul.addr %s1710, 8
        %s1712 = scalar_lea.vmem [#allocation8], %s1711
        // Predicated region
        $region45: #{tpu_custom_call.1} parent=35 // pred_check
          %p1713 = pneg %p129
        $region46: #{tpu_custom_call.1} parent=35 // pred_check_branch
          %1715 = sbr.rel (%p1713) target = $region48
        $region47: #{tpu_custom_call.1} parent=35 // pred_region
          %s1717 = ssub.s32 128, 128
          %1718 = vsyncadd %s1709, %s1717
          %s1719 = smul.addr %s22, 128
          %s1720 = scalar_lea.hbm %s4, %s1719
          %s1722 = sshll.u32 %s1712, 4
          %s1723 = int_to_ptr.vmem [resolvable:$true] %s1722
          %1725 = dma.vmem_to_hbm [thread:$0]  %s1723, 128, %s1720, %s1709
        $region48: #{tpu_custom_call.1} parent=35 // pred_fallthru
          _
      $region36: #{tpu_custom_call.1} parent=5 // pred_fallthru
        _
      %p1726 = scmp.le.s32.totalorder 2, %s17
      // Predicated region
      $region49: #{tpu_custom_call.1} parent=5 // pred_check
        %p1727 = pneg %p1726
      $region50: #{tpu_custom_call.1} parent=5 // pred_check_branch
        %1729 = sbr.rel (%p1727) target = $region52
      $region51: #{tpu_custom_call.1} parent=5 // pred_region
        %s1730 = ssub.s32 %s17, 2
        // Predicated region
        $region53: #{tpu_custom_call.1} parent=51 // pred_check
          %p1731 = pneg %p135
        $region54: #{tpu_custom_call.1} parent=51 // pred_check_branch
          %1733 = sbr.rel (%p1731) target = $region56
        $region55: #{tpu_custom_call.1} parent=51 // pred_region
          %s1734 = sand.u32 %s120, 1
          %s1735 = scalar_lea.sflag [#allocation5], %s1734
          %s1736 = sand.u32 %s120, 1
          %s1737 = smul.addr %s1736, 8
          %s1738 = scalar_lea.vmem [#allocation8], %s1737
          %1739 = dma.done %s1735, 128
        $region56: #{tpu_custom_call.1} parent=51 // pred_fallthru
          _
      $region52: #{tpu_custom_call.1} parent=5 // pred_fallthru
        _
    $region6: #{tpu_custom_call.1} parent=1 // loop_footer
      %s21 = sadd.s32 1, %s17
    $region7: #{tpu_custom_call.1} parent=1 // loop_footer_branch
      %16 = sbr.rel target = $region3
    $region8: #{tpu_custom_call.1} parent=1 // loop_exit
      _
    %1740 = vsyncpa [#allocation4], 1
    %s1741 = scalar_lea.sflag [#allocation4], 1
    %1742 = vsyncpa %s1741, 1
    %1743 = vsyncpa [#allocation7], 1
    %1744 = vsyncpa [#allocation5], 1
    %s1745 = scalar_lea.sflag [#allocation5], 1
    %1746 = vsyncpa %s1745, 1

// kernel: tpu_custom_call.1
$region0: #{tpu_custom_call.1}
  #allocation0 [shape = 'u32[]', space=smem, size = 0x4, offset = 0x4, fixed_abs, tag = 'smem constant byte address 0x4 - core index']
  #allocation1 [shape = 'u32[144,128]{1,0:T(1,128)}', space=vmem, size = 0x12000, scoped, tag = 'internal scratch']
  #allocation2 [shape = 'f32[8,128]{1,0:T(8,128)}', space=vmem, size = 0x1000, scoped, tag = 'scratch operand']
  %s0 = inlined_call_operand.hbm [shape: f32[20,3072], index: 0, kind: input, shape index: {}]
  %s1 = inlined_call_operand.vmem [shape: f32[29,21], index: 1, kind: input, shape index: {}]
  %s2 = inlined_call_operand.hbm [shape: f32[128,128], index: 2, kind: input, shape index: {}]
  %s3 = inlined_call_operand.vmem [shape: f32[1,128], index: 3, kind: input, shape index: {}]
  %s4 = inlined_call_operand.hbm [shape: f32[24,128], index: 4, kind: output, shape index: {}]
  %s5 = sld [smem:[#allocation0]]
  $region57: #{tpu_custom_call.1} parent=0
    _
  %s7 = ssub.s32 1, %s5
  %s8 = scalar_select 0, %s7, %s5
  $region1: #{tpu_custom_call.1} parent=0
    #allocation3 [shape = 'u8[196608]{0}', space=vmem, size = 0x30000, scoped, tag = 'input window, operand 0']
    #allocation4 [shape = 's32[2]{0}', space=sflag, size = 0x8, scoped, tag = 'scoped memory for tpu_custom_call.1']
    #allocation5 [shape = 's32[2]{0}', space=sflag, size = 0x8, scoped, tag = 'scoped memory for tpu_custom_call.1']
    #allocation6 [shape = 'u8[65536]{0}', space=vmem, size = 0x10000, scoped, tag = 'input window, operand 2, single buffered']
    #allocation7 [shape = 's32[1]{0}', space=sflag, size = 0x4, scoped, tag = 'scoped memory for tpu_custom_call.1']
    #allocation8 [shape = 'u8[8192]{0}', space=vmem, size = 0x2000, scoped, tag = 'output window, operand 0']
    %9 = vsyncpa [#allocation4], 0
    %s10 = scalar_lea.sflag [#allocation4], 1
    %11 = vsyncpa %s10, 0
    %12 = vsyncpa [#allocation7], 0
    %13 = vsyncpa [#allocation5], 0
    %s14 = scalar_lea.sflag [#allocation5], 1
    %15 = vsyncpa %s14, 0
    loop: start=0, step=1, limit=5
    $region2: #{tpu_custom_call.1} parent=1 // loop_pre_header
      _
    $region3: #{tpu_custom_call.1} parent=1 // loop_header
      %s17 = sphi 0, %s21
      %p18 = scmp.ge.s32.totalorder %s17, 5
      %s27 = sphi 0, %s29
      %s30 = sphi 0, %s27
      %s31 = sphi 0, %s30
      %s47 = sphi 0, %s31
      %s51 = sphi 0, %s51
      %s53 = sphi 0, %s51
      %s54 = sphi 0, %s53
      %s68 = sphi 0, %s54
      %s72 = sphi 0, %s72
      %s74 = sphi 0, %s72
      %s75 = sphi 0, %s74
      %s89 = sphi 0, %s75
      %s93 = sphi 0, %s93
      %s95 = sphi 0, %s93
      %s96 = sphi 0, %s95
      %s110 = sphi 0, %s96
      %s116 = sphi 0, %s118
      %s119 = sphi 0, %s116
      %s120 = sphi 0, %s119
      %s136 = sphi 0, %s120
    $region4: #{tpu_custom_call.1} parent=1 // loop_header_branch
      %20 = sbr.rel (%p18) target = $region8
    $region5: #{tpu_custom_call.1} parent=1 // loop_body
      %s22 = ssub.s32 %s17, 1
      %s23 = ssub.s32 %s17, 2
      %s24 = sadd.s32 %s17, 1
      %s25 = ssub.s32 %s17, %s24
      %p26 = scmp.eq.s32.totalorder %s25, 0
      %s28 = sadd.s32 %s27, 1
      %s29 = scalar_select %p26, %s27, %s28
      %p32 = pneg %p26
      %p33 = scmp.eq.s32.totalorder %s17, 2
      %p34 = por %p32, %p33
      %p35 = scmp.ne.s32.totalorder %s27, %s30
      %p36 = scmp.eq.s32.totalorder %s17, 0
      %p37 = por %p35, %p36
      %p38 = scmp.ne.s32.totalorder %s27, %s30
      %p39 = scmp.eq.s32.totalorder %s22, 2
      %p40 = por %p38, %p39
      %p41 = scmp.ne.s32.totalorder %s30, %s31
      %p42 = scmp.eq.s32.totalorder %s22, 0
      %p43 = por %p41, %p42
      %p44 = scmp.ne.s32.totalorder %s30, %s31
      %p45 = scmp.eq.s32.totalorder %s23, 2
      %p46 = por %p44, %p45
      %p48 = scmp.ne.s32.totalorder %s31, %s47
      %p49 = scmp.eq.s32.totalorder %s23, 0
      %p50 = por %p48, %p49
      %s52 = sadd.s32 %s51, 1
      %p55 = scmp.eq.s32.totalorder %s17, 2
      %p56 = scmp.ne.s32.totalorder %s51, %s53
      %p57 = scmp.eq.s32.totalorder %s17, 0
      %p58 = por %p56, %p57
      %p59 = scmp.ne.s32.totalorder %s51, %s53
      %p60 = scmp.eq.s32.totalorder %s22, 2
      %p61 = por %p59, %p60
      %p62 = scmp.ne.s32.totalorder %s53, %s54
      %p63 = scmp.eq.s32.totalorder %s22, 0
      %p64 = por %p62, %p63
      %p65 = scmp.ne.s32.totalorder %s53, %s54
      %p66 = scmp.eq.s32.totalorder %s23, 2
      %p67 = por %p65, %p66
      %p69 = scmp.ne.s32.totalorder %s54, %s68
      %p70 = scmp.eq.s32.totalorder %s23, 0
      %p71 = por %p69, %p70
      %s73 = sadd.s32 %s72, 1
      %p76 = scmp.eq.s32.totalorder %s17, 2
      %p77 = scmp.ne.s32.totalorder %s72, %s74
      %p78 = scmp.eq.s32.totalorder %s17, 0
      %p79 = por %p77, %p78
      %p80 = scmp.ne.s32.totalorder %s72, %s74
      %p81 = scmp.eq.s32.totalorder %s22, 2
      %p82 = por %p80, %p81
      %p83 = scmp.ne.s32.totalorder %s74, %s75
      %p84 = scmp.eq.s32.totalorder %s22, 0
      %p85 = por %p83, %p84
      %p86 = scmp.ne.s32.totalorder %s74, %s75
      %p87 = scmp.eq.s32.totalorder %s23, 2
      %p88 = por %p86, %p87
      %p90 = scmp.ne.s32.totalorder %s75, %s89
      %p91 = scmp.eq.s32.totalorder %s23, 0
      %p92 = por %p90, %p91
      %s94 = sadd.s32 %s93, 1
      %p97 = scmp.eq.s32.totalorder %s17, 2
      %p98 = scmp.ne.s32.totalorder %s93, %s95
      %p99 = scmp.eq.s32.totalorder %s17, 0
      %p100 = por %p98, %p99
      %p101 = scmp.ne.s32.totalorder %s93, %s95
      %p102 = scmp.eq.s32.totalorder %s22, 2
      %p103 = por %p101, %p102
      %p104 = scmp.ne.s32.totalorder %s95, %s96
      %p105 = scmp.eq.s32.totalorder %s22, 0
      %p106 = por %p104, %p105
      %p107 = scmp.ne.s32.totalorder %s95, %s96
      %p108 = scmp.eq.s32.totalorder %s23, 2
      %p109 = por %p107, %p108
      %p111 = scmp.ne.s32.totalorder %s96, %s110
      %p112 = scmp.eq.s32.totalorder %s23, 0
      %p113 = por %p111, %p112
      %s114 = ssub.s32 %s17, %s24
      %p115 = scmp.eq.s32.totalorder %s114, 0
      %s117 = sadd.s32 %s116, 1
      %s118 = scalar_select %p115, %s116, %s117
      %p121 = pneg %p115
      %p122 = scmp.eq.s32.totalorder %s17, 2
      %p123 = por %p121, %p122
      %p124 = scmp.ne.s32.totalorder %s116, %s119
      %p125 = scmp.eq.s32.totalorder %s17, 0
      %p126 = por %p124, %p125
      %p127 = scmp.ne.s32.totalorder %s116, %s119
      %p128 = scmp.eq.s32.totalorder %s22, 2
      %p129 = por %p127, %p128
      %p130 = scmp.ne.s32.totalorder %s119, %s120
      %p131 = scmp.eq.s32.totalorder %s22, 0
      %p132 = por %p130, %p131
      %p133 = scmp.ne.s32.totalorder %s119, %s120
      %p134 = scmp.eq.s32.totalorder %s23, 2
      %p135 = por %p133, %p134
      %p137 = scmp.ne.s32.totalorder %s120, %s136
      %p138 = scmp.eq.s32.totalorder %s23, 0
      %p139 = por %p137, %p138
      %p140 = scmp.le.s32.totalorder 1, %s17
      %p141 = scmp.lt.s32.totalorder %s17, 4
      %p142 = pnand %p140, %p141
      %p143 = pneg %p142
      // Predicated region
      $region9: #{tpu_custom_call.1} parent=5 // pred_check
        _
      $region10: #{tpu_custom_call.1} parent=5 // pred_check_branch
        %145 = sbr.rel (%p142) target = $region12
      $region11: #{tpu_custom_call.1} parent=5 // pred_region
        %s146 = ssub.s32 %s17, 1
        // Predicated region
        $region13: #{tpu_custom_call.1} parent=11 // pred_check
          %p147 = pneg %p64
        $region14: #{tpu_custom_call.1} parent=11 // pred_check_branch
          %149 = sbr.rel (%p147) target = $region16
        $region15: #{tpu_custom_call.1} parent=11 // pred_region
          _
        $region16: #{tpu_custom_call.1} parent=11 // pred_fallthru
          _
        // Predicated region
        $region17: #{tpu_custom_call.1} parent=11 // pred_check
          %p150 = pneg %p85
        $region18: #{tpu_custom_call.1} parent=11 // pred_check_branch
          %152 = sbr.rel (%p150) target = $region20
        $region19: #{tpu_custom_call.1} parent=11 // pred_region
          %s154 = ssub.s32 2048, 2048
          %155 = vsyncadd [#allocation7], %s154
          %s156 = sshll.u32 [#allocation6], 4
          %s157 = int_to_ptr.vmem [resolvable:$true] %s156
          %162 = dma.hbm_to_vmem [thread:$0]  %s2, 2048, %s157, [#allocation7], 128, 128, 8
        $region20: #{tpu_custom_call.1} parent=11 // pred_fallthru
          _
        // Predicated region
        $region21: #{tpu_custom_call.1} parent=11 // pred_check
          %p163 = pneg %p106
        $region22: #{tpu_custom_call.1} parent=11 // pred_check_branch
          %165 = sbr.rel (%p163) target = $region24
        $region23: #{tpu_custom_call.1} parent=11 // pred_region
          _
        $region24: #{tpu_custom_call.1} parent=11 // pred_fallthru
          _
      $region12: #{tpu_custom_call.1} parent=5 // pred_fallthru
        _
      %p166 = scmp.lt.s32.totalorder %s17, 3
      // Predicated region
      $region25: #{tpu_custom_call.1} parent=5 // pred_check
        %p167 = pneg %p166
      $region26: #{tpu_custom_call.1} parent=5 // pred_check_branch
        %169 = sbr.rel (%p167) target = $region28
      $region27: #{tpu_custom_call.1} parent=5 // pred_region
        // Predicated region
        $region29: #{tpu_custom_call.1} parent=27 // pred_check
          %p170 = pneg %p37
        $region30: #{tpu_custom_call.1} parent=27 // pred_check_branch
          %172 = sbr.rel (%p170) target = $region32
        $region31: #{tpu_custom_call.1} parent=27 // pred_region
          %s173 = sand.u32 %s27, 1
          %s174 = scalar_lea.sflag [#allocation4], %s173
          %s175 = sand.u32 %s27, 1
          %s176 = smul.addr %s175, 192
          %s177 = scalar_lea.vmem [#allocation3], %s176
          %s178 = smul.u32 8, %s17
          %s180 = ssub.s32 3072, 3072
          %181 = vsyncadd %s174, %s180
          %s182 = smul.addr %s178, 128
          %s183 = scalar_lea.hbm %s0, %s182
          %s184 = sshll.u32 %s177, 4
          %s185 = int_to_ptr.vmem [resolvable:$true] %s184
          %190 = dma.hbm_to_vmem [thread:$0]  %s183, 3072, %s185, %s174, 3072, 1024, 64
        $region32: #{tpu_custom_call.1} parent=27 // pred_fallthru
          _
      $region28: #{tpu_custom_call.1} parent=5 // pred_fallthru
        _
      %p191 = scmp.le.s32.totalorder 1, %s17
      %p192 = scmp.lt.s32.totalorder %s17, 4
      %p193 = pnand %p191, %p192
      %p194 = pneg %p193
      // Predicated region
      $region33: #{tpu_custom_call.1} parent=5 // pred_check
        _
      $region34: #{tpu_custom_call.1} parent=5 // pred_check_branch
        %196 = sbr.rel (%p193) target = $region36
      $region35: #{tpu_custom_call.1} parent=5 // pred_region
        %s197 = ssub.s32 %s17, 1
        %s198 = sand.u32 %s30, 1
        %s199 = scalar_lea.sflag [#allocation4], %s198
        %s200 = sand.u32 %s30, 1
        %s201 = smul.addr %s200, 192
        %s202 = scalar_lea.vmem [#allocation3], %s201
        // Predicated region
        $region37: #{tpu_custom_call.1} parent=35 // pred_check
          %p203 = pneg %p43
        $region38: #{tpu_custom_call.1} parent=35 // pred_check_branch
          %205 = sbr.rel (%p203) target = $region40
        $region39: #{tpu_custom_call.1} parent=35 // pred_region
          %206 = dma.done %s199, 3072
        $region40: #{tpu_custom_call.1} parent=35 // pred_fallthru
          _
        // Predicated region
        $region41: #{tpu_custom_call.1} parent=35 // pred_check
          %p207 = pneg %p85
        $region42: #{tpu_custom_call.1} parent=35 // pred_check_branch
          %209 = sbr.rel (%p207) target = $region44
        $region43: #{tpu_custom_call.1} parent=35 // pred_region
          %210 = dma.done [#allocation7], 2048
        $region44: #{tpu_custom_call.1} parent=35 // pred_fallthru
          _
        %s211 = sand.u32 %s30, 1
        %s212 = scalar_lea.sflag [#allocation4], %s211
        %s213 = sand.u32 %s30, 1
        %s214 = smul.addr %s213, 192
        %s215 = scalar_lea.vmem [#allocation3], %s214
        %p216 = pneg %p43
        %p217 = pneg %p40
        %p218 = pneg %p64
        %p219 = pneg %p61
        %p220 = pneg %p85
        %p221 = pneg %p82
        %p222 = pneg %p106
        %p223 = pneg %p103
        %p224 = pneg %p132
        %p225 = pneg %p129
        %s226 = sand.u32 %s119, 1
        %s227 = scalar_lea.sflag [#allocation5], %s226
        %s228 = sand.u32 %s119, 1
        %s229 = smul.addr %s228, 8
        %s230 = scalar_lea.vmem [#allocation8], %s229
        %s231 = smul.u32 8, %s22
        %v232 = vld [vmem:[%s1] sm:$0xff]
        %v233 = vld [vmem:[%s1 + $0x8] sm:$0xff]
        %v234 = vld [vmem:[%s1 + $0x10] sm:$0xff]
        %v235 = vld [vmem:[%s1 + $0x18] sm:$0xf]
        %v236 = vld [vmem:[%s1 + $0x1c] sm:$0x1]
        %v237 = vld [vmem:[%s202] sm:$0xff]
        %v238 = vld [vmem:[%s202 + $0x8] sm:$0xff]
        %v239 = vld [vmem:[%s202 + $0x10] sm:$0xff]
        %v240 = vld [vmem:[%s202 + $0x18] sm:$0xff]
        %v241 = vld [vmem:[%s202 + $0x20] sm:$0xff]
        %v242 = vld [vmem:[%s202 + $0x28] sm:$0xff]
        %v243 = vld [vmem:[%s202 + $0x30] sm:$0xff]
        %v244 = vld [vmem:[%s202 + $0x38] sm:$0xff]
        %v245 = vld [vmem:[%s202 + $0x40] sm:$0xff]
        %v246 = vld [vmem:[%s202 + $0x48] sm:$0xff]
        %v247 = vld [vmem:[%s202 + $0x50] sm:$0xff]
        %v248 = vld [vmem:[%s202 + $0x58] sm:$0xff]
        %v249 = vld [vmem:[%s202 + $0x60] sm:$0xff]
        %v250 = vld [vmem:[%s202 + $0x68] sm:$0xff]
        %v251 = vld [vmem:[%s202 + $0x70] sm:$0xff]
        %v252 = vld [vmem:[%s202 + $0x78] sm:$0xff]
        %v253 = vld [vmem:[%s202 + $0x80] sm:$0xf]
        %v254 = vld [vmem:[%s202 + $0x88] sm:$0xf]
        %v255 = vld [vmem:[%s202 + $0x90] sm:$0xf]
        %v256 = vld [vmem:[%s202 + $0x98] sm:$0xf]
        %v257 = vld [vmem:[%s202 + $0xa0] sm:$0xf]
        %v258 = vld [vmem:[%s202 + $0xa8] sm:$0xf]
        %v259 = vld [vmem:[%s202 + $0xb0] sm:$0xf]
        %v260 = vld [vmem:[%s202 + $0xb8] sm:$0xf]
        %262 = vset.pattern.permute.xlu0 20
        %263 = vperm.xlu0 %262, %v232
        %v264 = vpop.permute.xlu0 %263
        %267 = vset.pattern.permute.xlu0 20
        %268 = vperm.xlu0 %267, %v233
        %v269 = vpop.permute.xlu0 %268
        %vm271 = vcmask 162816
        %v272 = vsel %vm271, %v232, 0
        %v274 = vsel %vm271, %v233, 0
        %vm276 = vcmask 1043456
        %v278 = vsel %vm276, %v253, 0
        %v281 = vsel %vm276, %v254, 0
        %v284 = vsel %vm276, %v255, 0
        %v287 = vsel %vm276, %v256, 0
        %v290 = vsel %vm276, %v257, 0
        %v293 = vsel %vm276, %v258, 0
        %v296 = vsel %vm276, %v259, 0
        %v299 = vsel %vm276, %v260, 0
        %301 = vmatprep.subr.mxu0 0.0
        %302 = vmatpush1.msra.mxu0 0.0
        %303 = vmatprep.subr.mxu0 0.0
        %304 = vmatpush1.msra.mxu0 0.0
        %305 = vmatprep.subr.mxu0 0.0
        %306 = vmatpush1.msra.mxu0 0.0
        %307 = vmatprep.subr.mxu0 0.0
        %308 = vmatpush1.msra.mxu0 0.0
        %309 = vmatprep.subr.mxu0 0.0
        %310 = vmatpush1.msra.mxu0 0.0
        %311 = vmatprep.subr.mxu0 0.0
        %312 = vmatpush1.msra.mxu0 0.0
        %313 = vmatprep.subr.mxu0 0.0
        %314 = vmatpush1.msra.mxu0 0.0
        %315 = vmatprep.subr.mxu0 0.0
        %316 = vmatpush1.msra.mxu0 0.0
        %317 = vmatprep.subr.mxu0 0.0
        %318 = vmatpush1.msra.mxu0 0.0
        %319 = vmatprep.subr.mxu0 0.0
        %320 = vmatpush1.msra.mxu0 0.0
        %321 = vmatprep.subr.mxu0 0.0
        %322 = vmatpush1.msra.mxu0 0.0
        %323 = vmatprep.subr.mxu0 0.0
        %324 = vmatpush1.msra.mxu0 0.0
        %325 = vmatprep.subr.mxu0 0.0
        %326 = vmatpush1.msra.mxu0 0.0
        %327 = vmatprep.subr.mxu0 %v281
        %328 = vmatpush1.msra.mxu0 %v278
        %329 = vmatprep.subr.mxu0 %v246
        %330 = vmatpush1.msra.mxu0 %v245
        %331 = vmatprep.subr.mxu0 %v238
        %332 = vmatpush1.msra.mxu0 %v237
        %333 = vmatprep.subr.mxu0 0.0
        %334 = vmatpush2.msra.mxu0 0.0
        %335 = vmatprep.subr.mxu0 0.0
        %336 = vmatpush2.msra.mxu0 0.0
        %337 = vmatprep.subr.mxu0 0.0
        %338 = vmatpush2.msra.mxu0 0.0
        %339 = vmatprep.subr.mxu0 0.0
        %340 = vmatpush2.msra.mxu0 0.0
        %341 = vmatprep.subr.mxu0 0.0
        %342 = vmatpush2.msra.mxu0 0.0
        %343 = vmatprep.subr.mxu0 0.0
        %344 = vmatpush2.msra.mxu0 0.0
        %345 = vmatprep.subr.mxu0 0.0
        %346 = vmatpush2.msra.mxu0 0.0
        %347 = vmatprep.subr.mxu0 0.0
        %348 = vmatpush2.msra.mxu0 0.0
        %349 = vmatprep.subr.mxu0 0.0
        %350 = vmatpush2.msra.mxu0 0.0
        %351 = vmatprep.subr.mxu0 0.0
        %352 = vmatpush2.msra.mxu0 0.0
        %353 = vmatprep.subr.mxu0 0.0
        %354 = vmatpush2.msra.mxu0 0.0
        %355 = vmatprep.subr.mxu0 0.0
        %356 = vmatpush2.msra.mxu0 0.0
        %357 = vmatprep.subr.mxu0 0.0
        %358 = vmatpush2.msra.mxu0 0.0
        %359 = vmatprep.subr.mxu0 0.0
        %360 = vmatpush2.msra.mxu0 0.0
        %361 = vmatprep.subr.mxu0 0.0
        %362 = vmatpush2.msra.mxu0 0.0
        %363 = vmatprep.subr.mxu0 0.0
        %364 = vmatpush2.msra.mxu0 0.0
        %365 = vmatprep.mubr.f32.mxu0 0.0
        %366 = vmatmul.mubr.f32.gmra.mxu0 %v272
        %v367 = vpop.f32.mrf.mxu0
        %v368 = vadd.f32 %v264, %v367
        %v369 = vpop.f32.mrf.mxu0
        %v370 = vadd.f32 %v264, %v369
        %371 = vmatprep.mubr.f32.mxu0 0.0
        %372 = vmatmul.mubr.f32.gmra.mxu0 %v274
        %v373 = vpop.f32.mrf.mxu0
        %v374 = vadd.f32 %v269, %v373
        %v375 = vpop.f32.mrf.mxu0
        %v376 = vadd.f32 %v269, %v375
        %377 = vdwg.mxu0
        %378 = vmatprep.subr.mxu0 0.0
        %379 = vmatpush1.msra.mxu0 0.0
        %380 = vmatprep.subr.mxu0 0.0
        %381 = vmatpush1.msra.mxu0 0.0
        %382 = vmatprep.subr.mxu0 0.0
        %383 = vmatpush1.msra.mxu0 0.0
        %384 = vmatprep.subr.mxu0 0.0
        %385 = vmatpush1.msra.mxu0 0.0
        %386 = vmatprep.subr.mxu0 0.0
        %387 = vmatpush1.msra.mxu0 0.0
        %388 = vmatprep.subr.mxu0 0.0
        %389 = vmatpush1.msra.mxu0 0.0
        %390 = vmatprep.subr.mxu0 0.0
        %391 = vmatpush1.msra.mxu0 0.0
        %392 = vmatprep.subr.mxu0 0.0
        %393 = vmatpush1.msra.mxu0 0.0
        %394 = vmatprep.subr.mxu0 0.0
        %395 = vmatpush1.msra.mxu0 0.0
        %396 = vmatprep.subr.mxu0 0.0
        %397 = vmatpush1.msra.mxu0 0.0
        %398 = vmatprep.subr.mxu0 0.0
        %399 = vmatpush1.msra.mxu0 0.0
        %400 = vmatprep.subr.mxu0 0.0
        %401 = vmatpush1.msra.mxu0 0.0
        %402 = vmatprep.subr.mxu0 0.0
        %403 = vmatpush1.msra.mxu0 0.0
        %404 = vmatprep.subr.mxu0 %v287
        %405 = vmatpush1.msra.mxu0 %v284
        %406 = vmatprep.subr.mxu0 %v248
        %407 = vmatpush1.msra.mxu0 %v247
        %408 = vmatprep.subr.mxu0 %v240
        %409 = vmatpush1.msra.mxu0 %v239
        %410 = vmatprep.subr.mxu0 0.0
        %411 = vmatpush2.msra.mxu0 0.0
        %412 = vmatprep.subr.mxu0 0.0
        %413 = vmatpush2.msra.mxu0 0.0
        %414 = vmatprep.subr.mxu0 0.0
        %415 = vmatpush2.msra.mxu0 0.0
        %416 = vmatprep.subr.mxu0 0.0
        %417 = vmatpush2.msra.mxu0 0.0
        %418 = vmatprep.subr.mxu0 0.0
        %419 = vmatpush2.msra.mxu0 0.0
        %420 = vmatprep.subr.mxu0 0.0
        %421 = vmatpush2.msra.mxu0 0.0
        %422 = vmatprep.subr.mxu0 0.0
        %423 = vmatpush2.msra.mxu0 0.0
        %424 = vmatprep.subr.mxu0 0.0
        %425 = vmatpush2.msra.mxu0 0.0
        %426 = vmatprep.subr.mxu0 0.0
        %427 = vmatpush2.msra.mxu0 0.0
        %428 = vmatprep.subr.mxu0 0.0
        %429 = vmatpush2.msra.mxu0 0.0
        %430 = vmatprep.subr.mxu0 0.0
        %431 = vmatpush2.msra.mxu0 0.0
        %432 = vmatprep.subr.mxu0 0.0
        %433 = vmatpush2.msra.mxu0 0.0
        %434 = vmatprep.subr.mxu0 0.0
        %435 = vmatpush2.msra.mxu0 0.0
        %436 = vmatprep.subr.mxu0 0.0
        %437 = vmatpush2.msra.mxu0 0.0
        %438 = vmatprep.subr.mxu0 0.0
        %439 = vmatpush2.msra.mxu0 0.0
        %440 = vmatprep.subr.mxu0 0.0
        %441 = vmatpush2.msra.mxu0 0.0
        %442 = vmatprep.mubr.f32.mxu0 0.0
        %443 = vmatmul.mubr.f32.gmra.mxu0 %v272
        %v444 = vpop.f32.mrf.mxu0
        %v445 = vadd.f32 %v264, %v444
        %v446 = vpop.f32.mrf.mxu0
        %v447 = vadd.f32 %v264, %v446
        %448 = vmatprep.mubr.f32.mxu0 0.0
        %449 = vmatmul.mubr.f32.gmra.mxu0 %v274
        %v450 = vpop.f32.mrf.mxu0
        %v451 = vadd.f32 %v269, %v450
        %v452 = vpop.f32.mrf.mxu0
        %v453 = vadd.f32 %v269, %v452
        %454 = vdwg.mxu0
        %455 = vmatprep.subr.mxu0 0.0
        %456 = vmatpush1.msra.mxu0 0.0
        %457 = vmatprep.subr.mxu0 0.0
        %458 = vmatpush1.msra.mxu0 0.0
        %459 = vmatprep.subr.mxu0 0.0
        %460 = vmatpush1.msra.mxu0 0.0
        %461 = vmatprep.subr.mxu0 0.0
        %462 = vmatpush1.msra.mxu0 0.0
        %463 = vmatprep.subr.mxu0 0.0
        %464 = vmatpush1.msra.mxu0 0.0
        %465 = vmatprep.subr.mxu0 0.0
        %466 = vmatpush1.msra.mxu0 0.0
        %467 = vmatprep.subr.mxu0 0.0
        %468 = vmatpush1.msra.mxu0 0.0
        %469 = vmatprep.subr.mxu0 0.0
        %470 = vmatpush1.msra.mxu0 0.0
        %471 = vmatprep.subr.mxu0 0.0
        %472 = vmatpush1.msra.mxu0 0.0
        %473 = vmatprep.subr.mxu0 0.0
        %474 = vmatpush1.msra.mxu0 0.0
        %475 = vmatprep.subr.mxu0 0.0
        %476 = vmatpush1.msra.mxu0 0.0
        %477 = vmatprep.subr.mxu0 0.0
        %478 = vmatpush1.msra.mxu0 0.0
        %479 = vmatprep.subr.mxu0 0.0
        %480 = vmatpush1.msra.mxu0 0.0
        %481 = vmatprep.subr.mxu0 %v293
        %482 = vmatpush1.msra.mxu0 %v290
        %483 = vmatprep.subr.mxu0 %v250
        %484 = vmatpush1.msra.mxu0 %v249
        %485 = vmatprep.subr.mxu0 %v242
        %486 = vmatpush1.msra.mxu0 %v241
        %487 = vmatprep.subr.mxu0 0.0
        %488 = vmatpush2.msra.mxu0 0.0
        %489 = vmatprep.subr.mxu0 0.0
        %490 = vmatpush2.msra.mxu0 0.0
        %491 = vmatprep.subr.mxu0 0.0
        %492 = vmatpush2.msra.mxu0 0.0
        %493 = vmatprep.subr.mxu0 0.0
        %494 = vmatpush2.msra.mxu0 0.0
        %495 = vmatprep.subr.mxu0 0.0
        %496 = vmatpush2.msra.mxu0 0.0
        %497 = vmatprep.subr.mxu0 0.0
        %498 = vmatpush2.msra.mxu0 0.0
        %499 = vmatprep.subr.mxu0 0.0
        %500 = vmatpush2.msra.mxu0 0.0
        %501 = vmatprep.subr.mxu0 0.0
        %502 = vmatpush2.msra.mxu0 0.0
        %503 = vmatprep.subr.mxu0 0.0
        %504 = vmatpush2.msra.mxu0 0.0
        %505 = vmatprep.subr.mxu0 0.0
        %506 = vmatpush2.msra.mxu0 0.0
        %507 = vmatprep.subr.mxu0 0.0
        %508 = vmatpush2.msra.mxu0 0.0
        %509 = vmatprep.subr.mxu0 0.0
        %510 = vmatpush2.msra.mxu0 0.0
        %511 = vmatprep.subr.mxu0 0.0
        %512 = vmatpush2.msra.mxu0 0.0
        %513 = vmatprep.subr.mxu0 0.0
        %514 = vmatpush2.msra.mxu0 0.0
        %515 = vmatprep.subr.mxu0 0.0
        %516 = vmatpush2.msra.mxu0 0.0
        %517 = vmatprep.subr.mxu0 0.0
        %518 = vmatpush2.msra.mxu0 0.0
        %519 = vmatprep.mubr.f32.mxu0 0.0
        %520 = vmatmul.mubr.f32.gmra.mxu0 %v272
        %v521 = vpop.f32.mrf.mxu0
        %v522 = vadd.f32 %v264, %v521
        %v523 = vpop.f32.mrf.mxu0
        %v524 = vadd.f32 %v264, %v523
        %525 = vmatprep.mubr.f32.mxu0 0.0
        %526 = vmatmul.mubr.f32.gmra.mxu0 %v274
        %v527 = vpop.f32.mrf.mxu0
        %v528 = vadd.f32 %v269, %v527
        %v529 = vpop.f32.mrf.mxu0
        %v530 = vadd.f32 %v269, %v529
        %531 = vdwg.mxu0
        %532 = vmatprep.subr.mxu0 0.0
        %533 = vmatpush1.msra.mxu0 0.0
        %534 = vmatprep.subr.mxu0 0.0
        %535 = vmatpush1.msra.mxu0 0.0
        %536 = vmatprep.subr.mxu0 0.0
        %537 = vmatpush1.msra.mxu0 0.0
        %538 = vmatprep.subr.mxu0 0.0
        %539 = vmatpush1.msra.mxu0 0.0
        %540 = vmatprep.subr.mxu0 0.0
        %541 = vmatpush1.msra.mxu0 0.0
        %542 = vmatprep.subr.mxu0 0.0
        %543 = vmatpush1.msra.mxu0 0.0
        %544 = vmatprep.subr.mxu0 0.0
        %545 = vmatpush1.msra.mxu0 0.0
        %546 = vmatprep.subr.mxu0 0.0
        %547 = vmatpush1.msra.mxu0 0.0
        %548 = vmatprep.subr.mxu0 0.0
        %549 = vmatpush1.msra.mxu0 0.0
        %550 = vmatprep.subr.mxu0 0.0
        %551 = vmatpush1.msra.mxu0 0.0
        %552 = vmatprep.subr.mxu0 0.0
        %553 = vmatpush1.msra.mxu0 0.0
        %554 = vmatprep.subr.mxu0 0.0
        %555 = vmatpush1.msra.mxu0 0.0
        %556 = vmatprep.subr.mxu0 0.0
        %557 = vmatpush1.msra.mxu0 0.0
        %558 = vmatprep.subr.mxu0 %v299
        %559 = vmatpush1.msra.mxu0 %v296
        %560 = vmatprep.subr.mxu0 %v252
        %561 = vmatpush1.msra.mxu0 %v251
        %562 = vmatprep.subr.mxu0 %v244
        %563 = vmatpush1.msra.mxu0 %v243
        %564 = vmatprep.subr.mxu0 0.0
        %565 = vmatpush2.msra.mxu0 0.0
        %566 = vmatprep.subr.mxu0 0.0
        %567 = vmatpush2.msra.mxu0 0.0
        %568 = vmatprep.subr.mxu0 0.0
        %569 = vmatpush2.msra.mxu0 0.0
        %570 = vmatprep.subr.mxu0 0.0
        %571 = vmatpush2.msra.mxu0 0.0
        %572 = vmatprep.subr.mxu0 0.0
        %573 = vmatpush2.msra.mxu0 0.0
        %574 = vmatprep.subr.mxu0 0.0
        %575 = vmatpush2.msra.mxu0 0.0
        %576 = vmatprep.subr.mxu0 0.0
        %577 = vmatpush2.msra.mxu0 0.0
        %578 = vmatprep.subr.mxu0 0.0
        %579 = vmatpush2.msra.mxu0 0.0
        %580 = vmatprep.subr.mxu0 0.0
        %581 = vmatpush2.msra.mxu0 0.0
        %582 = vmatprep.subr.mxu0 0.0
        %583 = vmatpush2.msra.mxu0 0.0
        %584 = vmatprep.subr.mxu0 0.0
        %585 = vmatpush2.msra.mxu0 0.0
        %586 = vmatprep.subr.mxu0 0.0
        %587 = vmatpush2.msra.mxu0 0.0
        %588 = vmatprep.subr.mxu0 0.0
        %589 = vmatpush2.msra.mxu0 0.0
        %590 = vmatprep.subr.mxu0 0.0
        %591 = vmatpush2.msra.mxu0 0.0
        %592 = vmatprep.subr.mxu0 0.0
        %593 = vmatpush2.msra.mxu0 0.0
        %594 = vmatprep.subr.mxu0 0.0
        %595 = vmatpush2.msra.mxu0 0.0
        %596 = vmatprep.mubr.f32.mxu0 0.0
        %597 = vmatmul.mubr.f32.gmra.mxu0 %v272
        %v598 = vpop.f32.mrf.mxu0
        %v599 = vadd.f32 %v264, %v598
        %v600 = vpop.f32.mrf.mxu0
        %v601 = vadd.f32 %v264, %v600
        %602 = vmatprep.mubr.f32.mxu0 0.0
        %603 = vmatmul.mubr.f32.gmra.mxu0 %v274
        %v604 = vpop.f32.mrf.mxu0
        %v605 = vadd.f32 %v269, %v604
        %v606 = vpop.f32.mrf.mxu0
        %v607 = vadd.f32 %v269, %v606
        %608 = vdwg.mxu0
        %v609 = vmul.f32 %v368, 0.1
        %v610 = vmul.f32 %v370, 0.1
        %v611 = vmul.f32 %v445, 0.1
        %v612 = vmul.f32 %v447, 0.1
        %v613 = vmul.f32 %v522, 0.1
        %v614 = vmul.f32 %v524, 0.1
        %v615 = vmul.f32 %v599, 0.1
        %v616 = vmul.f32 %v601, 0.1
        %v617 = vmul.f32 %v374, 0.1
        %v618 = vmul.f32 %v376, 0.1
        %v619 = vmul.f32 %v451, 0.1
        %v620 = vmul.f32 %v453, 0.1
        %v621 = vmul.f32 %v528, 0.1
        %v622 = vmul.f32 %v530, 0.1
        %v623 = vmul.f32 %v605, 0.1
        %v624 = vmul.f32 %v607, 0.1
        %v625 = vmax.f32 %v368, %v609
        %v626 = vmax.f32 %v370, %v610
        %v627 = vmax.f32 %v445, %v611
        %v628 = vmax.f32 %v447, %v612
        %v629 = vmax.f32 %v522, %v613
        %v630 = vmax.f32 %v524, %v614
        %v631 = vmax.f32 %v599, %v615
        %v632 = vmax.f32 %v601, %v616
        %v633 = vmax.f32 %v374, %v617
        %v634 = vmax.f32 %v376, %v618
        %v635 = vmax.f32 %v451, %v619
        %v636 = vmax.f32 %v453, %v620
        %v637 = vmax.f32 %v528, %v621
        %v638 = vmax.f32 %v530, %v622
        %v639 = vmax.f32 %v605, %v623
        %v640 = vmax.f32 %v607, %v624
        %642 = vset.pattern.permute.xlu0 20
        %643 = vperm.xlu0 %642, %v234
        %v644 = vpop.permute.xlu0 %643
        %vm646 = vcmask 130048
        %v647 = vsel %vm646, %v234, 0
        %649 = vmatprep.subr.mxu0 0.0
        %650 = vmatpush1.msra.mxu0 0.0
        %651 = vmatprep.subr.mxu0 0.0
        %652 = vmatpush1.msra.mxu0 0.0
        %653 = vmatprep.subr.mxu0 0.0
        %654 = vmatpush1.msra.mxu0 0.0
        %655 = vmatprep.subr.mxu0 0.0
        %656 = vmatpush1.msra.mxu0 0.0
        %657 = vmatprep.subr.mxu0 0.0
        %658 = vmatpush1.msra.mxu0 0.0
        %659 = vmatprep.subr.mxu0 0.0
        %660 = vmatpush1.msra.mxu0 0.0
        %661 = vmatprep.subr.mxu0 0.0
        %662 = vmatpush1.msra.mxu0 0.0
        %663 = vmatprep.subr.mxu0 0.0
        %664 = vmatpush1.msra.mxu0 0.0
        %665 = vmatprep.subr.mxu0 0.0
        %666 = vmatpush1.msra.mxu0 0.0
        %667 = vmatprep.subr.mxu0 0.0
        %668 = vmatpush1.msra.mxu0 0.0
        %669 = vmatprep.subr.mxu0 0.0
        %670 = vmatpush1.msra.mxu0 0.0
        %671 = vmatprep.subr.mxu0 0.0
        %672 = vmatpush1.msra.mxu0 0.0
        %673 = vmatprep.subr.mxu0 0.0
        %674 = vmatpush1.msra.mxu0 0.0
        %675 = vmatprep.subr.mxu0 0.0
        %676 = vmatpush1.msra.mxu0 0.0
        %677 = vmatprep.subr.mxu0 %v634
        %678 = vmatpush1.msra.mxu0 %v633
        %679 = vmatprep.subr.mxu0 %v626
        %680 = vmatpush1.msra.mxu0 %v625
        %681 = vmatprep.subr.mxu0 0.0
        %682 = vmatpush2.msra.mxu0 0.0
        %683 = vmatprep.subr.mxu0 0.0
        %684 = vmatpush2.msra.mxu0 0.0
        %685 = vmatprep.subr.mxu0 0.0
        %686 = vmatpush2.msra.mxu0 0.0
        %687 = vmatprep.subr.mxu0 0.0
        %688 = vmatpush2.msra.mxu0 0.0
        %689 = vmatprep.subr.mxu0 0.0
        %690 = vmatpush2.msra.mxu0 0.0
        %691 = vmatprep.subr.mxu0 0.0
        %692 = vmatpush2.msra.mxu0 0.0
        %693 = vmatprep.subr.mxu0 0.0
        %694 = vmatpush2.msra.mxu0 0.0
        %695 = vmatprep.subr.mxu0 0.0
        %696 = vmatpush2.msra.mxu0 0.0
        %697 = vmatprep.subr.mxu0 0.0
        %698 = vmatpush2.msra.mxu0 0.0
        %699 = vmatprep.subr.mxu0 0.0
        %700 = vmatpush2.msra.mxu0 0.0
        %701 = vmatprep.subr.mxu0 0.0
        %702 = vmatpush2.msra.mxu0 0.0
        %703 = vmatprep.subr.mxu0 0.0
        %704 = vmatpush2.msra.mxu0 0.0
        %705 = vmatprep.subr.mxu0 0.0
        %706 = vmatpush2.msra.mxu0 0.0
        %707 = vmatprep.subr.mxu0 0.0
        %708 = vmatpush2.msra.mxu0 0.0
        %709 = vmatprep.subr.mxu0 0.0
        %710 = vmatpush2.msra.mxu0 0.0
        %711 = vmatprep.subr.mxu0 0.0
        %712 = vmatpush2.msra.mxu0 0.0
        %713 = vmatprep.mubr.f32.mxu0 0.0
        %714 = vmatmul.mubr.f32.gmra.mxu0 %v647
        %v715 = vpop.f32.mrf.mxu0
        %v716 = vadd.f32 %v644, %v715
        %v717 = vpop.f32.mrf.mxu0
        %v718 = vadd.f32 %v644, %v717
        %719 = vdwg.mxu0
        %720 = vmatprep.subr.mxu0 0.0
        %721 = vmatpush1.msra.mxu0 0.0
        %722 = vmatprep.subr.mxu0 0.0
        %723 = vmatpush1.msra.mxu0 0.0
        %724 = vmatprep.subr.mxu0 0.0
        %725 = vmatpush1.msra.mxu0 0.0
        %726 = vmatprep.subr.mxu0 0.0
        %727 = vmatpush1.msra.mxu0 0.0
        %728 = vmatprep.subr.mxu0 0.0
        %729 = vmatpush1.msra.mxu0 0.0
        %730 = vmatprep.subr.mxu0 0.0
        %731 = vmatpush1.msra.mxu0 0.0
        %732 = vmatprep.subr.mxu0 0.0
        %733 = vmatpush1.msra.mxu0 0.0
        %734 = vmatprep.subr.mxu0 0.0
        %735 = vmatpush1.msra.mxu0 0.0
        %736 = vmatprep.subr.mxu0 0.0
        %737 = vmatpush1.msra.mxu0 0.0
        %738 = vmatprep.subr.mxu0 0.0
        %739 = vmatpush1.msra.mxu0 0.0
        %740 = vmatprep.subr.mxu0 0.0
        %741 = vmatpush1.msra.mxu0 0.0
        %742 = vmatprep.subr.mxu0 0.0
        %743 = vmatpush1.msra.mxu0 0.0
        %744 = vmatprep.subr.mxu0 0.0
        %745 = vmatpush1.msra.mxu0 0.0
        %746 = vmatprep.subr.mxu0 0.0
        %747 = vmatpush1.msra.mxu0 0.0
        %748 = vmatprep.subr.mxu0 %v636
        %749 = vmatpush1.msra.mxu0 %v635
        %750 = vmatprep.subr.mxu0 %v628
        %751 = vmatpush1.msra.mxu0 %v627
        %752 = vmatprep.subr.mxu0 0.0
        %753 = vmatpush2.msra.mxu0 0.0
        %754 = vmatprep.subr.mxu0 0.0
        %755 = vmatpush2.msra.mxu0 0.0
        %756 = vmatprep.subr.mxu0 0.0
        %757 = vmatpush2.msra.mxu0 0.0
        %758 = vmatprep.subr.mxu0 0.0
        %759 = vmatpush2.msra.mxu0 0.0
        %760 = vmatprep.subr.mxu0 0.0
        %761 = vmatpush2.msra.mxu0 0.0
        %762 = vmatprep.subr.mxu0 0.0
        %763 = vmatpush2.msra.mxu0 0.0
        %764 = vmatprep.subr.mxu0 0.0
        %765 = vmatpush2.msra.mxu0 0.0
        %766 = vmatprep.subr.mxu0 0.0
        %767 = vmatpush2.msra.mxu0 0.0
        %768 = vmatprep.subr.mxu0 0.0
        %769 = vmatpush2.msra.mxu0 0.0
        %770 = vmatprep.subr.mxu0 0.0
        %771 = vmatpush2.msra.mxu0 0.0
        %772 = vmatprep.subr.mxu0 0.0
        %773 = vmatpush2.msra.mxu0 0.0
        %774 = vmatprep.subr.mxu0 0.0
        %775 = vmatpush2.msra.mxu0 0.0
        %776 = vmatprep.subr.mxu0 0.0
        %777 = vmatpush2.msra.mxu0 0.0
        %778 = vmatprep.subr.mxu0 0.0
        %779 = vmatpush2.msra.mxu0 0.0
        %780 = vmatprep.subr.mxu0 0.0
        %781 = vmatpush2.msra.mxu0 0.0
        %782 = vmatprep.subr.mxu0 0.0
        %783 = vmatpush2.msra.mxu0 0.0
        %784 = vmatprep.mubr.f32.mxu0 0.0
        %785 = vmatmul.mubr.f32.gmra.mxu0 %v647
        %v786 = vpop.f32.mrf.mxu0
        %v787 = vadd.f32 %v644, %v786
        %v788 = vpop.f32.mrf.mxu0
        %v789 = vadd.f32 %v644, %v788
        %790 = vdwg.mxu0
        %791 = vmatprep.subr.mxu0 0.0
        %792 = vmatpush1.msra.mxu0 0.0
        %793 = vmatprep.subr.mxu0 0.0
        %794 = vmatpush1.msra.mxu0 0.0
        %795 = vmatprep.subr.mxu0 0.0
        %796 = vmatpush1.msra.mxu0 0.0
        %797 = vmatprep.subr.mxu0 0.0
        %798 = vmatpush1.msra.mxu0 0.0
        %799 = vmatprep.subr.mxu0 0.0
        %800 = vmatpush1.msra.mxu0 0.0
        %801 = vmatprep.subr.mxu0 0.0
        %802 = vmatpush1.msra.mxu0 0.0
        %803 = vmatprep.subr.mxu0 0.0
        %804 = vmatpush1.msra.mxu0 0.0
        %805 = vmatprep.subr.mxu0 0.0
        %806 = vmatpush1.msra.mxu0 0.0
        %807 = vmatprep.subr.mxu0 0.0
        %808 = vmatpush1.msra.mxu0 0.0
        %809 = vmatprep.subr.mxu0 0.0
        %810 = vmatpush1.msra.mxu0 0.0
        %811 = vmatprep.subr.mxu0 0.0
        %812 = vmatpush1.msra.mxu0 0.0
        %813 = vmatprep.subr.mxu0 0.0
        %814 = vmatpush1.msra.mxu0 0.0
        %815 = vmatprep.subr.mxu0 0.0
        %816 = vmatpush1.msra.mxu0 0.0
        %817 = vmatprep.subr.mxu0 0.0
        %818 = vmatpush1.msra.mxu0 0.0
        %819 = vmatprep.subr.mxu0 %v638
        %820 = vmatpush1.msra.mxu0 %v637
        %821 = vmatprep.subr.mxu0 %v630
        %822 = vmatpush1.msra.mxu0 %v629
        %823 = vmatprep.subr.mxu0 0.0
        %824 = vmatpush2.msra.mxu0 0.0
        %825 = vmatprep.subr.mxu0 0.0
        %826 = vmatpush2.msra.mxu0 0.0
        %827 = vmatprep.subr.mxu0 0.0
        %828 = vmatpush2.msra.mxu0 0.0
        %829 = vmatprep.subr.mxu0 0.0
        %830 = vmatpush2.msra.mxu0 0.0
        %831 = vmatprep.subr.mxu0 0.0
        %832 = vmatpush2.msra.mxu0 0.0
        %833 = vmatprep.subr.mxu0 0.0
        %834 = vmatpush2.msra.mxu0 0.0
        %835 = vmatprep.subr.mxu0 0.0
        %836 = vmatpush2.msra.mxu0 0.0
        %837 = vmatprep.subr.mxu0 0.0
        %838 = vmatpush2.msra.mxu0 0.0
        %839 = vmatprep.subr.mxu0 0.0
        %840 = vmatpush2.msra.mxu0 0.0
        %841 = vmatprep.subr.mxu0 0.0
        %842 = vmatpush2.msra.mxu0 0.0
        %843 = vmatprep.subr.mxu0 0.0
        %844 = vmatpush2.msra.mxu0 0.0
        %845 = vmatprep.subr.mxu0 0.0
        %846 = vmatpush2.msra.mxu0 0.0
        %847 = vmatprep.subr.mxu0 0.0
        %848 = vmatpush2.msra.mxu0 0.0
        %849 = vmatprep.subr.mxu0 0.0
        %850 = vmatpush2.msra.mxu0 0.0
        %851 = vmatprep.subr.mxu0 0.0
        %852 = vmatpush2.msra.mxu0 0.0
        %853 = vmatprep.subr.mxu0 0.0
        %854 = vmatpush2.msra.mxu0 0.0
        %855 = vmatprep.mubr.f32.mxu0 0.0
        %856 = vmatmul.mubr.f32.gmra.mxu0 %v647
        %v857 = vpop.f32.mrf.mxu0
        %v858 = vadd.f32 %v644, %v857
        %v859 = vpop.f32.mrf.mxu0
        %v860 = vadd.f32 %v644, %v859
        %861 = vdwg.mxu0
        %862 = vmatprep.subr.mxu0 0.0
        %863 = vmatpush1.msra.mxu0 0.0
        %864 = vmatprep.subr.mxu0 0.0
        %865 = vmatpush1.msra.mxu0 0.0
        %866 = vmatprep.subr.mxu0 0.0
        %867 = vmatpush1.msra.mxu0 0.0
        %868 = vmatprep.subr.mxu0 0.0
        %869 = vmatpush1.msra.mxu0 0.0
        %870 = vmatprep.subr.mxu0 0.0
        %871 = vmatpush1.msra.mxu0 0.0
        %872 = vmatprep.subr.mxu0 0.0
        %873 = vmatpush1.msra.mxu0 0.0
        %874 = vmatprep.subr.mxu0 0.0
        %875 = vmatpush1.msra.mxu0 0.0
        %876 = vmatprep.subr.mxu0 0.0
        %877 = vmatpush1.msra.mxu0 0.0
        %878 = vmatprep.subr.mxu0 0.0
        %879 = vmatpush1.msra.mxu0 0.0
        %880 = vmatprep.subr.mxu0 0.0
        %881 = vmatpush1.msra.mxu0 0.0
        %882 = vmatprep.subr.mxu0 0.0
        %883 = vmatpush1.msra.mxu0 0.0
        %884 = vmatprep.subr.mxu0 0.0
        %885 = vmatpush1.msra.mxu0 0.0
        %886 = vmatprep.subr.mxu0 0.0
        %887 = vmatpush1.msra.mxu0 0.0
        %888 = vmatprep.subr.mxu0 0.0
        %889 = vmatpush1.msra.mxu0 0.0
        %890 = vmatprep.subr.mxu0 %v640
        %891 = vmatpush1.msra.mxu0 %v639
        %892 = vmatprep.subr.mxu0 %v632
        %893 = vmatpush1.msra.mxu0 %v631
        %894 = vmatprep.subr.mxu0 0.0
        %895 = vmatpush2.msra.mxu0 0.0
        %896 = vmatprep.subr.mxu0 0.0
        %897 = vmatpush2.msra.mxu0 0.0
        %898 = vmatprep.subr.mxu0 0.0
        %899 = vmatpush2.msra.mxu0 0.0
        %900 = vmatprep.subr.mxu0 0.0
        %901 = vmatpush2.msra.mxu0 0.0
        %902 = vmatprep.subr.mxu0 0.0
        %903 = vmatpush2.msra.mxu0 0.0
        %904 = vmatprep.subr.mxu0 0.0
        %905 = vmatpush2.msra.mxu0 0.0
        %906 = vmatprep.subr.mxu0 0.0
        %907 = vmatpush2.msra.mxu0 0.0
        %908 = vmatprep.subr.mxu0 0.0
        %909 = vmatpush2.msra.mxu0 0.0
        %910 = vmatprep.subr.mxu0 0.0
        %911 = vmatpush2.msra.mxu0 0.0
        %912 = vmatprep.subr.mxu0 0.0
        %913 = vmatpush2.msra.mxu0 0.0
        %914 = vmatprep.subr.mxu0 0.0
        %915 = vmatpush2.msra.mxu0 0.0
        %916 = vmatprep.subr.mxu0 0.0
        %917 = vmatpush2.msra.mxu0 0.0
        %918 = vmatprep.subr.mxu0 0.0
        %919 = vmatpush2.msra.mxu0 0.0
        %920 = vmatprep.subr.mxu0 0.0
        %921 = vmatpush2.msra.mxu0 0.0
        %922 = vmatprep.subr.mxu0 0.0
        %923 = vmatpush2.msra.mxu0 0.0
        %924 = vmatprep.subr.mxu0 0.0
        %925 = vmatpush2.msra.mxu0 0.0
        %926 = vmatprep.mubr.f32.mxu0 0.0
        %927 = vmatmul.mubr.f32.gmra.mxu0 %v647
        %v928 = vpop.f32.mrf.mxu0
        %v929 = vadd.f32 %v644, %v928
        %v930 = vpop.f32.mrf.mxu0
        %v931 = vadd.f32 %v644, %v930
        %932 = vdwg.mxu0
        %v933 = vmul.f32 %v716, 0.1
        %v934 = vmul.f32 %v718, 0.1
        %v935 = vmul.f32 %v787, 0.1
        %v936 = vmul.f32 %v789, 0.1
        %v937 = vmul.f32 %v858, 0.1
        %v938 = vmul.f32 %v860, 0.1
        %v939 = vmul.f32 %v929, 0.1
        %v940 = vmul.f32 %v931, 0.1
        %v941 = vmax.f32 %v716, %v933
        %v942 = vmax.f32 %v718, %v934
        %v943 = vmax.f32 %v787, %v935
        %v944 = vmax.f32 %v789, %v936
        %v945 = vmax.f32 %v858, %v937
        %v946 = vmax.f32 %v860, %v938
        %v947 = vmax.f32 %v929, %v939
        %v948 = vmax.f32 %v931, %v940
        %950 = vset.pattern.permute.xlu0 20
        %951 = vperm.xlu0 %950, %v235
        %v952 = vpop.permute.xlu0 %951
        %vm954 = vcmask 64512
        %v955 = vsel %vm954, %v235, 0
        %957 = vmatprep.subr.mxu0 0.0
        %958 = vmatpush1.msra.mxu0 0.0
        %959 = vmatprep.subr.mxu0 0.0
        %960 = vmatpush1.msra.mxu0 0.0
        %961 = vmatprep.subr.mxu0 0.0
        %962 = vmatpush1.msra.mxu0 0.0
        %963 = vmatprep.subr.mxu0 0.0
        %964 = vmatpush1.msra.mxu0 0.0
        %965 = vmatprep.subr.mxu0 0.0
        %966 = vmatpush1.msra.mxu0 0.0
        %967 = vmatprep.subr.mxu0 0.0
        %968 = vmatpush1.msra.mxu0 0.0
        %969 = vmatprep.subr.mxu0 0.0
        %970 = vmatpush1.msra.mxu0 0.0
        %971 = vmatprep.subr.mxu0 0.0
        %972 = vmatpush1.msra.mxu0 0.0
        %973 = vmatprep.subr.mxu0 0.0
        %974 = vmatpush1.msra.mxu0 0.0
        %975 = vmatprep.subr.mxu0 0.0
        %976 = vmatpush1.msra.mxu0 0.0
        %977 = vmatprep.subr.mxu0 0.0
        %978 = vmatpush1.msra.mxu0 0.0
        %979 = vmatprep.subr.mxu0 0.0
        %980 = vmatpush1.msra.mxu0 0.0
        %981 = vmatprep.subr.mxu0 0.0
        %982 = vmatpush1.msra.mxu0 0.0
        %983 = vmatprep.subr.mxu0 0.0
        %984 = vmatpush1.msra.mxu0 0.0
        %985 = vmatprep.subr.mxu0 0.0
        %986 = vmatpush1.msra.mxu0 0.0
        %987 = vmatprep.subr.mxu0 %v942
        %988 = vmatpush1.msra.mxu0 %v941
        %989 = vmatprep.subr.mxu0 0.0
        %990 = vmatpush2.msra.mxu0 0.0
        %991 = vmatprep.subr.mxu0 0.0
        %992 = vmatpush2.msra.mxu0 0.0
        %993 = vmatprep.subr.mxu0 0.0
        %994 = vmatpush2.msra.mxu0 0.0
        %995 = vmatprep.subr.mxu0 0.0
        %996 = vmatpush2.msra.mxu0 0.0
        %997 = vmatprep.subr.mxu0 0.0
        %998 = vmatpush2.msra.mxu0 0.0
        %999 = vmatprep.subr.mxu0 0.0
        %1000 = vmatpush2.msra.mxu0 0.0
        %1001 = vmatprep.subr.mxu0 0.0
        %1002 = vmatpush2.msra.mxu0 0.0
        %1003 = vmatprep.subr.mxu0 0.0
        %1004 = vmatpush2.msra.mxu0 0.0
        %1005 = vmatprep.subr.mxu0 0.0
        %1006 = vmatpush2.msra.mxu0 0.0
        %1007 = vmatprep.subr.mxu0 0.0
        %1008 = vmatpush2.msra.mxu0 0.0
        %1009 = vmatprep.subr.mxu0 0.0
        %1010 = vmatpush2.msra.mxu0 0.0
        %1011 = vmatprep.subr.mxu0 0.0
        %1012 = vmatpush2.msra.mxu0 0.0
        %1013 = vmatprep.subr.mxu0 0.0
        %1014 = vmatpush2.msra.mxu0 0.0
        %1015 = vmatprep.subr.mxu0 0.0
        %1016 = vmatpush2.msra.mxu0 0.0
        %1017 = vmatprep.subr.mxu0 0.0
        %1018 = vmatpush2.msra.mxu0 0.0
        %1019 = vmatprep.subr.mxu0 0.0
        %1020 = vmatpush2.msra.mxu0 0.0
        %1021 = vmatprep.mubr.f32.mxu0 0.0
        %1022 = vmatmul.mubr.f32.gmra.mxu0 %v955
        %v1023 = vpop.f32.mrf.mxu0
        %v1024 = vadd.f32 %v952, %v1023
        %v1025 = vpop.f32.mrf.mxu0
        %v1026 = vadd.f32 %v952, %v1025
        %1027 = vdwg.mxu0
        %1028 = vmatprep.subr.mxu0 0.0
        %1029 = vmatpush1.msra.mxu0 0.0
        %1030 = vmatprep.subr.mxu0 0.0
        %1031 = vmatpush1.msra.mxu0 0.0
        %1032 = vmatprep.subr.mxu0 0.0
        %1033 = vmatpush1.msra.mxu0 0.0
        %1034 = vmatprep.subr.mxu0 0.0
        %1035 = vmatpush1.msra.mxu0 0.0
        %1036 = vmatprep.subr.mxu0 0.0
        %1037 = vmatpush1.msra.mxu0 0.0
        %1038 = vmatprep.subr.mxu0 0.0
        %1039 = vmatpush1.msra.mxu0 0.0
        %1040 = vmatprep.subr.mxu0 0.0
        %1041 = vmatpush1.msra.mxu0 0.0
        %1042 = vmatprep.subr.mxu0 0.0
        %1043 = vmatpush1.msra.mxu0 0.0
        %1044 = vmatprep.subr.mxu0 0.0
        %1045 = vmatpush1.msra.mxu0 0.0
        %1046 = vmatprep.subr.mxu0 0.0
        %1047 = vmatpush1.msra.mxu0 0.0
        %1048 = vmatprep.subr.mxu0 0.0
        %1049 = vmatpush1.msra.mxu0 0.0
        %1050 = vmatprep.subr.mxu0 0.0
        %1051 = vmatpush1.msra.mxu0 0.0
        %1052 = vmatprep.subr.mxu0 0.0
        %1053 = vmatpush1.msra.mxu0 0.0
        %1054 = vmatprep.subr.mxu0 0.0
        %1055 = vmatpush1.msra.mxu0 0.0
        %1056 = vmatprep.subr.mxu0 0.0
        %1057 = vmatpush1.msra.mxu0 0.0
        %1058 = vmatprep.subr.mxu0 %v944
        %1059 = vmatpush1.msra.mxu0 %v943
        %1060 = vmatprep.subr.mxu0 0.0
        %1061 = vmatpush2.msra.mxu0 0.0
        %1062 = vmatprep.subr.mxu0 0.0
        %1063 = vmatpush2.msra.mxu0 0.0
        %1064 = vmatprep.subr.mxu0 0.0
        %1065 = vmatpush2.msra.mxu0 0.0
        %1066 = vmatprep.subr.mxu0 0.0
        %1067 = vmatpush2.msra.mxu0 0.0
        %1068 = vmatprep.subr.mxu0 0.0
        %1069 = vmatpush2.msra.mxu0 0.0
        %1070 = vmatprep.subr.mxu0 0.0
        %1071 = vmatpush2.msra.mxu0 0.0
        %1072 = vmatprep.subr.mxu0 0.0
        %1073 = vmatpush2.msra.mxu0 0.0
        %1074 = vmatprep.subr.mxu0 0.0
        %1075 = vmatpush2.msra.mxu0 0.0
        %1076 = vmatprep.subr.mxu0 0.0
        %1077 = vmatpush2.msra.mxu0 0.0
        %1078 = vmatprep.subr.mxu0 0.0
        %1079 = vmatpush2.msra.mxu0 0.0
        %1080 = vmatprep.subr.mxu0 0.0
        %1081 = vmatpush2.msra.mxu0 0.0
        %1082 = vmatprep.subr.mxu0 0.0
        %1083 = vmatpush2.msra.mxu0 0.0
        %1084 = vmatprep.subr.mxu0 0.0
        %1085 = vmatpush2.msra.mxu0 0.0
        %1086 = vmatprep.subr.mxu0 0.0
        %1087 = vmatpush2.msra.mxu0 0.0
        %1088 = vmatprep.subr.mxu0 0.0
        %1089 = vmatpush2.msra.mxu0 0.0
        %1090 = vmatprep.subr.mxu0 0.0
        %1091 = vmatpush2.msra.mxu0 0.0
        %1092 = vmatprep.mubr.f32.mxu0 0.0
        %1093 = vmatmul.mubr.f32.gmra.mxu0 %v955
        %v1094 = vpop.f32.mrf.mxu0
        %v1095 = vadd.f32 %v952, %v1094
        %v1096 = vpop.f32.mrf.mxu0
        %v1097 = vadd.f32 %v952, %v1096
        %1098 = vdwg.mxu0
        %1099 = vmatprep.subr.mxu0 0.0
        %1100 = vmatpush1.msra.mxu0 0.0
        %1101 = vmatprep.subr.mxu0 0.0
        %1102 = vmatpush1.msra.mxu0 0.0
        %1103 = vmatprep.subr.mxu0 0.0
        %1104 = vmatpush1.msra.mxu0 0.0
        %1105 = vmatprep.subr.mxu0 0.0
        %1106 = vmatpush1.msra.mxu0 0.0
        %1107 = vmatprep.subr.mxu0 0.0
        %1108 = vmatpush1.msra.mxu0 0.0
        %1109 = vmatprep.subr.mxu0 0.0
        %1110 = vmatpush1.msra.mxu0 0.0
        %1111 = vmatprep.subr.mxu0 0.0
        %1112 = vmatpush1.msra.mxu0 0.0
        %1113 = vmatprep.subr.mxu0 0.0
        %1114 = vmatpush1.msra.mxu0 0.0
        %1115 = vmatprep.subr.mxu0 0.0
        %1116 = vmatpush1.msra.mxu0 0.0
        %1117 = vmatprep.subr.mxu0 0.0
        %1118 = vmatpush1.msra.mxu0 0.0
        %1119 = vmatprep.subr.mxu0 0.0
        %1120 = vmatpush1.msra.mxu0 0.0
        %1121 = vmatprep.subr.mxu0 0.0
        %1122 = vmatpush1.msra.mxu0 0.0
        %1123 = vmatprep.subr.mxu0 0.0
        %1124 = vmatpush1.msra.mxu0 0.0
        %1125 = vmatprep.subr.mxu0 0.0
        %1126 = vmatpush1.msra.mxu0 0.0
        %1127 = vmatprep.subr.mxu0 0.0
        %1128 = vmatpush1.msra.mxu0 0.0
        %1129 = vmatprep.subr.mxu0 %v946
        %1130 = vmatpush1.msra.mxu0 %v945
        %1131 = vmatprep.subr.mxu0 0.0
        %1132 = vmatpush2.msra.mxu0 0.0
        %1133 = vmatprep.subr.mxu0 0.0
        %1134 = vmatpush2.msra.mxu0 0.0
        %1135 = vmatprep.subr.mxu0 0.0
        %1136 = vmatpush2.msra.mxu0 0.0
        %1137 = vmatprep.subr.mxu0 0.0
        %1138 = vmatpush2.msra.mxu0 0.0
        %1139 = vmatprep.subr.mxu0 0.0
        %1140 = vmatpush2.msra.mxu0 0.0
        %1141 = vmatprep.subr.mxu0 0.0
        %1142 = vmatpush2.msra.mxu0 0.0
        %1143 = vmatprep.subr.mxu0 0.0
        %1144 = vmatpush2.msra.mxu0 0.0
        %1145 = vmatprep.subr.mxu0 0.0
        %1146 = vmatpush2.msra.mxu0 0.0
        %1147 = vmatprep.subr.mxu0 0.0
        %1148 = vmatpush2.msra.mxu0 0.0
        %1149 = vmatprep.subr.mxu0 0.0
        %1150 = vmatpush2.msra.mxu0 0.0
        %1151 = vmatprep.subr.mxu0 0.0
        %1152 = vmatpush2.msra.mxu0 0.0
        %1153 = vmatprep.subr.mxu0 0.0
        %1154 = vmatpush2.msra.mxu0 0.0
        %1155 = vmatprep.subr.mxu0 0.0
        %1156 = vmatpush2.msra.mxu0 0.0
        %1157 = vmatprep.subr.mxu0 0.0
        %1158 = vmatpush2.msra.mxu0 0.0
        %1159 = vmatprep.subr.mxu0 0.0
        %1160 = vmatpush2.msra.mxu0 0.0
        %1161 = vmatprep.subr.mxu0 0.0
        %1162 = vmatpush2.msra.mxu0 0.0
        %1163 = vmatprep.mubr.f32.mxu0 0.0
        %1164 = vmatmul.mubr.f32.gmra.mxu0 %v955
        %v1165 = vpop.f32.mrf.mxu0
        %v1166 = vadd.f32 %v952, %v1165
        %v1167 = vpop.f32.mrf.mxu0
        %v1168 = vadd.f32 %v952, %v1167
        %1169 = vdwg.mxu0
        %1170 = vmatprep.subr.mxu0 0.0
        %1171 = vmatpush1.msra.mxu0 0.0
        %1172 = vmatprep.subr.mxu0 0.0
        %1173 = vmatpush1.msra.mxu0 0.0
        %1174 = vmatprep.subr.mxu0 0.0
        %1175 = vmatpush1.msra.mxu0 0.0
        %1176 = vmatprep.subr.mxu0 0.0
        %1177 = vmatpush1.msra.mxu0 0.0
        %1178 = vmatprep.subr.mxu0 0.0
        %1179 = vmatpush1.msra.mxu0 0.0
        %1180 = vmatprep.subr.mxu0 0.0
        %1181 = vmatpush1.msra.mxu0 0.0
        %1182 = vmatprep.subr.mxu0 0.0
        %1183 = vmatpush1.msra.mxu0 0.0
        %1184 = vmatprep.subr.mxu0 0.0
        %1185 = vmatpush1.msra.mxu0 0.0
        %1186 = vmatprep.subr.mxu0 0.0
        %1187 = vmatpush1.msra.mxu0 0.0
        %1188 = vmatprep.subr.mxu0 0.0
        %1189 = vmatpush1.msra.mxu0 0.0
        %1190 = vmatprep.subr.mxu0 0.0
        %1191 = vmatpush1.msra.mxu0 0.0
        %1192 = vmatprep.subr.mxu0 0.0
        %1193 = vmatpush1.msra.mxu0 0.0
        %1194 = vmatprep.subr.mxu0 0.0
        %1195 = vmatpush1.msra.mxu0 0.0
        %1196 = vmatprep.subr.mxu0 0.0
        %1197 = vmatpush1.msra.mxu0 0.0
        %1198 = vmatprep.subr.mxu0 0.0
        %1199 = vmatpush1.msra.mxu0 0.0
        %1200 = vmatprep.subr.mxu0 %v948
        %1201 = vmatpush1.msra.mxu0 %v947
        %1202 = vmatprep.subr.mxu0 0.0
        %1203 = vmatpush2.msra.mxu0 0.0
        %1204 = vmatprep.subr.mxu0 0.0
        %1205 = vmatpush2.msra.mxu0 0.0
        %1206 = vmatprep.subr.mxu0 0.0
        %1207 = vmatpush2.msra.mxu0 0.0
        %1208 = vmatprep.subr.mxu0 0.0
        %1209 = vmatpush2.msra.mxu0 0.0
        %1210 = vmatprep.subr.mxu0 0.0
        %1211 = vmatpush2.msra.mxu0 0.0
        %1212 = vmatprep.subr.mxu0 0.0
        %1213 = vmatpush2.msra.mxu0 0.0
        %1214 = vmatprep.subr.mxu0 0.0
        %1215 = vmatpush2.msra.mxu0 0.0
        %1216 = vmatprep.subr.mxu0 0.0
        %1217 = vmatpush2.msra.mxu0 0.0
        %1218 = vmatprep.subr.mxu0 0.0
        %1219 = vmatpush2.msra.mxu0 0.0
        %1220 = vmatprep.subr.mxu0 0.0
        %1221 = vmatpush2.msra.mxu0 0.0
        %1222 = vmatprep.subr.mxu0 0.0
        %1223 = vmatpush2.msra.mxu0 0.0
        %1224 = vmatprep.subr.mxu0 0.0
        %1225 = vmatpush2.msra.mxu0 0.0
        %1226 = vmatprep.subr.mxu0 0.0
        %1227 = vmatpush2.msra.mxu0 0.0
        %1228 = vmatprep.subr.mxu0 0.0
        %1229 = vmatpush2.msra.mxu0 0.0
        %1230 = vmatprep.subr.mxu0 0.0
        %1231 = vmatpush2.msra.mxu0 0.0
        %1232 = vmatprep.subr.mxu0 0.0
        %1233 = vmatpush2.msra.mxu0 0.0
        %1234 = vmatprep.mubr.f32.mxu0 0.0
        %1235 = vmatmul.mubr.f32.gmra.mxu0 %v955
        %v1236 = vpop.f32.mrf.mxu0
        %v1237 = vadd.f32 %v952, %v1236
        %v1238 = vpop.f32.mrf.mxu0
        %v1239 = vadd.f32 %v952, %v1238
        %1240 = vdwg.mxu0
        %v1241 = vmul.f32 %v1024, 0.1
        %v1242 = vmul.f32 %v1026, 0.1
        %v1243 = vmul.f32 %v1095, 0.1
        %v1244 = vmul.f32 %v1097, 0.1
        %v1245 = vmul.f32 %v1166, 0.1
        %v1246 = vmul.f32 %v1168, 0.1
        %v1247 = vmul.f32 %v1237, 0.1
        %v1248 = vmul.f32 %v1239, 0.1
        %v1249 = vmax.f32 %v1024, %v1241
        %v1250 = vmax.f32 %v1026, %v1242
        %v1251 = vmax.f32 %v1095, %v1243
        %v1252 = vmax.f32 %v1097, %v1244
        %v1253 = vmax.f32 %v1166, %v1245
        %v1254 = vmax.f32 %v1168, %v1246
        %v1255 = vmax.f32 %v1237, %v1247
        %v1256 = vmax.f32 %v1239, %v1248
        %1258 = vset.pattern.permute.xlu0 20
        %1259 = vperm.xlu0 %1258, %v236
        %v1260 = vpop.permute.xlu0 %1259
        %vm1262 = vcmask 31744
        %v1263 = vsel %vm1262, %v236, 0
        %v1266 = vsel %vm276, %v1249, 0
        %v1269 = vsel %vm276, %v1250, 0
        %v1272 = vsel %vm276, %v1251, 0
        %v1275 = vsel %vm276, %v1252, 0
        %v1278 = vsel %vm276, %v1253, 0
        %v1281 = vsel %vm276, %v1254, 0
        %v1284 = vsel %vm276, %v1255, 0
        %v1287 = vsel %vm276, %v1256, 0
        %1289 = vmatprep.subr.mxu0 0.0
        %1290 = vmatpush1.msra.mxu0 0.0
        %1291 = vmatprep.subr.mxu0 0.0
        %1292 = vmatpush1.msra.mxu0 0.0
        %1293 = vmatprep.subr.mxu0 0.0
        %1294 = vmatpush1.msra.mxu0 0.0
        %1295 = vmatprep.subr.mxu0 0.0
        %1296 = vmatpush1.msra.mxu0 0.0
        %1297 = vmatprep.subr.mxu0 0.0
        %1298 = vmatpush1.msra.mxu0 0.0
        %1299 = vmatprep.subr.mxu0 0.0
        %1300 = vmatpush1.msra.mxu0 0.0
        %1301 = vmatprep.subr.mxu0 0.0
        %1302 = vmatpush1.msra.mxu0 0.0
        %1303 = vmatprep.subr.mxu0 0.0
        %1304 = vmatpush1.msra.mxu0 0.0
        %1305 = vmatprep.subr.mxu0 0.0
        %1306 = vmatpush1.msra.mxu0 0.0
        %1307 = vmatprep.subr.mxu0 0.0
        %1308 = vmatpush1.msra.mxu0 0.0
        %1309 = vmatprep.subr.mxu0 0.0
        %1310 = vmatpush1.msra.mxu0 0.0
        %1311 = vmatprep.subr.mxu0 0.0
        %1312 = vmatpush1.msra.mxu0 0.0
        %1313 = vmatprep.subr.mxu0 0.0
        %1314 = vmatpush1.msra.mxu0 0.0
        %1315 = vmatprep.subr.mxu0 0.0
        %1316 = vmatpush1.msra.mxu0 0.0
        %1317 = vmatprep.subr.mxu0 0.0
        %1318 = vmatpush1.msra.mxu0 0.0
        %1319 = vmatprep.subr.mxu0 %v1269
        %1320 = vmatpush1.msra.mxu0 %v1266
        %1321 = vmatprep.subr.mxu0 0.0
        %1322 = vmatpush2.msra.mxu0 0.0
        %1323 = vmatprep.subr.mxu0 0.0
        %1324 = vmatpush2.msra.mxu0 0.0
        %1325 = vmatprep.subr.mxu0 0.0
        %1326 = vmatpush2.msra.mxu0 0.0
        %1327 = vmatprep.subr.mxu0 0.0
        %1328 = vmatpush2.msra.mxu0 0.0
        %1329 = vmatprep.subr.mxu0 0.0
        %1330 = vmatpush2.msra.mxu0 0.0
        %1331 = vmatprep.subr.mxu0 0.0
        %1332 = vmatpush2.msra.mxu0 0.0
        %1333 = vmatprep.subr.mxu0 0.0
        %1334 = vmatpush2.msra.mxu0 0.0
        %1335 = vmatprep.subr.mxu0 0.0
        %1336 = vmatpush2.msra.mxu0 0.0
        %1337 = vmatprep.subr.mxu0 0.0
        %1338 = vmatpush2.msra.mxu0 0.0
        %1339 = vmatprep.subr.mxu0 0.0
        %1340 = vmatpush2.msra.mxu0 0.0
        %1341 = vmatprep.subr.mxu0 0.0
        %1342 = vmatpush2.msra.mxu0 0.0
        %1343 = vmatprep.subr.mxu0 0.0
        %1344 = vmatpush2.msra.mxu0 0.0
        %1345 = vmatprep.subr.mxu0 0.0
        %1346 = vmatpush2.msra.mxu0 0.0
        %1347 = vmatprep.subr.mxu0 0.0
        %1348 = vmatpush2.msra.mxu0 0.0
        %1349 = vmatprep.subr.mxu0 0.0
        %1350 = vmatpush2.msra.mxu0 0.0
        %1351 = vmatprep.subr.mxu0 0.0
        %1352 = vmatpush2.msra.mxu0 0.0
        %1353 = vmatprep.mubr.f32.mxu0 0.0
        %1354 = vmatmul.mubr.f32.gmra.mxu0 %v1263
        %v1355 = vpop.f32.mrf.mxu0
        %v1356 = vadd.f32 %v1260, %v1355
        %v1357 = vpop.f32.mrf.mxu0
        %v1358 = vadd.f32 %v1260, %v1357
        %1359 = vdwg.mxu0
        %1360 = vmatprep.subr.mxu0 0.0
        %1361 = vmatpush1.msra.mxu0 0.0
        %1362 = vmatprep.subr.mxu0 0.0
        %1363 = vmatpush1.msra.mxu0 0.0
        %1364 = vmatprep.subr.mxu0 0.0
        %1365 = vmatpush1.msra.mxu0 0.0
        %1366 = vmatprep.subr.mxu0 0.0
        %1367 = vmatpush1.msra.mxu0 0.0
        %1368 = vmatprep.subr.mxu0 0.0
        %1369 = vmatpush1.msra.mxu0 0.0
        %1370 = vmatprep.subr.mxu0 0.0
        %1371 = vmatpush1.msra.mxu0 0.0
        %1372 = vmatprep.subr.mxu0 0.0
        %1373 = vmatpush1.msra.mxu0 0.0
        %1374 = vmatprep.subr.mxu0 0.0
        %1375 = vmatpush1.msra.mxu0 0.0
        %1376 = vmatprep.subr.mxu0 0.0
        %1377 = vmatpush1.msra.mxu0 0.0
        %1378 = vmatprep.subr.mxu0 0.0
        %1379 = vmatpush1.msra.mxu0 0.0
        %1380 = vmatprep.subr.mxu0 0.0
        %1381 = vmatpush1.msra.mxu0 0.0
        %1382 = vmatprep.subr.mxu0 0.0
        %1383 = vmatpush1.msra.mxu0 0.0
        %1384 = vmatprep.subr.mxu0 0.0
        %1385 = vmatpush1.msra.mxu0 0.0
        %1386 = vmatprep.subr.mxu0 0.0
        %1387 = vmatpush1.msra.mxu0 0.0
        %1388 = vmatprep.subr.mxu0 0.0
        %1389 = vmatpush1.msra.mxu0 0.0
        %1390 = vmatprep.subr.mxu0 %v1275
        %1391 = vmatpush1.msra.mxu0 %v1272
        %1392 = vmatprep.subr.mxu0 0.0
        %1393 = vmatpush2.msra.mxu0 0.0
        %1394 = vmatprep.subr.mxu0 0.0
        %1395 = vmatpush2.msra.mxu0 0.0
        %1396 = vmatprep.subr.mxu0 0.0
        %1397 = vmatpush2.msra.mxu0 0.0
        %1398 = vmatprep.subr.mxu0 0.0
        %1399 = vmatpush2.msra.mxu0 0.0
        %1400 = vmatprep.subr.mxu0 0.0
        %1401 = vmatpush2.msra.mxu0 0.0
        %1402 = vmatprep.subr.mxu0 0.0
        %1403 = vmatpush2.msra.mxu0 0.0
        %1404 = vmatprep.subr.mxu0 0.0
        %1405 = vmatpush2.msra.mxu0 0.0
        %1406 = vmatprep.subr.mxu0 0.0
        %1407 = vmatpush2.msra.mxu0 0.0
        %1408 = vmatprep.subr.mxu0 0.0
        %1409 = vmatpush2.msra.mxu0 0.0
        %1410 = vmatprep.subr.mxu0 0.0
        %1411 = vmatpush2.msra.mxu0 0.0
        %1412 = vmatprep.subr.mxu0 0.0
        %1413 = vmatpush2.msra.mxu0 0.0
        %1414 = vmatprep.subr.mxu0 0.0
        %1415 = vmatpush2.msra.mxu0 0.0
        %1416 = vmatprep.subr.mxu0 0.0
        %1417 = vmatpush2.msra.mxu0 0.0
        %1418 = vmatprep.subr.mxu0 0.0
        %1419 = vmatpush2.msra.mxu0 0.0
        %1420 = vmatprep.subr.mxu0 0.0
        %1421 = vmatpush2.msra.mxu0 0.0
        %1422 = vmatprep.subr.mxu0 0.0
        %1423 = vmatpush2.msra.mxu0 0.0
        %1424 = vmatprep.mubr.f32.mxu0 0.0
        %1425 = vmatmul.mubr.f32.gmra.mxu0 %v1263
        %v1426 = vpop.f32.mrf.mxu0
        %v1427 = vadd.f32 %v1260, %v1426
        %v1428 = vpop.f32.mrf.mxu0
        %v1429 = vadd.f32 %v1260, %v1428
        %1430 = vdwg.mxu0
        %1431 = vmatprep.subr.mxu0 0.0
        %1432 = vmatpush1.msra.mxu0 0.0
        %1433 = vmatprep.subr.mxu0 0.0
        %1434 = vmatpush1.msra.mxu0 0.0
        %1435 = vmatprep.subr.mxu0 0.0
        %1436 = vmatpush1.msra.mxu0 0.0
        %1437 = vmatprep.subr.mxu0 0.0
        %1438 = vmatpush1.msra.mxu0 0.0
        %1439 = vmatprep.subr.mxu0 0.0
        %1440 = vmatpush1.msra.mxu0 0.0
        %1441 = vmatprep.subr.mxu0 0.0
        %1442 = vmatpush1.msra.mxu0 0.0
        %1443 = vmatprep.subr.mxu0 0.0
        %1444 = vmatpush1.msra.mxu0 0.0
        %1445 = vmatprep.subr.mxu0 0.0
        %1446 = vmatpush1.msra.mxu0 0.0
        %1447 = vmatprep.subr.mxu0 0.0
        %1448 = vmatpush1.msra.mxu0 0.0
        %1449 = vmatprep.subr.mxu0 0.0
        %1450 = vmatpush1.msra.mxu0 0.0
        %1451 = vmatprep.subr.mxu0 0.0
        %1452 = vmatpush1.msra.mxu0 0.0
        %1453 = vmatprep.subr.mxu0 0.0
        %1454 = vmatpush1.msra.mxu0 0.0
        %1455 = vmatprep.subr.mxu0 0.0
        %1456 = vmatpush1.msra.mxu0 0.0
        %1457 = vmatprep.subr.mxu0 0.0
        %1458 = vmatpush1.msra.mxu0 0.0
        %1459 = vmatprep.subr.mxu0 0.0
        %1460 = vmatpush1.msra.mxu0 0.0
        %1461 = vmatprep.subr.mxu0 %v1281
        %1462 = vmatpush1.msra.mxu0 %v1278
        %1463 = vmatprep.subr.mxu0 0.0
        %1464 = vmatpush2.msra.mxu0 0.0
        %1465 = vmatprep.subr.mxu0 0.0
        %1466 = vmatpush2.msra.mxu0 0.0
        %1467 = vmatprep.subr.mxu0 0.0
        %1468 = vmatpush2.msra.mxu0 0.0
        %1469 = vmatprep.subr.mxu0 0.0
        %1470 = vmatpush2.msra.mxu0 0.0
        %1471 = vmatprep.subr.mxu0 0.0
        %1472 = vmatpush2.msra.mxu0 0.0
        %1473 = vmatprep.subr.mxu0 0.0
        %1474 = vmatpush2.msra.mxu0 0.0
        %1475 = vmatprep.subr.mxu0 0.0
        %1476 = vmatpush2.msra.mxu0 0.0
        %1477 = vmatprep.subr.mxu0 0.0
        %1478 = vmatpush2.msra.mxu0 0.0
        %1479 = vmatprep.subr.mxu0 0.0
        %1480 = vmatpush2.msra.mxu0 0.0
        %1481 = vmatprep.subr.mxu0 0.0
        %1482 = vmatpush2.msra.mxu0 0.0
        %1483 = vmatprep.subr.mxu0 0.0
        %1484 = vmatpush2.msra.mxu0 0.0
        %1485 = vmatprep.subr.mxu0 0.0
        %1486 = vmatpush2.msra.mxu0 0.0
        %1487 = vmatprep.subr.mxu0 0.0
        %1488 = vmatpush2.msra.mxu0 0.0
        %1489 = vmatprep.subr.mxu0 0.0
        %1490 = vmatpush2.msra.mxu0 0.0
        %1491 = vmatprep.subr.mxu0 0.0
        %1492 = vmatpush2.msra.mxu0 0.0
        %1493 = vmatprep.subr.mxu0 0.0
        %1494 = vmatpush2.msra.mxu0 0.0
        %1495 = vmatprep.mubr.f32.mxu0 0.0
        %1496 = vmatmul.mubr.f32.gmra.mxu0 %v1263
        %v1497 = vpop.f32.mrf.mxu0
        %v1498 = vadd.f32 %v1260, %v1497
        %v1499 = vpop.f32.mrf.mxu0
        %v1500 = vadd.f32 %v1260, %v1499
        %1501 = vdwg.mxu0
        %1502 = vmatprep.subr.mxu0 0.0
        %1503 = vmatpush1.msra.mxu0 0.0
        %1504 = vmatprep.subr.mxu0 0.0
        %1505 = vmatpush1.msra.mxu0 0.0
        %1506 = vmatprep.subr.mxu0 0.0
        %1507 = vmatpush1.msra.mxu0 0.0
        %1508 = vmatprep.subr.mxu0 0.0
        %1509 = vmatpush1.msra.mxu0 0.0
        %1510 = vmatprep.subr.mxu0 0.0
        %1511 = vmatpush1.msra.mxu0 0.0
        %1512 = vmatprep.subr.mxu0 0.0
        %1513 = vmatpush1.msra.mxu0 0.0
        %1514 = vmatprep.subr.mxu0 0.0
        %1515 = vmatpush1.msra.mxu0 0.0
        %1516 = vmatprep.subr.mxu0 0.0
        %1517 = vmatpush1.msra.mxu0 0.0
        %1518 = vmatprep.subr.mxu0 0.0
        %1519 = vmatpush1.msra.mxu0 0.0
        %1520 = vmatprep.subr.mxu0 0.0
        %1521 = vmatpush1.msra.mxu0 0.0
        %1522 = vmatprep.subr.mxu0 0.0
        %1523 = vmatpush1.msra.mxu0 0.0
        %1524 = vmatprep.subr.mxu0 0.0
        %1525 = vmatpush1.msra.mxu0 0.0
        %1526 = vmatprep.subr.mxu0 0.0
        %1527 = vmatpush1.msra.mxu0 0.0
        %1528 = vmatprep.subr.mxu0 0.0
        %1529 = vmatpush1.msra.mxu0 0.0
        %1530 = vmatprep.subr.mxu0 0.0
        %1531 = vmatpush1.msra.mxu0 0.0
        %1532 = vmatprep.subr.mxu0 %v1287
        %1533 = vmatpush1.msra.mxu0 %v1284
        %1534 = vmatprep.subr.mxu0 0.0
        %1535 = vmatpush2.msra.mxu0 0.0
        %1536 = vmatprep.subr.mxu0 0.0
        %1537 = vmatpush2.msra.mxu0 0.0
        %1538 = vmatprep.subr.mxu0 0.0
        %1539 = vmatpush2.msra.mxu0 0.0
        %1540 = vmatprep.subr.mxu0 0.0
        %1541 = vmatpush2.msra.mxu0 0.0
        %1542 = vmatprep.subr.mxu0 0.0
        %1543 = vmatpush2.msra.mxu0 0.0
        %1544 = vmatprep.subr.mxu0 0.0
        %1545 = vmatpush2.msra.mxu0 0.0
        %1546 = vmatprep.subr.mxu0 0.0
        %1547 = vmatpush2.msra.mxu0 0.0
        %1548 = vmatprep.subr.mxu0 0.0
        %1549 = vmatpush2.msra.mxu0 0.0
        %1550 = vmatprep.subr.mxu0 0.0
        %1551 = vmatpush2.msra.mxu0 0.0
        %1552 = vmatprep.subr.mxu0 0.0
        %1553 = vmatpush2.msra.mxu0 0.0
        %1554 = vmatprep.subr.mxu0 0.0
        %1555 = vmatpush2.msra.mxu0 0.0
        %1556 = vmatprep.subr.mxu0 0.0
        %1557 = vmatpush2.msra.mxu0 0.0
        %1558 = vmatprep.subr.mxu0 0.0
        %1559 = vmatpush2.msra.mxu0 0.0
        %1560 = vmatprep.subr.mxu0 0.0
        %1561 = vmatpush2.msra.mxu0 0.0
        %1562 = vmatprep.subr.mxu0 0.0
        %1563 = vmatpush2.msra.mxu0 0.0
        %1564 = vmatprep.subr.mxu0 0.0
        %1565 = vmatpush2.msra.mxu0 0.0
        %1566 = vmatprep.mubr.f32.mxu0 0.0
        %1567 = vmatmul.mubr.f32.gmra.mxu0 %v1263
        %v1568 = vpop.f32.mrf.mxu0
        %v1569 = vadd.f32 %v1260, %v1568
        %v1570 = vpop.f32.mrf.mxu0
        %v1571 = vadd.f32 %v1260, %v1570
        %1572 = vdwg.mxu0
        %v1573 = vmul.f32 %v1356, 0.1
        %v1574 = vmul.f32 %v1358, 0.1
        %v1575 = vmul.f32 %v1427, 0.1
        %v1576 = vmul.f32 %v1429, 0.1
        %v1577 = vmul.f32 %v1498, 0.1
        %v1578 = vmul.f32 %v1500, 0.1
        %v1579 = vmul.f32 %v1569, 0.1
        %v1580 = vmul.f32 %v1571, 0.1
        %v1581 = vmax.f32 %v1356, %v1573
        %v1582 = vmax.f32 %v1358, %v1574
        %v1583 = vmax.f32 %v1427, %v1575
        %v1584 = vmax.f32 %v1429, %v1576
        %v1585 = vmax.f32 %v1498, %v1577
        %v1586 = vmax.f32 %v1500, %v1578
        %v1587 = vmax.f32 %v1569, %v1579
        %v1588 = vmax.f32 %v1571, %v1580
        %v1589 = vmul.f32 %v1581, 0.1
        %v1590 = vmul.f32 %v1582, 0.1
        %v1591 = vmul.f32 %v1583, 0.1
        %v1592 = vmul.f32 %v1584, 0.1
        %v1593 = vmul.f32 %v1585, 0.1
        %v1594 = vmul.f32 %v1586, 0.1
        %v1595 = vmul.f32 %v1587, 0.1
        %v1596 = vmul.f32 %v1588, 0.1
        %v1597 = vmax.f32 %v1581, %v1589
        %v1598 = vmax.f32 %v1582, %v1590
        %v1599 = vmax.f32 %v1583, %v1591
        %v1600 = vmax.f32 %v1584, %v1592
        %v1601 = vmax.f32 %v1585, %v1593
        %v1602 = vmax.f32 %v1586, %v1594
        %v1603 = vmax.f32 %v1587, %v1595
        %v1604 = vmax.f32 %v1588, %v1596
        %1605 = vst [vmem:[#allocation2] sm:$0x1] %v1597
        %1606 = vst [vmem:[#allocation2 + $0x1] sm:$0x1] %v1598
        %1607 = vst [vmem:[#allocation2 + $0x2] sm:$0x1] %v1599
        %1608 = vst [vmem:[#allocation2 + $0x3] sm:$0x1] %v1600
        %1609 = vst [vmem:[#allocation2 + $0x4] sm:$0x1] %v1601
        %1610 = vst [vmem:[#allocation2 + $0x5] sm:$0x1] %v1602
        %1611 = vst [vmem:[#allocation2 + $0x6] sm:$0x1] %v1603
        %1612 = vst [vmem:[#allocation2 + $0x7] sm:$0x1] %v1604
        %v1613 = vld [vmem:[#allocation2] sm:$0xff]
        %v1614 = vld [vmem:[#allocation6] sm:$0xff]
        %v1615 = vld [vmem:[#allocation6 + $0x8] sm:$0xff]
        %v1616 = vld [vmem:[#allocation6 + $0x10] sm:$0xff]
        %v1617 = vld [vmem:[#allocation6 + $0x18] sm:$0xff]
        %v1618 = vld [vmem:[#allocation6 + $0x20] sm:$0xff]
        %v1619 = vld [vmem:[#allocation6 + $0x28] sm:$0xff]
        %v1620 = vld [vmem:[#allocation6 + $0x30] sm:$0xff]
        %v1621 = vld [vmem:[#allocation6 + $0x38] sm:$0xff]
        %v1622 = vld [vmem:[#allocation6 + $0x40] sm:$0xff]
        %v1623 = vld [vmem:[#allocation6 + $0x48] sm:$0xff]
        %v1624 = vld [vmem:[#allocation6 + $0x50] sm:$0xff]
        %v1625 = vld [vmem:[#allocation6 + $0x58] sm:$0xff]
        %v1626 = vld [vmem:[#allocation6 + $0x60] sm:$0xff]
        %v1627 = vld [vmem:[#allocation6 + $0x68] sm:$0xff]
        %v1628 = vld [vmem:[#allocation6 + $0x70] sm:$0xff]
        %v1629 = vld [vmem:[#allocation6 + $0x78] sm:$0xff]
        %v1630 = vld [vmem:[%s3] sm:$0x1]
        %v1632 = vlaneseq
        %v1633 = vshrl.u32 %v1632, 7
        %v1634 = vsub.s32 0, %v1633
        %v1635 = vrot.slane %v1630, %v1634
        %1637 = vmatprep.subr.mxu0 0.0
        %1638 = vmatpush1.msra.mxu0 %v1629
        %1639 = vmatprep.subr.mxu0 0.0
        %1640 = vmatpush1.msra.mxu0 %v1628
        %1641 = vmatprep.subr.mxu0 0.0
        %1642 = vmatpush1.msra.mxu0 %v1627
        %1643 = vmatprep.subr.mxu0 0.0
        %1644 = vmatpush1.msra.mxu0 %v1626
        %1645 = vmatprep.subr.mxu0 0.0
        %1646 = vmatpush1.msra.mxu0 %v1625
        %1647 = vmatprep.subr.mxu0 0.0
        %1648 = vmatpush1.msra.mxu0 %v1624
        %1649 = vmatprep.subr.mxu0 0.0
        %1650 = vmatpush1.msra.mxu0 %v1623
        %1651 = vmatprep.subr.mxu0 0.0
        %1652 = vmatpush1.msra.mxu0 %v1622
        %1653 = vmatprep.subr.mxu0 0.0
        %1654 = vmatpush1.msra.mxu0 %v1621
        %1655 = vmatprep.subr.mxu0 0.0
        %1656 = vmatpush1.msra.mxu0 %v1620
        %1657 = vmatprep.subr.mxu0 0.0
        %1658 = vmatpush1.msra.mxu0 %v1619
        %1659 = vmatprep.subr.mxu0 0.0
        %1660 = vmatpush1.msra.mxu0 %v1618
        %1661 = vmatprep.subr.mxu0 0.0
        %1662 = vmatpush1.msra.mxu0 %v1617
        %1663 = vmatprep.subr.mxu0 0.0
        %1664 = vmatpush1.msra.mxu0 %v1616
        %1665 = vmatprep.subr.mxu0 0.0
        %1666 = vmatpush1.msra.mxu0 %v1615
        %1667 = vmatprep.subr.mxu0 0.0
        %1668 = vmatpush1.msra.mxu0 %v1614
        %1669 = vmatprep.subr.mxu0 0.0
        %1670 = vmatpush2.msra.mxu0 0.0
        %1671 = vmatprep.subr.mxu0 0.0
        %1672 = vmatpush2.msra.mxu0 0.0
        %1673 = vmatprep.subr.mxu0 0.0
        %1674 = vmatpush2.msra.mxu0 0.0
        %1675 = vmatprep.subr.mxu0 0.0
        %1676 = vmatpush2.msra.mxu0 0.0
        %1677 = vmatprep.subr.mxu0 0.0
        %1678 = vmatpush2.msra.mxu0 0.0
        %1679 = vmatprep.subr.mxu0 0.0
        %1680 = vmatpush2.msra.mxu0 0.0
        %1681 = vmatprep.subr.mxu0 0.0
        %1682 = vmatpush2.msra.mxu0 0.0
        %1683 = vmatprep.subr.mxu0 0.0
        %1684 = vmatpush2.msra.mxu0 0.0
        %1685 = vmatprep.subr.mxu0 0.0
        %1686 = vmatpush2.msra.mxu0 0.0
        %1687 = vmatprep.subr.mxu0 0.0
        %1688 = vmatpush2.msra.mxu0 0.0
        %1689 = vmatprep.subr.mxu0 0.0
        %1690 = vmatpush2.msra.mxu0 0.0
        %1691 = vmatprep.subr.mxu0 0.0
        %1692 = vmatpush2.msra.mxu0 0.0
        %1693 = vmatprep.subr.mxu0 0.0
        %1694 = vmatpush2.msra.mxu0 0.0
        %1695 = vmatprep.subr.mxu0 0.0
        %1696 = vmatpush2.msra.mxu0 0.0
        %1697 = vmatprep.subr.mxu0 0.0
        %1698 = vmatpush2.msra.mxu0 0.0
        %1699 = vmatprep.subr.mxu0 0.0
        %1700 = vmatpush2.msra.mxu0 0.0
        %1701 = vmatprep.mubr.f32.mxu0 0.0
        %1702 = vmatmul.mubr.f32.gmra.mxu0 %v1613
        %v1703 = vpop.f32.mrf.mxu0
        %v1704 = vadd.f32 %v1635, %v1703
        %v1705 = vpop.f32.mrf.mxu0
        %1706 = vdwg.mxu0
        %1707 = vst [vmem:[%s230] sm:$0xff] %v1704
        %s1708 = sand.u32 %s119, 1
        %s1709 = scalar_lea.sflag [#allocation5], %s1708
        %s1710 = sand.u32 %s119, 1
        %s1711 = smul.addr %s1710, 8
        %s1712 = scalar_lea.vmem [#allocation8], %s1711
        // Predicated region
        $region45: #{tpu_custom_call.1} parent=35 // pred_check
          %p1713 = pneg %p129
        $region46: #{tpu_custom_call.1} parent=35 // pred_check_branch
          %1715 = sbr.rel (%p1713) target = $region48
        $region47: #{tpu_custom_call.1} parent=35 // pred_region
          %s1717 = ssub.s32 128, 128
          %1718 = vsyncadd %s1709, %s1717
          %s1719 = smul.addr %s22, 128
          %s1720 = scalar_lea.hbm %s4, %s1719
          %s1722 = sshll.u32 %s1712, 4
          %s1723 = int_to_ptr.vmem [resolvable:$true] %s1722
          %1725 = dma.vmem_to_hbm [thread:$0]  %s1723, 128, %s1720, %s1709
        $region48: #{tpu_custom_call.1} parent=35 // pred_fallthru
          _
      $region36: #{tpu_custom_call.1} parent=5 // pred_fallthru
        _
      %p1726 = scmp.le.s32.totalorder 2, %s17
      // Predicated region
      $region49: #{tpu_custom_call.1} parent=5 // pred_check
        %p1727 = pneg %p1726
      $region50: #{tpu_custom_call.1} parent=5 // pred_check_branch
        %1729 = sbr.rel (%p1727) target = $region52
      $region51: #{tpu_custom_call.1} parent=5 // pred_region
        %s1730 = ssub.s32 %s17, 2
        // Predicated region
        $region53: #{tpu_custom_call.1} parent=51 // pred_check
          %p1731 = pneg %p135
        $region54: #{tpu_custom_call.1} parent=51 // pred_check_branch
          %1733 = sbr.rel (%p1731) target = $region56
        $region55: #{tpu_custom_call.1} parent=51 // pred_region
          %s1734 = sand.u32 %s120, 1
          %s1735 = scalar_lea.sflag [#allocation5], %s1734
          %s1736 = sand.u32 %s120, 1
          %s1737 = smul.addr %s1736, 8
          %s1738 = scalar_lea.vmem [#allocation8], %s1737
          %1739 = dma.done %s1735, 128
        $region56: #{tpu_custom_call.1} parent=51 // pred_fallthru
          _
      $region52: #{tpu_custom_call.1} parent=5 // pred_fallthru
        _
    $region6: #{tpu_custom_call.1} parent=1 // loop_footer
      %s21 = sadd.s32 1, %s17
    $region7: #{tpu_custom_call.1} parent=1 // loop_footer_branch
      %16 = sbr.rel target = $region3
    $region8: #{tpu_custom_call.1} parent=1 // loop_exit
      _
    %1740 = vsyncpa [#allocation4], 1
    %s1741 = scalar_lea.sflag [#allocation4], 1
    %1742 = vsyncpa %s1741, 1
    %1743 = vsyncpa [#allocation7], 1
    %1744 = vsyncpa [#allocation5], 1
    %s1745 = scalar_lea.sflag [#allocation5], 1
    %1746 = vsyncpa %s1745, 1

</llo_original>
